<compile_context>
chip_gen: v7x
topology: tpu7x:2x2x1
jax: 0.10.0
libtpu: 0.0.40
codegen_flags: <defaults>
</compile_context>

<pallas_src>
import jax
import jax.numpy as jnp
from jax.experimental import pallas as pl
from jax.experimental.pallas import tpu as pltpu

NC_PAD = 128  # per-head output slab width (lane-dense)


# ----------------------------------------------------------------------------
# Fused kernel: global avg pool + all heads (block-diag second layer), one body.
# ----------------------------------------------------------------------------
def _fused_kernel(x_ref, w1_ref, b1_ref, w2_ref, b2_ref, o_ref):
    # x_ref : (TB, C, HW)            activations (HW on lanes, C on sublanes)
    # w1_ref: (C, NH*HID)            bf16  (all heads' first-layer weights, concat)
    # b1_ref: (1, NH*HID)            f32
    # w2_ref: (NH*HID, NH*NC_PAD)    bf16  block-diagonal second-layer weights
    # b2_ref: (1, NH*NC_PAD)         f32
    # o_ref : (TB, NH*NC_PAD)        f32
    x = x_ref[...].astype(jnp.float32)
    feats = jnp.mean(x, axis=-1)                                  # (TB, C) lane reduce (XLU)

    h = jnp.dot(feats.astype(jnp.bfloat16), w1_ref[...],
                preferred_element_type=jnp.float32)               # (TB, NH*HID)
    h = jnp.maximum(h + b1_ref[...], 0.0)                         # Dropout=identity, ReLU

    out = jnp.dot(h.astype(jnp.bfloat16), w2_ref[...],
                  preferred_element_type=jnp.float32) + b2_ref[...]   # (TB, NH*NC_PAD)
    o_ref[...] = out.astype(o_ref.dtype)                          # single unmasked store


def multi_head_forward(x_nchw, params, num_classes, *, tb=128):
    """params: w1 (IN, NH*HID) bf16, b1 (1, NH*HID) f32,
               w2 (NH*HID, NH*NC_PAD) bf16 block-diag, b2 (1, NH*NC_PAD) f32."""
    B, C, H, W = x_nchw.shape
    HW = H * W
    # Free contiguous view (no relayout / extra launch): pool happens in-kernel.
    x3 = x_nchw.reshape(B, C, HW)

    w1, b1, w2, b2 = params["w1"], params["b1"], params["w2"], params["b2"]
    NH = b2.shape[1] // NC_PAD
    TB = min(tb, B)

    out = pl.pallas_call(
        _fused_kernel,
        out_shape=jax.ShapeDtypeStruct((B, NH * NC_PAD), jnp.float32),
        grid=(pl.cdiv(B, TB),),
        in_specs=[
            pl.BlockSpec((TB, C, HW), lambda i: (i, 0, 0)),       # batch-tiled activations
            pl.BlockSpec(w1.shape, lambda i: (0, 0)),             # resident weights
            pl.BlockSpec(b1.shape, lambda i: (0, 0)),
            pl.BlockSpec(w2.shape, lambda i: (0, 0)),
            pl.BlockSpec(b2.shape, lambda i: (0, 0)),
        ],
        out_specs=pl.BlockSpec((TB, NH * NC_PAD), lambda i: (i, 0)),
        compiler_params=pltpu.CompilerParams(
            dimension_semantics=("parallel",)),
    )(x3, w1, b1, w2, b2)

    # Single reshape + single slice; then cheap per-head views for the tuple API.
    out3 = out.reshape(B, NH, NC_PAD)[:, :, :num_classes]
    return tuple(out3[:, h, :] for h in range(NH))


# ----------------------------------------------------------------------------
# Deterministic parameter init (mimics nn.Linear default U(-1/sqrt(fan_in), ..)),
# packed for the fused kernel: W1 concatenated; W2 packed block-diagonally with
# per-head zero padding to 128 lanes; biases concatenated.
# ----------------------------------------------------------------------------
def init_params(key, num_heads, in_size, hidden, num_classes, nc_pad=NC_PAD):
    ks = jax.random.split(key, 4 * num_heads)
    k1 = 1.0 / jnp.sqrt(in_size)
    k2 = 1.0 / jnp.sqrt(hidden)
    w1s, b1s = [], []
    w2_bd = jnp.zeros((num_heads * hidden, num_heads * nc_pad), jnp.float32)
    b2_bd = jnp.zeros((1, num_heads * nc_pad), jnp.float32)
    for h in range(num_heads):
        w1s.append(jax.random.uniform(ks[4 * h + 0], (in_size, hidden),
                                      jnp.float32, -k1, k1))
        b1s.append(jax.random.uniform(ks[4 * h + 1], (1, hidden),
                                      jnp.float32, -k1, k1))
        w2 = jax.random.uniform(ks[4 * h + 2], (hidden, num_classes),
                                jnp.float32, -k2, k2)
        b2 = jax.random.uniform(ks[4 * h + 3], (1, num_classes),
                                jnp.float32, -k2, k2)
        w2_bd = w2_bd.at[h * hidden:(h + 1) * hidden,
                         h * nc_pad:h * nc_pad + num_classes].set(w2)
        b2_bd = b2_bd.at[:, h * nc_pad:h * nc_pad + num_classes].set(b2)
    return {
        "w1": jnp.concatenate(w1s, axis=1).astype(jnp.bfloat16),  # (IN, NH*HID)
        "b1": jnp.concatenate(b1s, axis=1),                       # (1, NH*HID)  f32
        "w2": w2_bd.astype(jnp.bfloat16),                         # (NH*HID, NH*NC_PAD)
        "b2": b2_bd,                                              # (1, NH*NC_PAD)  f32
    }


# ----------------------------------------------------------------------------
# Pure-JAX reference performing the identical math (same bf16 weights / f32 acc)
# ----------------------------------------------------------------------------
def reference_forward(x_nchw, params, num_heads, num_classes):
    feats = jnp.mean(x_nchw, axis=(2, 3))                         # pool(1,1) + squeeze
    h = jnp.dot(feats.astype(jnp.bfloat16), params["w1"],
                preferred_element_type=jnp.float32) + params["b1"]
    h = jnp.maximum(h, 0.0)
    out = jnp.dot(h.astype(jnp.bfloat16), params["w2"],
                  preferred_element_type=jnp.float32) + params["b2"]
    out3 = out.reshape(feats.shape[0], num_heads, NC_PAD)[:, :, :num_classes]
    return tuple(out3[:, h, :] for h in range(num_heads))


if __name__ == "__main__":
    # resnet18/34 variant: input_size=512 -> hidden=256; small spatial / batch.
    B, C, H, W = 2, 512, 4, 4
    NUM_HEADS, NUM_CLASSES, HIDDEN = 4, 10, 256

    key = jax.random.PRNGKey(0)
    kx, kp = jax.random.split(key)
    # x is the backbone's last feature map (output of shared_layers before pool).
    x = jax.random.normal(kx, (B, C, H, W), jnp.float32)
    params = init_params(kp, NUM_HEADS, C, HIDDEN, NUM_CLASSES)

    outs = multi_head_forward(x, params, NUM_CLASSES)
    outs = jax.block_until_ready(outs)

    refs = reference_forward(x, params, NUM_HEADS, NUM_CLASSES)
    for o, r in zip(outs, refs):
        assert o.shape == (B, NUM_CLASSES)
        assert jnp.allclose(o, r, atol=1e-2, rtol=1e-2), \
            float(jnp.max(jnp.abs(o - r)))

    print("KERNEL_OK")
</pallas_src>

<mosaic_0001>
module attributes {stable_mosaic.version = 11 : i64} {
  func.func @_fused_kernel(%arg0: i32, %arg1: memref<2x512x16xf32, #tpu.memory_space<vmem>>, %arg2: memref<512x1024xbf16, #tpu.memory_space<vmem>>, %arg3: memref<1x1024xf32, #tpu.memory_space<vmem>>, %arg4: memref<1024x512xbf16, #tpu.memory_space<vmem>>, %arg5: memref<1x512xf32, #tpu.memory_space<vmem>>, %arg6: memref<2x512xf32, #tpu.memory_space<vmem>>) attributes {dimension_semantics = [#tpu.dimension_semantics<parallel>], iteration_bounds = array<i64: 1>, scalar_prefetch = 0 : i64, scratch_operands = 0 : i64, tpu.core_type = #tpu.core_type<tc>, window_params = [{transform_indices = @transform_0, window_bounds = array<i64: 2, 512, 16>}, {pipeline_mode = #tpu.pipeline_mode<synchronous>, transform_indices = @transform_1, window_bounds = array<i64: 512, 1024>}, {pipeline_mode = #tpu.pipeline_mode<synchronous>, transform_indices = @transform_2, window_bounds = array<i64: 1, 1024>}, {pipeline_mode = #tpu.pipeline_mode<synchronous>, transform_indices = @transform_3, window_bounds = array<i64: 1024, 512>}, {pipeline_mode = #tpu.pipeline_mode<synchronous>, transform_indices = @transform_4, window_bounds = array<i64: 1, 512>}, {transform_indices = @transform_5, window_bounds = array<i64: 2, 512>}]} {
    %c0 = arith.constant 0 : index
    %c0_0 = arith.constant 0 : index
    %c0_1 = arith.constant 0 : index
    %0 = vector.load %arg1[%c0, %c0_0, %c0_1] : memref<2x512x16xf32, #tpu.memory_space<vmem>>, vector<2x512x16xf32>
    %cst = arith.constant dense<0.000000e+00> : vector<2x512xf32>
    %1 = vector.multi_reduction <add>, %0, %cst [2] : vector<2x512x16xf32> to vector<2x512xf32>
    %cst_2 = arith.constant 1.600000e+01 : f32
    %2 = vector.broadcast %cst_2 : f32 to vector<2x512xf32>
    %3 = arith.divf %1, %2 : vector<2x512xf32>
    %4 = arith.truncf %3 : vector<2x512xf32> to vector<2x512xbf16>
    %c0_3 = arith.constant 0 : index
    %c0_4 = arith.constant 0 : index
    %5 = vector.load %arg2[%c0_3, %c0_4] : memref<512x1024xbf16, #tpu.memory_space<vmem>>, vector<512x1024xbf16>
    %cst_5 = arith.constant dense<0.000000e+00> : vector<2x1024xf32>
    %6 = tpu.matmul %4, %5, %cst_5 {dimension_numbers = #tpu.dot_dimension_numbers<[1], [0], [0], [1], [0, 0, 1, 1], [], []>} : vector<2x512xbf16>, vector<512x1024xbf16>, vector<2x1024xf32> -> vector<2x1024xf32>
    %c0_6 = arith.constant 0 : index
    %c0_7 = arith.constant 0 : index
    %7 = vector.load %arg3[%c0_6, %c0_7] : memref<1x1024xf32, #tpu.memory_space<vmem>>, vector<1x1024xf32>
    %8 = vector.broadcast %7 : vector<1x1024xf32> to vector<2x1024xf32>
    %9 = arith.addf %6, %8 : vector<2x1024xf32>
    %cst_8 = arith.constant 0.000000e+00 : f32
    %10 = vector.broadcast %cst_8 : f32 to vector<2x1024xf32>
    %11 = arith.maximumf %9, %10 : vector<2x1024xf32>
    %12 = arith.truncf %11 : vector<2x1024xf32> to vector<2x1024xbf16>
    %c0_9 = arith.constant 0 : index
    %c0_10 = arith.constant 0 : index
    %13 = vector.load %arg4[%c0_9, %c0_10] : memref<1024x512xbf16, #tpu.memory_space<vmem>>, vector<1024x512xbf16>
    %cst_11 = arith.constant dense<0.000000e+00> : vector<2x512xf32>
    %14 = tpu.matmul %12, %13, %cst_11 {dimension_numbers = #tpu.dot_dimension_numbers<[1], [0], [0], [1], [0, 0, 1, 1], [], []>} : vector<2x1024xbf16>, vector<1024x512xbf16>, vector<2x512xf32> -> vector<2x512xf32>
    %c0_12 = arith.constant 0 : index
    %c0_13 = arith.constant 0 : index
    %15 = vector.load %arg5[%c0_12, %c0_13] : memref<1x512xf32, #tpu.memory_space<vmem>>, vector<1x512xf32>
    %16 = vector.broadcast %15 : vector<1x512xf32> to vector<2x512xf32>
    %17 = arith.addf %14, %16 : vector<2x512xf32>
    %c0_14 = arith.constant 0 : index
    %c0_15 = arith.constant 0 : index
    %18 = vector.load %arg6[%c0_14, %c0_15] : memref<2x512xf32, #tpu.memory_space<vmem>>, vector<2x512xf32>
    tpu.vector_store %arg6[%c0_14, %c0_15], %17 {strides = array<i32>} : memref<2x512xf32, #tpu.memory_space<vmem>>, vector<2x512xf32>,
    return
  }
  func.func @transform_0(%arg0: i32) -> (i32, i32, i32) {
    %c0_i32 = arith.constant 0 : i32
    %c0_i32_0 = arith.constant 0 : i32
    %c0_i32_1 = arith.constant 0 : i32
    return %arg0, %c0_i32, %c0_i32_0 : i32, i32, i32
  }
  func.func @transform_1(%arg0: i32) -> (i32, i32) {
    %c0_i32 = arith.constant 0 : i32
    %c0_i32_0 = arith.constant 0 : i32
    %c0_i32_1 = arith.constant 0 : i32
    return %c0_i32, %c0_i32_0 : i32, i32
  }
  func.func @transform_2(%arg0: i32) -> (i32, i32) {
    %c0_i32 = arith.constant 0 : i32
    %c0_i32_0 = arith.constant 0 : i32
    %c0_i32_1 = arith.constant 0 : i32
    return %c0_i32, %c0_i32_0 : i32, i32
  }
  func.func @transform_3(%arg0: i32) -> (i32, i32) {
    %c0_i32 = arith.constant 0 : i32
    %c0_i32_0 = arith.constant 0 : i32
    %c0_i32_1 = arith.constant 0 : i32
    return %c0_i32, %c0_i32_0 : i32, i32
  }
  func.func @transform_4(%arg0: i32) -> (i32, i32) {
    %c0_i32 = arith.constant 0 : i32
    %c0_i32_0 = arith.constant 0 : i32
    %c0_i32_1 = arith.constant 0 : i32
    return %c0_i32, %c0_i32_0 : i32, i32
  }
  func.func @transform_5(%arg0: i32) -> (i32, i32) {
    %c0_i32 = arith.constant 0 : i32
    %c0_i32_0 = arith.constant 0 : i32
    return %arg0, %c0_i32 : i32, i32
  }
}

</mosaic_0001>

<llo_original>
// kernel: tpu_custom_call.1
$region0: #{tpu_custom_call.1}
  #allocation0 [shape = 'u32[]', space=smem, size = 0x4, offset = 0x4, fixed_abs, tag = 'smem constant byte address 0x4 - core index']
  #allocation1 [shape = 'u32[144,128]{1,0:T(1,128)}', space=vmem, size = 0x12000, scoped, tag = 'internal scratch']
  %s0 = inlined_call_operand.vmem [shape: f32[2,512,16], index: 0, kind: input, shape index: {}]
  %s1 = inlined_call_operand.hbm [shape: bf16[512,1024], index: 1, kind: input, shape index: {}]
  %s2 = inlined_call_operand.vmem [shape: f32[1,1024], index: 2, kind: input, shape index: {}]
  %s3 = inlined_call_operand.hbm [shape: bf16[1024,512], index: 3, kind: input, shape index: {}]
  %s4 = inlined_call_operand.vmem [shape: f32[1,512], index: 4, kind: input, shape index: {}]
  %s5 = inlined_call_operand.hbm [shape: f32[2,512], index: 5, kind: output, shape index: {}]
  %s6 = sld [smem:[#allocation0]]
  $region38: #{tpu_custom_call.1} parent=0
    _
  %s8 = ssub.s32 1, %s6
  %s9 = scalar_select 0, %s8, %s6
  $region1: #{tpu_custom_call.1} parent=0
    #allocation2 [shape = 'u8[1048576]{0}', space=vmem, size = 0x100000, scoped, tag = 'input window, operand 1, single buffered']
    #allocation3 [shape = 's32[1]{0}', space=sflag, size = 0x4, scoped, tag = 'scoped memory for tpu_custom_call.1']
    #allocation4 [shape = 's32[1]{0}', space=sflag, size = 0x4, scoped, tag = 'scoped memory for tpu_custom_call.1']
    #allocation5 [shape = 'u8[1048576]{0}', space=vmem, size = 0x100000, scoped, tag = 'input window, operand 3, single buffered']
    #allocation6 [shape = 's32[1]{0}', space=sflag, size = 0x4, scoped, tag = 'scoped memory for tpu_custom_call.1']
    #allocation7 [shape = 'u8[4096]{0}', space=vmem, size = 0x1000, scoped, tag = 'output window, operand 0, single buffered']
    %10 = vsyncpa [#allocation3], 0
    %11 = vsyncpa [#allocation6], 0
    %12 = vsyncpa [#allocation4], 0
    // Predicated region
    $region2: #{tpu_custom_call.1} parent=1 // pred_check
      _
    $region3: #{tpu_custom_call.1} parent=1 // pred_check_branch
      %14 = sbr.rel (0) target = $region5
    $region4: #{tpu_custom_call.1} parent=1 // pred_region
      _
    $region5: #{tpu_custom_call.1} parent=1 // pred_fallthru
      _
    // Predicated region
    $region6: #{tpu_custom_call.1} parent=1 // pred_check
      _
    $region7: #{tpu_custom_call.1} parent=1 // pred_check_branch
      %16 = sbr.rel (0) target = $region9
    $region8: #{tpu_custom_call.1} parent=1 // pred_region
      %s18 = ssub.s32 32768, 32768
      %19 = vsyncadd [#allocation3], %s18
      %s20 = sshll.u32 [#allocation2], 4
      %s21 = int_to_ptr.vmem [resolvable:$true] %s20
      %26 = dma.hbm_to_vmem [thread:$0]  %s1, 32768, %s21, [#allocation3], 512, 512, 32
    $region9: #{tpu_custom_call.1} parent=1 // pred_fallthru
      _
    // Predicated region
    $region10: #{tpu_custom_call.1} parent=1 // pred_check
      _
    $region11: #{tpu_custom_call.1} parent=1 // pred_check_branch
      %28 = sbr.rel (0) target = $region13
    $region12: #{tpu_custom_call.1} parent=1 // pred_region
      _
    $region13: #{tpu_custom_call.1} parent=1 // pred_fallthru
      _
    // Predicated region
    $region14: #{tpu_custom_call.1} parent=1 // pred_check
      _
    $region15: #{tpu_custom_call.1} parent=1 // pred_check_branch
      %30 = sbr.rel (0) target = $region17
    $region16: #{tpu_custom_call.1} parent=1 // pred_region
      %s32 = ssub.s32 32768, 32768
      %33 = vsyncadd [#allocation6], %s32
      %s34 = sshll.u32 [#allocation5], 4
      %s35 = int_to_ptr.vmem [resolvable:$true] %s34
      %40 = dma.hbm_to_vmem [thread:$0]  %s3, 32768, %s35, [#allocation6], 256, 256, 16
    $region17: #{tpu_custom_call.1} parent=1 // pred_fallthru
      _
    // Predicated region
    $region18: #{tpu_custom_call.1} parent=1 // pred_check
      _
    $region19: #{tpu_custom_call.1} parent=1 // pred_check_branch
      %42 = sbr.rel (0) target = $region21
    $region20: #{tpu_custom_call.1} parent=1 // pred_region
      _
    $region21: #{tpu_custom_call.1} parent=1 // pred_fallthru
      _
    // Predicated region
    $region22: #{tpu_custom_call.1} parent=1 // pred_check
      _
    $region23: #{tpu_custom_call.1} parent=1 // pred_check_branch
      %44 = sbr.rel (0) target = $region25
    $region24: #{tpu_custom_call.1} parent=1 // pred_region
      %45 = dma.done [#allocation3], 32768
    $region25: #{tpu_custom_call.1} parent=1 // pred_fallthru
      _
    // Predicated region
    $region26: #{tpu_custom_call.1} parent=1 // pred_check
      _
    $region27: #{tpu_custom_call.1} parent=1 // pred_check_branch
      %47 = sbr.rel (0) target = $region29
    $region28: #{tpu_custom_call.1} parent=1 // pred_region
      %48 = dma.done [#allocation6], 32768
    $region29: #{tpu_custom_call.1} parent=1 // pred_fallthru
      _
    %v49 = vld [vmem:[%s0] sm:$0xff]
    %v50 = vld [vmem:[%s0 + $0x8] sm:$0xff]
    %v51 = vld [vmem:[%s0 + $0x10] sm:$0xff]
    %v52 = vld [vmem:[%s0 + $0x18] sm:$0xff]
    %v53 = vld [vmem:[%s0 + $0x20] sm:$0xff]
    %v54 = vld [vmem:[%s0 + $0x28] sm:$0xff]
    %v55 = vld [vmem:[%s0 + $0x30] sm:$0xff]
    %v56 = vld [vmem:[%s0 + $0x38] sm:$0xff]
    %v57 = vld [vmem:[%s0 + $0x40] sm:$0xff]
    %v58 = vld [vmem:[%s0 + $0x48] sm:$0xff]
    %v59 = vld [vmem:[%s0 + $0x50] sm:$0xff]
    %v60 = vld [vmem:[%s0 + $0x58] sm:$0xff]
    %v61 = vld [vmem:[%s0 + $0x60] sm:$0xff]
    %v62 = vld [vmem:[%s0 + $0x68] sm:$0xff]
    %v63 = vld [vmem:[%s0 + $0x70] sm:$0xff]
    %v64 = vld [vmem:[%s0 + $0x78] sm:$0xff]
    %v65 = vld [vmem:[%s0 + $0x80] sm:$0xff]
    %v66 = vld [vmem:[%s0 + $0x88] sm:$0xff]
    %v67 = vld [vmem:[%s0 + $0x90] sm:$0xff]
    %v68 = vld [vmem:[%s0 + $0x98] sm:$0xff]
    %v69 = vld [vmem:[%s0 + $0xa0] sm:$0xff]
    %v70 = vld [vmem:[%s0 + $0xa8] sm:$0xff]
    %v71 = vld [vmem:[%s0 + $0xb0] sm:$0xff]
    %v72 = vld [vmem:[%s0 + $0xb8] sm:$0xff]
    %v73 = vld [vmem:[%s0 + $0xc0] sm:$0xff]
    %v74 = vld [vmem:[%s0 + $0xc8] sm:$0xff]
    %v75 = vld [vmem:[%s0 + $0xd0] sm:$0xff]
    %v76 = vld [vmem:[%s0 + $0xd8] sm:$0xff]
    %v77 = vld [vmem:[%s0 + $0xe0] sm:$0xff]
    %v78 = vld [vmem:[%s0 + $0xe8] sm:$0xff]
    %v79 = vld [vmem:[%s0 + $0xf0] sm:$0xff]
    %v80 = vld [vmem:[%s0 + $0xf8] sm:$0xff]
    %v81 = vld [vmem:[%s0 + $0x100] sm:$0xff]
    %v82 = vld [vmem:[%s0 + $0x108] sm:$0xff]
    %v83 = vld [vmem:[%s0 + $0x110] sm:$0xff]
    %v84 = vld [vmem:[%s0 + $0x118] sm:$0xff]
    %v85 = vld [vmem:[%s0 + $0x120] sm:$0xff]
    %v86 = vld [vmem:[%s0 + $0x128] sm:$0xff]
    %v87 = vld [vmem:[%s0 + $0x130] sm:$0xff]
    %v88 = vld [vmem:[%s0 + $0x138] sm:$0xff]
    %v89 = vld [vmem:[%s0 + $0x140] sm:$0xff]
    %v90 = vld [vmem:[%s0 + $0x148] sm:$0xff]
    %v91 = vld [vmem:[%s0 + $0x150] sm:$0xff]
    %v92 = vld [vmem:[%s0 + $0x158] sm:$0xff]
    %v93 = vld [vmem:[%s0 + $0x160] sm:$0xff]
    %v94 = vld [vmem:[%s0 + $0x168] sm:$0xff]
    %v95 = vld [vmem:[%s0 + $0x170] sm:$0xff]
    %v96 = vld [vmem:[%s0 + $0x178] sm:$0xff]
    %v97 = vld [vmem:[%s0 + $0x180] sm:$0xff]
    %v98 = vld [vmem:[%s0 + $0x188] sm:$0xff]
    %v99 = vld [vmem:[%s0 + $0x190] sm:$0xff]
    %v100 = vld [vmem:[%s0 + $0x198] sm:$0xff]
    %v101 = vld [vmem:[%s0 + $0x1a0] sm:$0xff]
    %v102 = vld [vmem:[%s0 + $0x1a8] sm:$0xff]
    %v103 = vld [vmem:[%s0 + $0x1b0] sm:$0xff]
    %v104 = vld [vmem:[%s0 + $0x1b8] sm:$0xff]
    %v105 = vld [vmem:[%s0 + $0x1c0] sm:$0xff]
    %v106 = vld [vmem:[%s0 + $0x1c8] sm:$0xff]
    %v107 = vld [vmem:[%s0 + $0x1d0] sm:$0xff]
    %v108 = vld [vmem:[%s0 + $0x1d8] sm:$0xff]
    %v109 = vld [vmem:[%s0 + $0x1e0] sm:$0xff]
    %v110 = vld [vmem:[%s0 + $0x1e8] sm:$0xff]
    %v111 = vld [vmem:[%s0 + $0x1f0] sm:$0xff]
    %v112 = vld [vmem:[%s0 + $0x1f8] sm:$0xff]
    %v113 = vld [vmem:[%s0 + $0x200] sm:$0xff]
    %v114 = vld [vmem:[%s0 + $0x208] sm:$0xff]
    %v115 = vld [vmem:[%s0 + $0x210] sm:$0xff]
    %v116 = vld [vmem:[%s0 + $0x218] sm:$0xff]
    %v117 = vld [vmem:[%s0 + $0x220] sm:$0xff]
    %v118 = vld [vmem:[%s0 + $0x228] sm:$0xff]
    %v119 = vld [vmem:[%s0 + $0x230] sm:$0xff]
    %v120 = vld [vmem:[%s0 + $0x238] sm:$0xff]
    %v121 = vld [vmem:[%s0 + $0x240] sm:$0xff]
    %v122 = vld [vmem:[%s0 + $0x248] sm:$0xff]
    %v123 = vld [vmem:[%s0 + $0x250] sm:$0xff]
    %v124 = vld [vmem:[%s0 + $0x258] sm:$0xff]
    %v125 = vld [vmem:[%s0 + $0x260] sm:$0xff]
    %v126 = vld [vmem:[%s0 + $0x268] sm:$0xff]
    %v127 = vld [vmem:[%s0 + $0x270] sm:$0xff]
    %v128 = vld [vmem:[%s0 + $0x278] sm:$0xff]
    %v129 = vld [vmem:[%s0 + $0x280] sm:$0xff]
    %v130 = vld [vmem:[%s0 + $0x288] sm:$0xff]
    %v131 = vld [vmem:[%s0 + $0x290] sm:$0xff]
    %v132 = vld [vmem:[%s0 + $0x298] sm:$0xff]
    %v133 = vld [vmem:[%s0 + $0x2a0] sm:$0xff]
    %v134 = vld [vmem:[%s0 + $0x2a8] sm:$0xff]
    %v135 = vld [vmem:[%s0 + $0x2b0] sm:$0xff]
    %v136 = vld [vmem:[%s0 + $0x2b8] sm:$0xff]
    %v137 = vld [vmem:[%s0 + $0x2c0] sm:$0xff]
    %v138 = vld [vmem:[%s0 + $0x2c8] sm:$0xff]
    %v139 = vld [vmem:[%s0 + $0x2d0] sm:$0xff]
    %v140 = vld [vmem:[%s0 + $0x2d8] sm:$0xff]
    %v141 = vld [vmem:[%s0 + $0x2e0] sm:$0xff]
    %v142 = vld [vmem:[%s0 + $0x2e8] sm:$0xff]
    %v143 = vld [vmem:[%s0 + $0x2f0] sm:$0xff]
    %v144 = vld [vmem:[%s0 + $0x2f8] sm:$0xff]
    %v145 = vld [vmem:[%s0 + $0x300] sm:$0xff]
    %v146 = vld [vmem:[%s0 + $0x308] sm:$0xff]
    %v147 = vld [vmem:[%s0 + $0x310] sm:$0xff]
    %v148 = vld [vmem:[%s0 + $0x318] sm:$0xff]
    %v149 = vld [vmem:[%s0 + $0x320] sm:$0xff]
    %v150 = vld [vmem:[%s0 + $0x328] sm:$0xff]
    %v151 = vld [vmem:[%s0 + $0x330] sm:$0xff]
    %v152 = vld [vmem:[%s0 + $0x338] sm:$0xff]
    %v153 = vld [vmem:[%s0 + $0x340] sm:$0xff]
    %v154 = vld [vmem:[%s0 + $0x348] sm:$0xff]
    %v155 = vld [vmem:[%s0 + $0x350] sm:$0xff]
    %v156 = vld [vmem:[%s0 + $0x358] sm:$0xff]
    %v157 = vld [vmem:[%s0 + $0x360] sm:$0xff]
    %v158 = vld [vmem:[%s0 + $0x368] sm:$0xff]
    %v159 = vld [vmem:[%s0 + $0x370] sm:$0xff]
    %v160 = vld [vmem:[%s0 + $0x378] sm:$0xff]
    %v161 = vld [vmem:[%s0 + $0x380] sm:$0xff]
    %v162 = vld [vmem:[%s0 + $0x388] sm:$0xff]
    %v163 = vld [vmem:[%s0 + $0x390] sm:$0xff]
    %v164 = vld [vmem:[%s0 + $0x398] sm:$0xff]
    %v165 = vld [vmem:[%s0 + $0x3a0] sm:$0xff]
    %v166 = vld [vmem:[%s0 + $0x3a8] sm:$0xff]
    %v167 = vld [vmem:[%s0 + $0x3b0] sm:$0xff]
    %v168 = vld [vmem:[%s0 + $0x3b8] sm:$0xff]
    %v169 = vld [vmem:[%s0 + $0x3c0] sm:$0xff]
    %v170 = vld [vmem:[%s0 + $0x3c8] sm:$0xff]
    %v171 = vld [vmem:[%s0 + $0x3d0] sm:$0xff]
    %v172 = vld [vmem:[%s0 + $0x3d8] sm:$0xff]
    %v173 = vld [vmem:[%s0 + $0x3e0] sm:$0xff]
    %v174 = vld [vmem:[%s0 + $0x3e8] sm:$0xff]
    %v175 = vld [vmem:[%s0 + $0x3f0] sm:$0xff]
    %v176 = vld [vmem:[%s0 + $0x3f8] sm:$0xff]
    %vm177 = vcmask 130048
    %v178 = vsel %vm177, %v49, 0.0
    %179 = vadd.xlane.f32.xlu0 %v178
    %v180 = vpop.xlane.xlu0 %179
    %v181 = vsel %vm177, %v50, 0.0
    %182 = vadd.xlane.f32.xlu0 %v181
    %v183 = vpop.xlane.xlu0 %182
    %v184 = vsel %vm177, %v51, 0.0
    %185 = vadd.xlane.f32.xlu0 %v184
    %v186 = vpop.xlane.xlu0 %185
    %v187 = vsel %vm177, %v52, 0.0
    %188 = vadd.xlane.f32.xlu0 %v187
    %v189 = vpop.xlane.xlu0 %188
    %v190 = vsel %vm177, %v53, 0.0
    %191 = vadd.xlane.f32.xlu0 %v190
    %v192 = vpop.xlane.xlu0 %191
    %v193 = vsel %vm177, %v54, 0.0
    %194 = vadd.xlane.f32.xlu0 %v193
    %v195 = vpop.xlane.xlu0 %194
    %v196 = vsel %vm177, %v55, 0.0
    %197 = vadd.xlane.f32.xlu0 %v196
    %v198 = vpop.xlane.xlu0 %197
    %v199 = vsel %vm177, %v56, 0.0
    %200 = vadd.xlane.f32.xlu0 %v199
    %v201 = vpop.xlane.xlu0 %200
    %v202 = vsel %vm177, %v57, 0.0
    %203 = vadd.xlane.f32.xlu0 %v202
    %v204 = vpop.xlane.xlu0 %203
    %v205 = vsel %vm177, %v58, 0.0
    %206 = vadd.xlane.f32.xlu0 %v205
    %v207 = vpop.xlane.xlu0 %206
    %v208 = vsel %vm177, %v59, 0.0
    %209 = vadd.xlane.f32.xlu0 %v208
    %v210 = vpop.xlane.xlu0 %209
    %v211 = vsel %vm177, %v60, 0.0
    %212 = vadd.xlane.f32.xlu0 %v211
    %v213 = vpop.xlane.xlu0 %212
    %v214 = vsel %vm177, %v61, 0.0
    %215 = vadd.xlane.f32.xlu0 %v214
    %v216 = vpop.xlane.xlu0 %215
    %v217 = vsel %vm177, %v62, 0.0
    %218 = vadd.xlane.f32.xlu0 %v217
    %v219 = vpop.xlane.xlu0 %218
    %v220 = vsel %vm177, %v63, 0.0
    %221 = vadd.xlane.f32.xlu0 %v220
    %v222 = vpop.xlane.xlu0 %221
    %v223 = vsel %vm177, %v64, 0.0
    %224 = vadd.xlane.f32.xlu0 %v223
    %v225 = vpop.xlane.xlu0 %224
    %v226 = vsel %vm177, %v65, 0.0
    %227 = vadd.xlane.f32.xlu0 %v226
    %v228 = vpop.xlane.xlu0 %227
    %v229 = vsel %vm177, %v66, 0.0
    %230 = vadd.xlane.f32.xlu0 %v229
    %v231 = vpop.xlane.xlu0 %230
    %v232 = vsel %vm177, %v67, 0.0
    %233 = vadd.xlane.f32.xlu0 %v232
    %v234 = vpop.xlane.xlu0 %233
    %v235 = vsel %vm177, %v68, 0.0
    %236 = vadd.xlane.f32.xlu0 %v235
    %v237 = vpop.xlane.xlu0 %236
    %v238 = vsel %vm177, %v69, 0.0
    %239 = vadd.xlane.f32.xlu0 %v238
    %v240 = vpop.xlane.xlu0 %239
    %v241 = vsel %vm177, %v70, 0.0
    %242 = vadd.xlane.f32.xlu0 %v241
    %v243 = vpop.xlane.xlu0 %242
    %v244 = vsel %vm177, %v71, 0.0
    %245 = vadd.xlane.f32.xlu0 %v244
    %v246 = vpop.xlane.xlu0 %245
    %v247 = vsel %vm177, %v72, 0.0
    %248 = vadd.xlane.f32.xlu0 %v247
    %v249 = vpop.xlane.xlu0 %248
    %v250 = vsel %vm177, %v73, 0.0
    %251 = vadd.xlane.f32.xlu0 %v250
    %v252 = vpop.xlane.xlu0 %251
    %v253 = vsel %vm177, %v74, 0.0
    %254 = vadd.xlane.f32.xlu0 %v253
    %v255 = vpop.xlane.xlu0 %254
    %v256 = vsel %vm177, %v75, 0.0
    %257 = vadd.xlane.f32.xlu0 %v256
    %v258 = vpop.xlane.xlu0 %257
    %v259 = vsel %vm177, %v76, 0.0
    %260 = vadd.xlane.f32.xlu0 %v259
    %v261 = vpop.xlane.xlu0 %260
    %v262 = vsel %vm177, %v77, 0.0
    %263 = vadd.xlane.f32.xlu0 %v262
    %v264 = vpop.xlane.xlu0 %263
    %v265 = vsel %vm177, %v78, 0.0
    %266 = vadd.xlane.f32.xlu0 %v265
    %v267 = vpop.xlane.xlu0 %266
    %v268 = vsel %vm177, %v79, 0.0
    %269 = vadd.xlane.f32.xlu0 %v268
    %v270 = vpop.xlane.xlu0 %269
    %v271 = vsel %vm177, %v80, 0.0
    %272 = vadd.xlane.f32.xlu0 %v271
    %v273 = vpop.xlane.xlu0 %272
    %v274 = vsel %vm177, %v81, 0.0
    %275 = vadd.xlane.f32.xlu0 %v274
    %v276 = vpop.xlane.xlu0 %275
    %v277 = vsel %vm177, %v82, 0.0
    %278 = vadd.xlane.f32.xlu0 %v277
    %v279 = vpop.xlane.xlu0 %278
    %v280 = vsel %vm177, %v83, 0.0
    %281 = vadd.xlane.f32.xlu0 %v280
    %v282 = vpop.xlane.xlu0 %281
    %v283 = vsel %vm177, %v84, 0.0
    %284 = vadd.xlane.f32.xlu0 %v283
    %v285 = vpop.xlane.xlu0 %284
    %v286 = vsel %vm177, %v85, 0.0
    %287 = vadd.xlane.f32.xlu0 %v286
    %v288 = vpop.xlane.xlu0 %287
    %v289 = vsel %vm177, %v86, 0.0
    %290 = vadd.xlane.f32.xlu0 %v289
    %v291 = vpop.xlane.xlu0 %290
    %v292 = vsel %vm177, %v87, 0.0
    %293 = vadd.xlane.f32.xlu0 %v292
    %v294 = vpop.xlane.xlu0 %293
    %v295 = vsel %vm177, %v88, 0.0
    %296 = vadd.xlane.f32.xlu0 %v295
    %v297 = vpop.xlane.xlu0 %296
    %v298 = vsel %vm177, %v89, 0.0
    %299 = vadd.xlane.f32.xlu0 %v298
    %v300 = vpop.xlane.xlu0 %299
    %v301 = vsel %vm177, %v90, 0.0
    %302 = vadd.xlane.f32.xlu0 %v301
    %v303 = vpop.xlane.xlu0 %302
    %v304 = vsel %vm177, %v91, 0.0
    %305 = vadd.xlane.f32.xlu0 %v304
    %v306 = vpop.xlane.xlu0 %305
    %v307 = vsel %vm177, %v92, 0.0
    %308 = vadd.xlane.f32.xlu0 %v307
    %v309 = vpop.xlane.xlu0 %308
    %v310 = vsel %vm177, %v93, 0.0
    %311 = vadd.xlane.f32.xlu0 %v310
    %v312 = vpop.xlane.xlu0 %311
    %v313 = vsel %vm177, %v94, 0.0
    %314 = vadd.xlane.f32.xlu0 %v313
    %v315 = vpop.xlane.xlu0 %314
    %v316 = vsel %vm177, %v95, 0.0
    %317 = vadd.xlane.f32.xlu0 %v316
    %v318 = vpop.xlane.xlu0 %317
    %v319 = vsel %vm177, %v96, 0.0
    %320 = vadd.xlane.f32.xlu0 %v319
    %v321 = vpop.xlane.xlu0 %320
    %v322 = vsel %vm177, %v97, 0.0
    %323 = vadd.xlane.f32.xlu0 %v322
    %v324 = vpop.xlane.xlu0 %323
    %v325 = vsel %vm177, %v98, 0.0
    %326 = vadd.xlane.f32.xlu0 %v325
    %v327 = vpop.xlane.xlu0 %326
    %v328 = vsel %vm177, %v99, 0.0
    %329 = vadd.xlane.f32.xlu0 %v328
    %v330 = vpop.xlane.xlu0 %329
    %v331 = vsel %vm177, %v100, 0.0
    %332 = vadd.xlane.f32.xlu0 %v331
    %v333 = vpop.xlane.xlu0 %332
    %v334 = vsel %vm177, %v101, 0.0
    %335 = vadd.xlane.f32.xlu0 %v334
    %v336 = vpop.xlane.xlu0 %335
    %v337 = vsel %vm177, %v102, 0.0
    %338 = vadd.xlane.f32.xlu0 %v337
    %v339 = vpop.xlane.xlu0 %338
    %v340 = vsel %vm177, %v103, 0.0
    %341 = vadd.xlane.f32.xlu0 %v340
    %v342 = vpop.xlane.xlu0 %341
    %v343 = vsel %vm177, %v104, 0.0
    %344 = vadd.xlane.f32.xlu0 %v343
    %v345 = vpop.xlane.xlu0 %344
    %v346 = vsel %vm177, %v105, 0.0
    %347 = vadd.xlane.f32.xlu0 %v346
    %v348 = vpop.xlane.xlu0 %347
    %v349 = vsel %vm177, %v106, 0.0
    %350 = vadd.xlane.f32.xlu0 %v349
    %v351 = vpop.xlane.xlu0 %350
    %v352 = vsel %vm177, %v107, 0.0
    %353 = vadd.xlane.f32.xlu0 %v352
    %v354 = vpop.xlane.xlu0 %353
    %v355 = vsel %vm177, %v108, 0.0
    %356 = vadd.xlane.f32.xlu0 %v355
    %v357 = vpop.xlane.xlu0 %356
    %v358 = vsel %vm177, %v109, 0.0
    %359 = vadd.xlane.f32.xlu0 %v358
    %v360 = vpop.xlane.xlu0 %359
    %v361 = vsel %vm177, %v110, 0.0
    %362 = vadd.xlane.f32.xlu0 %v361
    %v363 = vpop.xlane.xlu0 %362
    %v364 = vsel %vm177, %v111, 0.0
    %365 = vadd.xlane.f32.xlu0 %v364
    %v366 = vpop.xlane.xlu0 %365
    %v367 = vsel %vm177, %v112, 0.0
    %368 = vadd.xlane.f32.xlu0 %v367
    %v369 = vpop.xlane.xlu0 %368
    %v370 = vsel %vm177, %v113, 0.0
    %371 = vadd.xlane.f32.xlu0 %v370
    %v372 = vpop.xlane.xlu0 %371
    %v373 = vsel %vm177, %v114, 0.0
    %374 = vadd.xlane.f32.xlu0 %v373
    %v375 = vpop.xlane.xlu0 %374
    %v376 = vsel %vm177, %v115, 0.0
    %377 = vadd.xlane.f32.xlu0 %v376
    %v378 = vpop.xlane.xlu0 %377
    %v379 = vsel %vm177, %v116, 0.0
    %380 = vadd.xlane.f32.xlu0 %v379
    %v381 = vpop.xlane.xlu0 %380
    %v382 = vsel %vm177, %v117, 0.0
    %383 = vadd.xlane.f32.xlu0 %v382
    %v384 = vpop.xlane.xlu0 %383
    %v385 = vsel %vm177, %v118, 0.0
    %386 = vadd.xlane.f32.xlu0 %v385
    %v387 = vpop.xlane.xlu0 %386
    %v388 = vsel %vm177, %v119, 0.0
    %389 = vadd.xlane.f32.xlu0 %v388
    %v390 = vpop.xlane.xlu0 %389
    %v391 = vsel %vm177, %v120, 0.0
    %392 = vadd.xlane.f32.xlu0 %v391
    %v393 = vpop.xlane.xlu0 %392
    %v394 = vsel %vm177, %v121, 0.0
    %395 = vadd.xlane.f32.xlu0 %v394
    %v396 = vpop.xlane.xlu0 %395
    %v397 = vsel %vm177, %v122, 0.0
    %398 = vadd.xlane.f32.xlu0 %v397
    %v399 = vpop.xlane.xlu0 %398
    %v400 = vsel %vm177, %v123, 0.0
    %401 = vadd.xlane.f32.xlu0 %v400
    %v402 = vpop.xlane.xlu0 %401
    %v403 = vsel %vm177, %v124, 0.0
    %404 = vadd.xlane.f32.xlu0 %v403
    %v405 = vpop.xlane.xlu0 %404
    %v406 = vsel %vm177, %v125, 0.0
    %407 = vadd.xlane.f32.xlu0 %v406
    %v408 = vpop.xlane.xlu0 %407
    %v409 = vsel %vm177, %v126, 0.0
    %410 = vadd.xlane.f32.xlu0 %v409
    %v411 = vpop.xlane.xlu0 %410
    %v412 = vsel %vm177, %v127, 0.0
    %413 = vadd.xlane.f32.xlu0 %v412
    %v414 = vpop.xlane.xlu0 %413
    %v415 = vsel %vm177, %v128, 0.0
    %416 = vadd.xlane.f32.xlu0 %v415
    %v417 = vpop.xlane.xlu0 %416
    %v418 = vsel %vm177, %v129, 0.0
    %419 = vadd.xlane.f32.xlu0 %v418
    %v420 = vpop.xlane.xlu0 %419
    %v421 = vsel %vm177, %v130, 0.0
    %422 = vadd.xlane.f32.xlu0 %v421
    %v423 = vpop.xlane.xlu0 %422
    %v424 = vsel %vm177, %v131, 0.0
    %425 = vadd.xlane.f32.xlu0 %v424
    %v426 = vpop.xlane.xlu0 %425
    %v427 = vsel %vm177, %v132, 0.0
    %428 = vadd.xlane.f32.xlu0 %v427
    %v429 = vpop.xlane.xlu0 %428
    %v430 = vsel %vm177, %v133, 0.0
    %431 = vadd.xlane.f32.xlu0 %v430
    %v432 = vpop.xlane.xlu0 %431
    %v433 = vsel %vm177, %v134, 0.0
    %434 = vadd.xlane.f32.xlu0 %v433
    %v435 = vpop.xlane.xlu0 %434
    %v436 = vsel %vm177, %v135, 0.0
    %437 = vadd.xlane.f32.xlu0 %v436
    %v438 = vpop.xlane.xlu0 %437
    %v439 = vsel %vm177, %v136, 0.0
    %440 = vadd.xlane.f32.xlu0 %v439
    %v441 = vpop.xlane.xlu0 %440
    %v442 = vsel %vm177, %v137, 0.0
    %443 = vadd.xlane.f32.xlu0 %v442
    %v444 = vpop.xlane.xlu0 %443
    %v445 = vsel %vm177, %v138, 0.0
    %446 = vadd.xlane.f32.xlu0 %v445
    %v447 = vpop.xlane.xlu0 %446
    %v448 = vsel %vm177, %v139, 0.0
    %449 = vadd.xlane.f32.xlu0 %v448
    %v450 = vpop.xlane.xlu0 %449
    %v451 = vsel %vm177, %v140, 0.0
    %452 = vadd.xlane.f32.xlu0 %v451
    %v453 = vpop.xlane.xlu0 %452
    %v454 = vsel %vm177, %v141, 0.0
    %455 = vadd.xlane.f32.xlu0 %v454
    %v456 = vpop.xlane.xlu0 %455
    %v457 = vsel %vm177, %v142, 0.0
    %458 = vadd.xlane.f32.xlu0 %v457
    %v459 = vpop.xlane.xlu0 %458
    %v460 = vsel %vm177, %v143, 0.0
    %461 = vadd.xlane.f32.xlu0 %v460
    %v462 = vpop.xlane.xlu0 %461
    %v463 = vsel %vm177, %v144, 0.0
    %464 = vadd.xlane.f32.xlu0 %v463
    %v465 = vpop.xlane.xlu0 %464
    %v466 = vsel %vm177, %v145, 0.0
    %467 = vadd.xlane.f32.xlu0 %v466
    %v468 = vpop.xlane.xlu0 %467
    %v469 = vsel %vm177, %v146, 0.0
    %470 = vadd.xlane.f32.xlu0 %v469
    %v471 = vpop.xlane.xlu0 %470
    %v472 = vsel %vm177, %v147, 0.0
    %473 = vadd.xlane.f32.xlu0 %v472
    %v474 = vpop.xlane.xlu0 %473
    %v475 = vsel %vm177, %v148, 0.0
    %476 = vadd.xlane.f32.xlu0 %v475
    %v477 = vpop.xlane.xlu0 %476
    %v478 = vsel %vm177, %v149, 0.0
    %479 = vadd.xlane.f32.xlu0 %v478
    %v480 = vpop.xlane.xlu0 %479
    %v481 = vsel %vm177, %v150, 0.0
    %482 = vadd.xlane.f32.xlu0 %v481
    %v483 = vpop.xlane.xlu0 %482
    %v484 = vsel %vm177, %v151, 0.0
    %485 = vadd.xlane.f32.xlu0 %v484
    %v486 = vpop.xlane.xlu0 %485
    %v487 = vsel %vm177, %v152, 0.0
    %488 = vadd.xlane.f32.xlu0 %v487
    %v489 = vpop.xlane.xlu0 %488
    %v490 = vsel %vm177, %v153, 0.0
    %491 = vadd.xlane.f32.xlu0 %v490
    %v492 = vpop.xlane.xlu0 %491
    %v493 = vsel %vm177, %v154, 0.0
    %494 = vadd.xlane.f32.xlu0 %v493
    %v495 = vpop.xlane.xlu0 %494
    %v496 = vsel %vm177, %v155, 0.0
    %497 = vadd.xlane.f32.xlu0 %v496
    %v498 = vpop.xlane.xlu0 %497
    %v499 = vsel %vm177, %v156, 0.0
    %500 = vadd.xlane.f32.xlu0 %v499
    %v501 = vpop.xlane.xlu0 %500
    %v502 = vsel %vm177, %v157, 0.0
    %503 = vadd.xlane.f32.xlu0 %v502
    %v504 = vpop.xlane.xlu0 %503
    %v505 = vsel %vm177, %v158, 0.0
    %506 = vadd.xlane.f32.xlu0 %v505
    %v507 = vpop.xlane.xlu0 %506
    %v508 = vsel %vm177, %v159, 0.0
    %509 = vadd.xlane.f32.xlu0 %v508
    %v510 = vpop.xlane.xlu0 %509
    %v511 = vsel %vm177, %v160, 0.0
    %512 = vadd.xlane.f32.xlu0 %v511
    %v513 = vpop.xlane.xlu0 %512
    %v514 = vsel %vm177, %v161, 0.0
    %515 = vadd.xlane.f32.xlu0 %v514
    %v516 = vpop.xlane.xlu0 %515
    %v517 = vsel %vm177, %v162, 0.0
    %518 = vadd.xlane.f32.xlu0 %v517
    %v519 = vpop.xlane.xlu0 %518
    %v520 = vsel %vm177, %v163, 0.0
    %521 = vadd.xlane.f32.xlu0 %v520
    %v522 = vpop.xlane.xlu0 %521
    %v523 = vsel %vm177, %v164, 0.0
    %524 = vadd.xlane.f32.xlu0 %v523
    %v525 = vpop.xlane.xlu0 %524
    %v526 = vsel %vm177, %v165, 0.0
    %527 = vadd.xlane.f32.xlu0 %v526
    %v528 = vpop.xlane.xlu0 %527
    %v529 = vsel %vm177, %v166, 0.0
    %530 = vadd.xlane.f32.xlu0 %v529
    %v531 = vpop.xlane.xlu0 %530
    %v532 = vsel %vm177, %v167, 0.0
    %533 = vadd.xlane.f32.xlu0 %v532
    %v534 = vpop.xlane.xlu0 %533
    %v535 = vsel %vm177, %v168, 0.0
    %536 = vadd.xlane.f32.xlu0 %v535
    %v537 = vpop.xlane.xlu0 %536
    %v538 = vsel %vm177, %v169, 0.0
    %539 = vadd.xlane.f32.xlu0 %v538
    %v540 = vpop.xlane.xlu0 %539
    %v541 = vsel %vm177, %v170, 0.0
    %542 = vadd.xlane.f32.xlu0 %v541
    %v543 = vpop.xlane.xlu0 %542
    %v544 = vsel %vm177, %v171, 0.0
    %545 = vadd.xlane.f32.xlu0 %v544
    %v546 = vpop.xlane.xlu0 %545
    %v547 = vsel %vm177, %v172, 0.0
    %548 = vadd.xlane.f32.xlu0 %v547
    %v549 = vpop.xlane.xlu0 %548
    %v550 = vsel %vm177, %v173, 0.0
    %551 = vadd.xlane.f32.xlu0 %v550
    %v552 = vpop.xlane.xlu0 %551
    %v553 = vsel %vm177, %v174, 0.0
    %554 = vadd.xlane.f32.xlu0 %v553
    %v555 = vpop.xlane.xlu0 %554
    %v556 = vsel %vm177, %v175, 0.0
    %557 = vadd.xlane.f32.xlu0 %v556
    %v558 = vpop.xlane.xlu0 %557
    %v559 = vsel %vm177, %v176, 0.0
    %560 = vadd.xlane.f32.xlu0 %v559
    %v561 = vpop.xlane.xlu0 %560
    %v562 = vrcp.pop 16.0
    %v563 = vmul.f32 %v180, %v562
    %v564 = vmul.f32 %v183, %v562
    %v565 = vmul.f32 %v186, %v562
    %v566 = vmul.f32 %v189, %v562
    %v567 = vmul.f32 %v192, %v562
    %v568 = vmul.f32 %v195, %v562
    %v569 = vmul.f32 %v198, %v562
    %v570 = vmul.f32 %v201, %v562
    %v571 = vmul.f32 %v204, %v562
    %v572 = vmul.f32 %v207, %v562
    %v573 = vmul.f32 %v210, %v562
    %v574 = vmul.f32 %v213, %v562
    %v575 = vmul.f32 %v216, %v562
    %v576 = vmul.f32 %v219, %v562
    %v577 = vmul.f32 %v222, %v562
    %v578 = vmul.f32 %v225, %v562
    %v579 = vmul.f32 %v228, %v562
    %v580 = vmul.f32 %v231, %v562
    %v581 = vmul.f32 %v234, %v562
    %v582 = vmul.f32 %v237, %v562
    %v583 = vmul.f32 %v240, %v562
    %v584 = vmul.f32 %v243, %v562
    %v585 = vmul.f32 %v246, %v562
    %v586 = vmul.f32 %v249, %v562
    %v587 = vmul.f32 %v252, %v562
    %v588 = vmul.f32 %v255, %v562
    %v589 = vmul.f32 %v258, %v562
    %v590 = vmul.f32 %v261, %v562
    %v591 = vmul.f32 %v264, %v562
    %v592 = vmul.f32 %v267, %v562
    %v593 = vmul.f32 %v270, %v562
    %v594 = vmul.f32 %v273, %v562
    %v595 = vmul.f32 %v276, %v562
    %v596 = vmul.f32 %v279, %v562
    %v597 = vmul.f32 %v282, %v562
    %v598 = vmul.f32 %v285, %v562
    %v599 = vmul.f32 %v288, %v562
    %v600 = vmul.f32 %v291, %v562
    %v601 = vmul.f32 %v294, %v562
    %v602 = vmul.f32 %v297, %v562
    %v603 = vmul.f32 %v300, %v562
    %v604 = vmul.f32 %v303, %v562
    %v605 = vmul.f32 %v306, %v562
    %v606 = vmul.f32 %v309, %v562
    %v607 = vmul.f32 %v312, %v562
    %v608 = vmul.f32 %v315, %v562
    %v609 = vmul.f32 %v318, %v562
    %v610 = vmul.f32 %v321, %v562
    %v611 = vmul.f32 %v324, %v562
    %v612 = vmul.f32 %v327, %v562
    %v613 = vmul.f32 %v330, %v562
    %v614 = vmul.f32 %v333, %v562
    %v615 = vmul.f32 %v336, %v562
    %v616 = vmul.f32 %v339, %v562
    %v617 = vmul.f32 %v342, %v562
    %v618 = vmul.f32 %v345, %v562
    %v619 = vmul.f32 %v348, %v562
    %v620 = vmul.f32 %v351, %v562
    %v621 = vmul.f32 %v354, %v562
    %v622 = vmul.f32 %v357, %v562
    %v623 = vmul.f32 %v360, %v562
    %v624 = vmul.f32 %v363, %v562
    %v625 = vmul.f32 %v366, %v562
    %v626 = vmul.f32 %v369, %v562
    %v627 = vmul.f32 %v372, %v562
    %v628 = vmul.f32 %v375, %v562
    %v629 = vmul.f32 %v378, %v562
    %v630 = vmul.f32 %v381, %v562
    %v631 = vmul.f32 %v384, %v562
    %v632 = vmul.f32 %v387, %v562
    %v633 = vmul.f32 %v390, %v562
    %v634 = vmul.f32 %v393, %v562
    %v635 = vmul.f32 %v396, %v562
    %v636 = vmul.f32 %v399, %v562
    %v637 = vmul.f32 %v402, %v562
    %v638 = vmul.f32 %v405, %v562
    %v639 = vmul.f32 %v408, %v562
    %v640 = vmul.f32 %v411, %v562
    %v641 = vmul.f32 %v414, %v562
    %v642 = vmul.f32 %v417, %v562
    %v643 = vmul.f32 %v420, %v562
    %v644 = vmul.f32 %v423, %v562
    %v645 = vmul.f32 %v426, %v562
    %v646 = vmul.f32 %v429, %v562
    %v647 = vmul.f32 %v432, %v562
    %v648 = vmul.f32 %v435, %v562
    %v649 = vmul.f32 %v438, %v562
    %v650 = vmul.f32 %v441, %v562
    %v651 = vmul.f32 %v444, %v562
    %v652 = vmul.f32 %v447, %v562
    %v653 = vmul.f32 %v450, %v562
    %v654 = vmul.f32 %v453, %v562
    %v655 = vmul.f32 %v456, %v562
    %v656 = vmul.f32 %v459, %v562
    %v657 = vmul.f32 %v462, %v562
    %v658 = vmul.f32 %v465, %v562
    %v659 = vmul.f32 %v468, %v562
    %v660 = vmul.f32 %v471, %v562
    %v661 = vmul.f32 %v474, %v562
    %v662 = vmul.f32 %v477, %v562
    %v663 = vmul.f32 %v480, %v562
    %v664 = vmul.f32 %v483, %v562
    %v665 = vmul.f32 %v486, %v562
    %v666 = vmul.f32 %v489, %v562
    %v667 = vmul.f32 %v492, %v562
    %v668 = vmul.f32 %v495, %v562
    %v669 = vmul.f32 %v498, %v562
    %v670 = vmul.f32 %v501, %v562
    %v671 = vmul.f32 %v504, %v562
    %v672 = vmul.f32 %v507, %v562
    %v673 = vmul.f32 %v510, %v562
    %v674 = vmul.f32 %v513, %v562
    %v675 = vmul.f32 %v516, %v562
    %v676 = vmul.f32 %v519, %v562
    %v677 = vmul.f32 %v522, %v562
    %v678 = vmul.f32 %v525, %v562
    %v679 = vmul.f32 %v528, %v562
    %v680 = vmul.f32 %v531, %v562
    %v681 = vmul.f32 %v534, %v562
    %v682 = vmul.f32 %v537, %v562
    %v683 = vmul.f32 %v540, %v562
    %v684 = vmul.f32 %v543, %v562
    %v685 = vmul.f32 %v546, %v562
    %v686 = vmul.f32 %v549, %v562
    %v687 = vmul.f32 %v552, %v562
    %v688 = vmul.f32 %v555, %v562
    %v689 = vmul.f32 %v558, %v562
    %v690 = vmul.f32 %v561, %v562
    %v691 = vpack.c.bf16 %v564, %v563
    %v692 = vpack.c.bf16 %v566, %v565
    %v693 = vpack.c.bf16 %v568, %v567
    %v694 = vpack.c.bf16 %v570, %v569
    %v695 = vpack.c.bf16 %v572, %v571
    %v696 = vpack.c.bf16 %v574, %v573
    %v697 = vpack.c.bf16 %v576, %v575
    %v698 = vpack.c.bf16 %v578, %v577
    %v699 = vpack.c.bf16 %v580, %v579
    %v700 = vpack.c.bf16 %v582, %v581
    %v701 = vpack.c.bf16 %v584, %v583
    %v702 = vpack.c.bf16 %v586, %v585
    %v703 = vpack.c.bf16 %v588, %v587
    %v704 = vpack.c.bf16 %v590, %v589
    %v705 = vpack.c.bf16 %v592, %v591
    %v706 = vpack.c.bf16 %v594, %v593
    %v707 = vpack.c.bf16 %v596, %v595
    %v708 = vpack.c.bf16 %v598, %v597
    %v709 = vpack.c.bf16 %v600, %v599
    %v710 = vpack.c.bf16 %v602, %v601
    %v711 = vpack.c.bf16 %v604, %v603
    %v712 = vpack.c.bf16 %v606, %v605
    %v713 = vpack.c.bf16 %v608, %v607
    %v714 = vpack.c.bf16 %v610, %v609
    %v715 = vpack.c.bf16 %v612, %v611
    %v716 = vpack.c.bf16 %v614, %v613
    %v717 = vpack.c.bf16 %v616, %v615
    %v718 = vpack.c.bf16 %v618, %v617
    %v719 = vpack.c.bf16 %v620, %v619
    %v720 = vpack.c.bf16 %v622, %v621
    %v721 = vpack.c.bf16 %v624, %v623
    %v722 = vpack.c.bf16 %v626, %v625
    %v723 = vpack.c.bf16 %v628, %v627
    %v724 = vpack.c.bf16 %v630, %v629
    %v725 = vpack.c.bf16 %v632, %v631
    %v726 = vpack.c.bf16 %v634, %v633
    %v727 = vpack.c.bf16 %v636, %v635
    %v728 = vpack.c.bf16 %v638, %v637
    %v729 = vpack.c.bf16 %v640, %v639
    %v730 = vpack.c.bf16 %v642, %v641
    %v731 = vpack.c.bf16 %v644, %v643
    %v732 = vpack.c.bf16 %v646, %v645
    %v733 = vpack.c.bf16 %v648, %v647
    %v734 = vpack.c.bf16 %v650, %v649
    %v735 = vpack.c.bf16 %v652, %v651
    %v736 = vpack.c.bf16 %v654, %v653
    %v737 = vpack.c.bf16 %v656, %v655
    %v738 = vpack.c.bf16 %v658, %v657
    %v739 = vpack.c.bf16 %v660, %v659
    %v740 = vpack.c.bf16 %v662, %v661
    %v741 = vpack.c.bf16 %v664, %v663
    %v742 = vpack.c.bf16 %v666, %v665
    %v743 = vpack.c.bf16 %v668, %v667
    %v744 = vpack.c.bf16 %v670, %v669
    %v745 = vpack.c.bf16 %v672, %v671
    %v746 = vpack.c.bf16 %v674, %v673
    %v747 = vpack.c.bf16 %v676, %v675
    %v748 = vpack.c.bf16 %v678, %v677
    %v749 = vpack.c.bf16 %v680, %v679
    %v750 = vpack.c.bf16 %v682, %v681
    %v751 = vpack.c.bf16 %v684, %v683
    %v752 = vpack.c.bf16 %v686, %v685
    %v753 = vpack.c.bf16 %v688, %v687
    %v754 = vpack.c.bf16 %v690, %v689
    %v755 = vld [vmem:[#allocation2] sm:$0xff]
    %v756 = vld [vmem:[#allocation2 + $0x8] sm:$0xff]
    %v757 = vld [vmem:[#allocation2 + $0x10] sm:$0xff]
    %v758 = vld [vmem:[#allocation2 + $0x18] sm:$0xff]
    %v759 = vld [vmem:[#allocation2 + $0x20] sm:$0xff]
    %v760 = vld [vmem:[#allocation2 + $0x28] sm:$0xff]
    %v761 = vld [vmem:[#allocation2 + $0x30] sm:$0xff]
    %v762 = vld [vmem:[#allocation2 + $0x38] sm:$0xff]
    %v763 = vld [vmem:[#allocation2 + $0x40] sm:$0xff]
    %v764 = vld [vmem:[#allocation2 + $0x48] sm:$0xff]
    %v765 = vld [vmem:[#allocation2 + $0x50] sm:$0xff]
    %v766 = vld [vmem:[#allocation2 + $0x58] sm:$0xff]
    %v767 = vld [vmem:[#allocation2 + $0x60] sm:$0xff]
    %v768 = vld [vmem:[#allocation2 + $0x68] sm:$0xff]
    %v769 = vld [vmem:[#allocation2 + $0x70] sm:$0xff]
    %v770 = vld [vmem:[#allocation2 + $0x78] sm:$0xff]
    %v771 = vld [vmem:[#allocation2 + $0x80] sm:$0xff]
    %v772 = vld [vmem:[#allocation2 + $0x88] sm:$0xff]
    %v773 = vld [vmem:[#allocation2 + $0x90] sm:$0xff]
    %v774 = vld [vmem:[#allocation2 + $0x98] sm:$0xff]
    %v775 = vld [vmem:[#allocation2 + $0xa0] sm:$0xff]
    %v776 = vld [vmem:[#allocation2 + $0xa8] sm:$0xff]
    %v777 = vld [vmem:[#allocation2 + $0xb0] sm:$0xff]
    %v778 = vld [vmem:[#allocation2 + $0xb8] sm:$0xff]
    %v779 = vld [vmem:[#allocation2 + $0xc0] sm:$0xff]
    %v780 = vld [vmem:[#allocation2 + $0xc8] sm:$0xff]
    %v781 = vld [vmem:[#allocation2 + $0xd0] sm:$0xff]
    %v782 = vld [vmem:[#allocation2 + $0xd8] sm:$0xff]
    %v783 = vld [vmem:[#allocation2 + $0xe0] sm:$0xff]
    %v784 = vld [vmem:[#allocation2 + $0xe8] sm:$0xff]
    %v785 = vld [vmem:[#allocation2 + $0xf0] sm:$0xff]
    %v786 = vld [vmem:[#allocation2 + $0xf8] sm:$0xff]
    %v787 = vld [vmem:[#allocation2 + $0x100] sm:$0xff]
    %v788 = vld [vmem:[#allocation2 + $0x108] sm:$0xff]
    %v789 = vld [vmem:[#allocation2 + $0x110] sm:$0xff]
    %v790 = vld [vmem:[#allocation2 + $0x118] sm:$0xff]
    %v791 = vld [vmem:[#allocation2 + $0x120] sm:$0xff]
    %v792 = vld [vmem:[#allocation2 + $0x128] sm:$0xff]
    %v793 = vld [vmem:[#allocation2 + $0x130] sm:$0xff]
    %v794 = vld [vmem:[#allocation2 + $0x138] sm:$0xff]
    %v795 = vld [vmem:[#allocation2 + $0x140] sm:$0xff]
    %v796 = vld [vmem:[#allocation2 + $0x148] sm:$0xff]
    %v797 = vld [vmem:[#allocation2 + $0x150] sm:$0xff]
    %v798 = vld [vmem:[#allocation2 + $0x158] sm:$0xff]
    %v799 = vld [vmem:[#allocation2 + $0x160] sm:$0xff]
    %v800 = vld [vmem:[#allocation2 + $0x168] sm:$0xff]
    %v801 = vld [vmem:[#allocation2 + $0x170] sm:$0xff]
    %v802 = vld [vmem:[#allocation2 + $0x178] sm:$0xff]
    %v803 = vld [vmem:[#allocation2 + $0x180] sm:$0xff]
    %v804 = vld [vmem:[#allocation2 + $0x188] sm:$0xff]
    %v805 = vld [vmem:[#allocation2 + $0x190] sm:$0xff]
    %v806 = vld [vmem:[#allocation2 + $0x198] sm:$0xff]
    %v807 = vld [vmem:[#allocation2 + $0x1a0] sm:$0xff]
    %v808 = vld [vmem:[#allocation2 + $0x1a8] sm:$0xff]
    %v809 = vld [vmem:[#allocation2 + $0x1b0] sm:$0xff]
    %v810 = vld [vmem:[#allocation2 + $0x1b8] sm:$0xff]
    %v811 = vld [vmem:[#allocation2 + $0x1c0] sm:$0xff]
    %v812 = vld [vmem:[#allocation2 + $0x1c8] sm:$0xff]
    %v813 = vld [vmem:[#allocation2 + $0x1d0] sm:$0xff]
    %v814 = vld [vmem:[#allocation2 + $0x1d8] sm:$0xff]
    %v815 = vld [vmem:[#allocation2 + $0x1e0] sm:$0xff]
    %v816 = vld [vmem:[#allocation2 + $0x1e8] sm:$0xff]
    %v817 = vld [vmem:[#allocation2 + $0x1f0] sm:$0xff]
    %v818 = vld [vmem:[#allocation2 + $0x1f8] sm:$0xff]
    %v819 = vld [vmem:[#allocation2 + $0x200] sm:$0xff]
    %v820 = vld [vmem:[#allocation2 + $0x208] sm:$0xff]
    %v821 = vld [vmem:[#allocation2 + $0x210] sm:$0xff]
    %v822 = vld [vmem:[#allocation2 + $0x218] sm:$0xff]
    %v823 = vld [vmem:[#allocation2 + $0x220] sm:$0xff]
    %v824 = vld [vmem:[#allocation2 + $0x228] sm:$0xff]
    %v825 = vld [vmem:[#allocation2 + $0x230] sm:$0xff]
    %v826 = vld [vmem:[#allocation2 + $0x238] sm:$0xff]
    %v827 = vld [vmem:[#allocation2 + $0x240] sm:$0xff]
    %v828 = vld [vmem:[#allocation2 + $0x248] sm:$0xff]
    %v829 = vld [vmem:[#allocation2 + $0x250] sm:$0xff]
    %v830 = vld [vmem:[#allocation2 + $0x258] sm:$0xff]
    %v831 = vld [vmem:[#allocation2 + $0x260] sm:$0xff]
    %v832 = vld [vmem:[#allocation2 + $0x268] sm:$0xff]
    %v833 = vld [vmem:[#allocation2 + $0x270] sm:$0xff]
    %v834 = vld [vmem:[#allocation2 + $0x278] sm:$0xff]
    %v835 = vld [vmem:[#allocation2 + $0x280] sm:$0xff]
    %v836 = vld [vmem:[#allocation2 + $0x288] sm:$0xff]
    %v837 = vld [vmem:[#allocation2 + $0x290] sm:$0xff]
    %v838 = vld [vmem:[#allocation2 + $0x298] sm:$0xff]
    %v839 = vld [vmem:[#allocation2 + $0x2a0] sm:$0xff]
    %v840 = vld [vmem:[#allocation2 + $0x2a8] sm:$0xff]
    %v841 = vld [vmem:[#allocation2 + $0x2b0] sm:$0xff]
    %v842 = vld [vmem:[#allocation2 + $0x2b8] sm:$0xff]
    %v843 = vld [vmem:[#allocation2 + $0x2c0] sm:$0xff]
    %v844 = vld [vmem:[#allocation2 + $0x2c8] sm:$0xff]
    %v845 = vld [vmem:[#allocation2 + $0x2d0] sm:$0xff]
    %v846 = vld [vmem:[#allocation2 + $0x2d8] sm:$0xff]
    %v847 = vld [vmem:[#allocation2 + $0x2e0] sm:$0xff]
    %v848 = vld [vmem:[#allocation2 + $0x2e8] sm:$0xff]
    %v849 = vld [vmem:[#allocation2 + $0x2f0] sm:$0xff]
    %v850 = vld [vmem:[#allocation2 + $0x2f8] sm:$0xff]
    %v851 = vld [vmem:[#allocation2 + $0x300] sm:$0xff]
    %v852 = vld [vmem:[#allocation2 + $0x308] sm:$0xff]
    %v853 = vld [vmem:[#allocation2 + $0x310] sm:$0xff]
    %v854 = vld [vmem:[#allocation2 + $0x318] sm:$0xff]
    %v855 = vld [vmem:[#allocation2 + $0x320] sm:$0xff]
    %v856 = vld [vmem:[#allocation2 + $0x328] sm:$0xff]
    %v857 = vld [vmem:[#allocation2 + $0x330] sm:$0xff]
    %v858 = vld [vmem:[#allocation2 + $0x338] sm:$0xff]
    %v859 = vld [vmem:[#allocation2 + $0x340] sm:$0xff]
    %v860 = vld [vmem:[#allocation2 + $0x348] sm:$0xff]
    %v861 = vld [vmem:[#allocation2 + $0x350] sm:$0xff]
    %v862 = vld [vmem:[#allocation2 + $0x358] sm:$0xff]
    %v863 = vld [vmem:[#allocation2 + $0x360] sm:$0xff]
    %v864 = vld [vmem:[#allocation2 + $0x368] sm:$0xff]
    %v865 = vld [vmem:[#allocation2 + $0x370] sm:$0xff]
    %v866 = vld [vmem:[#allocation2 + $0x378] sm:$0xff]
    %v867 = vld [vmem:[#allocation2 + $0x380] sm:$0xff]
    %v868 = vld [vmem:[#allocation2 + $0x388] sm:$0xff]
    %v869 = vld [vmem:[#allocation2 + $0x390] sm:$0xff]
    %v870 = vld [vmem:[#allocation2 + $0x398] sm:$0xff]
    %v871 = vld [vmem:[#allocation2 + $0x3a0] sm:$0xff]
    %v872 = vld [vmem:[#allocation2 + $0x3a8] sm:$0xff]
    %v873 = vld [vmem:[#allocation2 + $0x3b0] sm:$0xff]
    %v874 = vld [vmem:[#allocation2 + $0x3b8] sm:$0xff]
    %v875 = vld [vmem:[#allocation2 + $0x3c0] sm:$0xff]
    %v876 = vld [vmem:[#allocation2 + $0x3c8] sm:$0xff]
    %v877 = vld [vmem:[#allocation2 + $0x3d0] sm:$0xff]
    %v878 = vld [vmem:[#allocation2 + $0x3d8] sm:$0xff]
    %v879 = vld [vmem:[#allocation2 + $0x3e0] sm:$0xff]
    %v880 = vld [vmem:[#allocation2 + $0x3e8] sm:$0xff]
    %v881 = vld [vmem:[#allocation2 + $0x3f0] sm:$0xff]
    %v882 = vld [vmem:[#allocation2 + $0x3f8] sm:$0xff]
    %v883 = vld [vmem:[#allocation2 + $0x400] sm:$0xff]
    %v884 = vld [vmem:[#allocation2 + $0x408] sm:$0xff]
    %v885 = vld [vmem:[#allocation2 + $0x410] sm:$0xff]
    %v886 = vld [vmem:[#allocation2 + $0x418] sm:$0xff]
    %v887 = vld [vmem:[#allocation2 + $0x420] sm:$0xff]
    %v888 = vld [vmem:[#allocation2 + $0x428] sm:$0xff]
    %v889 = vld [vmem:[#allocation2 + $0x430] sm:$0xff]
    %v890 = vld [vmem:[#allocation2 + $0x438] sm:$0xff]
    %v891 = vld [vmem:[#allocation2 + $0x440] sm:$0xff]
    %v892 = vld [vmem:[#allocation2 + $0x448] sm:$0xff]
    %v893 = vld [vmem:[#allocation2 + $0x450] sm:$0xff]
    %v894 = vld [vmem:[#allocation2 + $0x458] sm:$0xff]
    %v895 = vld [vmem:[#allocation2 + $0x460] sm:$0xff]
    %v896 = vld [vmem:[#allocation2 + $0x468] sm:$0xff]
    %v897 = vld [vmem:[#allocation2 + $0x470] sm:$0xff]
    %v898 = vld [vmem:[#allocation2 + $0x478] sm:$0xff]
    %v899 = vld [vmem:[#allocation2 + $0x480] sm:$0xff]
    %v900 = vld [vmem:[#allocation2 + $0x488] sm:$0xff]
    %v901 = vld [vmem:[#allocation2 + $0x490] sm:$0xff]
    %v902 = vld [vmem:[#allocation2 + $0x498] sm:$0xff]
    %v903 = vld [vmem:[#allocation2 + $0x4a0] sm:$0xff]
    %v904 = vld [vmem:[#allocation2 + $0x4a8] sm:$0xff]
    %v905 = vld [vmem:[#allocation2 + $0x4b0] sm:$0xff]
    %v906 = vld [vmem:[#allocation2 + $0x4b8] sm:$0xff]
    %v907 = vld [vmem:[#allocation2 + $0x4c0] sm:$0xff]
    %v908 = vld [vmem:[#allocation2 + $0x4c8] sm:$0xff]
    %v909 = vld [vmem:[#allocation2 + $0x4d0] sm:$0xff]
    %v910 = vld [vmem:[#allocation2 + $0x4d8] sm:$0xff]
    %v911 = vld [vmem:[#allocation2 + $0x4e0] sm:$0xff]
    %v912 = vld [vmem:[#allocation2 + $0x4e8] sm:$0xff]
    %v913 = vld [vmem:[#allocation2 + $0x4f0] sm:$0xff]
    %v914 = vld [vmem:[#allocation2 + $0x4f8] sm:$0xff]
    %v915 = vld [vmem:[#allocation2 + $0x500] sm:$0xff]
    %v916 = vld [vmem:[#allocation2 + $0x508] sm:$0xff]
    %v917 = vld [vmem:[#allocation2 + $0x510] sm:$0xff]
    %v918 = vld [vmem:[#allocation2 + $0x518] sm:$0xff]
    %v919 = vld [vmem:[#allocation2 + $0x520] sm:$0xff]
    %v920 = vld [vmem:[#allocation2 + $0x528] sm:$0xff]
    %v921 = vld [vmem:[#allocation2 + $0x530] sm:$0xff]
    %v922 = vld [vmem:[#allocation2 + $0x538] sm:$0xff]
    %v923 = vld [vmem:[#allocation2 + $0x540] sm:$0xff]
    %v924 = vld [vmem:[#allocation2 + $0x548] sm:$0xff]
    %v925 = vld [vmem:[#allocation2 + $0x550] sm:$0xff]
    %v926 = vld [vmem:[#allocation2 + $0x558] sm:$0xff]
    %v927 = vld [vmem:[#allocation2 + $0x560] sm:$0xff]
    %v928 = vld [vmem:[#allocation2 + $0x568] sm:$0xff]
    %v929 = vld [vmem:[#allocation2 + $0x570] sm:$0xff]
    %v930 = vld [vmem:[#allocation2 + $0x578] sm:$0xff]
    %v931 = vld [vmem:[#allocation2 + $0x580] sm:$0xff]
    %v932 = vld [vmem:[#allocation2 + $0x588] sm:$0xff]
    %v933 = vld [vmem:[#allocation2 + $0x590] sm:$0xff]
    %v934 = vld [vmem:[#allocation2 + $0x598] sm:$0xff]
    %v935 = vld [vmem:[#allocation2 + $0x5a0] sm:$0xff]
    %v936 = vld [vmem:[#allocation2 + $0x5a8] sm:$0xff]
    %v937 = vld [vmem:[#allocation2 + $0x5b0] sm:$0xff]
    %v938 = vld [vmem:[#allocation2 + $0x5b8] sm:$0xff]
    %v939 = vld [vmem:[#allocation2 + $0x5c0] sm:$0xff]
    %v940 = vld [vmem:[#allocation2 + $0x5c8] sm:$0xff]
    %v941 = vld [vmem:[#allocation2 + $0x5d0] sm:$0xff]
    %v942 = vld [vmem:[#allocation2 + $0x5d8] sm:$0xff]
    %v943 = vld [vmem:[#allocation2 + $0x5e0] sm:$0xff]
    %v944 = vld [vmem:[#allocation2 + $0x5e8] sm:$0xff]
    %v945 = vld [vmem:[#allocation2 + $0x5f0] sm:$0xff]
    %v946 = vld [vmem:[#allocation2 + $0x5f8] sm:$0xff]
    %v947 = vld [vmem:[#allocation2 + $0x600] sm:$0xff]
    %v948 = vld [vmem:[#allocation2 + $0x608] sm:$0xff]
    %v949 = vld [vmem:[#allocation2 + $0x610] sm:$0xff]
    %v950 = vld [vmem:[#allocation2 + $0x618] sm:$0xff]
    %v951 = vld [vmem:[#allocation2 + $0x620] sm:$0xff]
    %v952 = vld [vmem:[#allocation2 + $0x628] sm:$0xff]
    %v953 = vld [vmem:[#allocation2 + $0x630] sm:$0xff]
    %v954 = vld [vmem:[#allocation2 + $0x638] sm:$0xff]
    %v955 = vld [vmem:[#allocation2 + $0x640] sm:$0xff]
    %v956 = vld [vmem:[#allocation2 + $0x648] sm:$0xff]
    %v957 = vld [vmem:[#allocation2 + $0x650] sm:$0xff]
    %v958 = vld [vmem:[#allocation2 + $0x658] sm:$0xff]
    %v959 = vld [vmem:[#allocation2 + $0x660] sm:$0xff]
    %v960 = vld [vmem:[#allocation2 + $0x668] sm:$0xff]
    %v961 = vld [vmem:[#allocation2 + $0x670] sm:$0xff]
    %v962 = vld [vmem:[#allocation2 + $0x678] sm:$0xff]
    %v963 = vld [vmem:[#allocation2 + $0x680] sm:$0xff]
    %v964 = vld [vmem:[#allocation2 + $0x688] sm:$0xff]
    %v965 = vld [vmem:[#allocation2 + $0x690] sm:$0xff]
    %v966 = vld [vmem:[#allocation2 + $0x698] sm:$0xff]
    %v967 = vld [vmem:[#allocation2 + $0x6a0] sm:$0xff]
    %v968 = vld [vmem:[#allocation2 + $0x6a8] sm:$0xff]
    %v969 = vld [vmem:[#allocation2 + $0x6b0] sm:$0xff]
    %v970 = vld [vmem:[#allocation2 + $0x6b8] sm:$0xff]
    %v971 = vld [vmem:[#allocation2 + $0x6c0] sm:$0xff]
    %v972 = vld [vmem:[#allocation2 + $0x6c8] sm:$0xff]
    %v973 = vld [vmem:[#allocation2 + $0x6d0] sm:$0xff]
    %v974 = vld [vmem:[#allocation2 + $0x6d8] sm:$0xff]
    %v975 = vld [vmem:[#allocation2 + $0x6e0] sm:$0xff]
    %v976 = vld [vmem:[#allocation2 + $0x6e8] sm:$0xff]
    %v977 = vld [vmem:[#allocation2 + $0x6f0] sm:$0xff]
    %v978 = vld [vmem:[#allocation2 + $0x6f8] sm:$0xff]
    %v979 = vld [vmem:[#allocation2 + $0x700] sm:$0xff]
    %v980 = vld [vmem:[#allocation2 + $0x708] sm:$0xff]
    %v981 = vld [vmem:[#allocation2 + $0x710] sm:$0xff]
    %v982 = vld [vmem:[#allocation2 + $0x718] sm:$0xff]
    %v983 = vld [vmem:[#allocation2 + $0x720] sm:$0xff]
    %v984 = vld [vmem:[#allocation2 + $0x728] sm:$0xff]
    %v985 = vld [vmem:[#allocation2 + $0x730] sm:$0xff]
    %v986 = vld [vmem:[#allocation2 + $0x738] sm:$0xff]
    %v987 = vld [vmem:[#allocation2 + $0x740] sm:$0xff]
    %v988 = vld [vmem:[#allocation2 + $0x748] sm:$0xff]
    %v989 = vld [vmem:[#allocation2 + $0x750] sm:$0xff]
    %v990 = vld [vmem:[#allocation2 + $0x758] sm:$0xff]
    %v991 = vld [vmem:[#allocation2 + $0x760] sm:$0xff]
    %v992 = vld [vmem:[#allocation2 + $0x768] sm:$0xff]
    %v993 = vld [vmem:[#allocation2 + $0x770] sm:$0xff]
    %v994 = vld [vmem:[#allocation2 + $0x778] sm:$0xff]
    %v995 = vld [vmem:[#allocation2 + $0x780] sm:$0xff]
    %v996 = vld [vmem:[#allocation2 + $0x788] sm:$0xff]
    %v997 = vld [vmem:[#allocation2 + $0x790] sm:$0xff]
    %v998 = vld [vmem:[#allocation2 + $0x798] sm:$0xff]
    %v999 = vld [vmem:[#allocation2 + $0x7a0] sm:$0xff]
    %v1000 = vld [vmem:[#allocation2 + $0x7a8] sm:$0xff]
    %v1001 = vld [vmem:[#allocation2 + $0x7b0] sm:$0xff]
    %v1002 = vld [vmem:[#allocation2 + $0x7b8] sm:$0xff]
    %v1003 = vld [vmem:[#allocation2 + $0x7c0] sm:$0xff]
    %v1004 = vld [vmem:[#allocation2 + $0x7c8] sm:$0xff]
    %v1005 = vld [vmem:[#allocation2 + $0x7d0] sm:$0xff]
    %v1006 = vld [vmem:[#allocation2 + $0x7d8] sm:$0xff]
    %v1007 = vld [vmem:[#allocation2 + $0x7e0] sm:$0xff]
    %v1008 = vld [vmem:[#allocation2 + $0x7e8] sm:$0xff]
    %v1009 = vld [vmem:[#allocation2 + $0x7f0] sm:$0xff]
    %v1010 = vld [vmem:[#allocation2 + $0x7f8] sm:$0xff]
    %v1011 = vld [vmem:[%s2] sm:$0xff]
    %v1013 = vlaneseq
    %v1014 = vshrl.u32 %v1013, 7
    %v1015 = vsub.s32 0, %v1014
    %v1016 = vrot.slane %v1011, %v1015
    %v1017 = vlaneseq
    %v1018 = vshrl.u32 %v1017, 7
    %v1019 = vsub.s32 1, %v1018
    %v1020 = vrot.slane %v1011, %v1019
    %v1021 = vlaneseq
    %v1022 = vshrl.u32 %v1021, 7
    %v1023 = vsub.s32 2, %v1022
    %v1024 = vrot.slane %v1011, %v1023
    %v1025 = vlaneseq
    %v1026 = vshrl.u32 %v1025, 7
    %v1027 = vsub.s32 3, %v1026
    %v1028 = vrot.slane %v1011, %v1027
    %v1029 = vlaneseq
    %v1030 = vshrl.u32 %v1029, 7
    %v1031 = vsub.s32 4, %v1030
    %v1032 = vrot.slane %v1011, %v1031
    %v1033 = vlaneseq
    %v1034 = vshrl.u32 %v1033, 7
    %v1035 = vsub.s32 5, %v1034
    %v1036 = vrot.slane %v1011, %v1035
    %v1037 = vlaneseq
    %v1038 = vshrl.u32 %v1037, 7
    %v1039 = vsub.s32 6, %v1038
    %v1040 = vrot.slane %v1011, %v1039
    %v1041 = vlaneseq
    %v1042 = vshrl.u32 %v1041, 7
    %v1043 = vsub.s32 7, %v1042
    %v1044 = vrot.slane %v1011, %v1043
    %v1117 = vunpack.c.l.b16 %v691
    %v1118 = vunpack.c.h.b16 %v691
    %v1119 = vunpack.c.l.b16 %v692
    %v1120 = vunpack.c.h.b16 %v692
    %v1121 = vunpack.c.l.b16 %v693
    %v1122 = vunpack.c.h.b16 %v693
    %v1123 = vunpack.c.l.b16 %v694
    %v1124 = vunpack.c.h.b16 %v694
    %v1125 = vunpack.c.l.b16 %v695
    %v1126 = vunpack.c.h.b16 %v695
    %v1127 = vunpack.c.l.b16 %v696
    %v1128 = vunpack.c.h.b16 %v696
    %v1129 = vunpack.c.l.b16 %v697
    %v1130 = vunpack.c.h.b16 %v697
    %v1131 = vunpack.c.l.b16 %v698
    %v1132 = vunpack.c.h.b16 %v698
    %v1133 = vunpack.c.l.b16 %v699
    %v1134 = vunpack.c.h.b16 %v699
    %v1135 = vunpack.c.l.b16 %v700
    %v1136 = vunpack.c.h.b16 %v700
    %v1137 = vunpack.c.l.b16 %v701
    %v1138 = vunpack.c.h.b16 %v701
    %v1139 = vunpack.c.l.b16 %v702
    %v1140 = vunpack.c.h.b16 %v702
    %v1141 = vunpack.c.l.b16 %v703
    %v1142 = vunpack.c.h.b16 %v703
    %v1143 = vunpack.c.l.b16 %v704
    %v1144 = vunpack.c.h.b16 %v704
    %v1145 = vunpack.c.l.b16 %v705
    %v1146 = vunpack.c.h.b16 %v705
    %v1147 = vunpack.c.l.b16 %v706
    %v1148 = vunpack.c.h.b16 %v706
    %v1149 = vunpack.c.l.b16 %v707
    %v1150 = vunpack.c.h.b16 %v707
    %v1151 = vunpack.c.l.b16 %v708
    %v1152 = vunpack.c.h.b16 %v708
    %v1153 = vunpack.c.l.b16 %v709
    %v1154 = vunpack.c.h.b16 %v709
    %v1155 = vunpack.c.l.b16 %v710
    %v1156 = vunpack.c.h.b16 %v710
    %v1157 = vunpack.c.l.b16 %v711
    %v1158 = vunpack.c.h.b16 %v711
    %v1159 = vunpack.c.l.b16 %v712
    %v1160 = vunpack.c.h.b16 %v712
    %v1161 = vunpack.c.l.b16 %v713
    %v1162 = vunpack.c.h.b16 %v713
    %v1163 = vunpack.c.l.b16 %v714
    %v1164 = vunpack.c.h.b16 %v714
    %v1165 = vunpack.c.l.b16 %v715
    %v1166 = vunpack.c.h.b16 %v715
    %v1167 = vunpack.c.l.b16 %v716
    %v1168 = vunpack.c.h.b16 %v716
    %v1169 = vunpack.c.l.b16 %v717
    %v1170 = vunpack.c.h.b16 %v717
    %v1171 = vunpack.c.l.b16 %v718
    %v1172 = vunpack.c.h.b16 %v718
    %v1173 = vunpack.c.l.b16 %v719
    %v1174 = vunpack.c.h.b16 %v719
    %v1175 = vunpack.c.l.b16 %v720
    %v1176 = vunpack.c.h.b16 %v720
    %v1177 = vunpack.c.l.b16 %v721
    %v1178 = vunpack.c.h.b16 %v721
    %v1179 = vunpack.c.l.b16 %v722
    %v1180 = vunpack.c.h.b16 %v722
    %v1181 = vunpack.c.l.b16 %v723
    %v1182 = vunpack.c.h.b16 %v723
    %v1183 = vunpack.c.l.b16 %v724
    %v1184 = vunpack.c.h.b16 %v724
    %v1185 = vunpack.c.l.b16 %v725
    %v1186 = vunpack.c.h.b16 %v725
    %v1187 = vunpack.c.l.b16 %v726
    %v1188 = vunpack.c.h.b16 %v726
    %v1189 = vunpack.c.l.b16 %v727
    %v1190 = vunpack.c.h.b16 %v727
    %v1191 = vunpack.c.l.b16 %v728
    %v1192 = vunpack.c.h.b16 %v728
    %v1193 = vunpack.c.l.b16 %v729
    %v1194 = vunpack.c.h.b16 %v729
    %v1195 = vunpack.c.l.b16 %v730
    %v1196 = vunpack.c.h.b16 %v730
    %v1197 = vunpack.c.l.b16 %v731
    %v1198 = vunpack.c.h.b16 %v731
    %v1199 = vunpack.c.l.b16 %v732
    %v1200 = vunpack.c.h.b16 %v732
    %v1201 = vunpack.c.l.b16 %v733
    %v1202 = vunpack.c.h.b16 %v733
    %v1203 = vunpack.c.l.b16 %v734
    %v1204 = vunpack.c.h.b16 %v734
    %v1205 = vunpack.c.l.b16 %v735
    %v1206 = vunpack.c.h.b16 %v735
    %v1207 = vunpack.c.l.b16 %v736
    %v1208 = vunpack.c.h.b16 %v736
    %v1209 = vunpack.c.l.b16 %v737
    %v1210 = vunpack.c.h.b16 %v737
    %v1211 = vunpack.c.l.b16 %v738
    %v1212 = vunpack.c.h.b16 %v738
    %v1213 = vunpack.c.l.b16 %v739
    %v1214 = vunpack.c.h.b16 %v739
    %v1215 = vunpack.c.l.b16 %v740
    %v1216 = vunpack.c.h.b16 %v740
    %v1217 = vunpack.c.l.b16 %v741
    %v1218 = vunpack.c.h.b16 %v741
    %v1219 = vunpack.c.l.b16 %v742
    %v1220 = vunpack.c.h.b16 %v742
    %v1221 = vunpack.c.l.b16 %v743
    %v1222 = vunpack.c.h.b16 %v743
    %v1223 = vunpack.c.l.b16 %v744
    %v1224 = vunpack.c.h.b16 %v744
    %v1225 = vunpack.c.l.b16 %v745
    %v1226 = vunpack.c.h.b16 %v745
    %v1227 = vunpack.c.l.b16 %v746
    %v1228 = vunpack.c.h.b16 %v746
    %v1229 = vunpack.c.l.b16 %v747
    %v1230 = vunpack.c.h.b16 %v747
    %v1231 = vunpack.c.l.b16 %v748
    %v1232 = vunpack.c.h.b16 %v748
    %v1233 = vunpack.c.l.b16 %v749
    %v1234 = vunpack.c.h.b16 %v749
    %v1235 = vunpack.c.l.b16 %v750
    %v1236 = vunpack.c.h.b16 %v750
    %v1237 = vunpack.c.l.b16 %v751
    %v1238 = vunpack.c.h.b16 %v751
    %v1239 = vunpack.c.l.b16 %v752
    %v1240 = vunpack.c.h.b16 %v752
    %v1241 = vunpack.c.l.b16 %v753
    %v1242 = vunpack.c.h.b16 %v753
    %v1243 = vunpack.c.l.b16 %v754
    %v1244 = vunpack.c.h.b16 %v754
    %v1245 = vlaneseq
    %v1246 = vand.u32 %v1245, 127
    %v1247 = vlaneseq
    %v1248 = vshrl.u32 %v1247, 7
    %v1249 = vsub.s32 %v1246, %v1248
    %v1250 = vrot.slane %v1117, %v1249
    %v1251 = vadd.s32 %v1246, 4294967288
    %v1252 = vlaneseq
    %v1253 = vshrl.u32 %v1252, 7
    %v1254 = vsub.s32 %v1251, %v1253
    %v1255 = vrot.slane %v1118, %v1254
    %vm1256 = vcmask 130112
    %v1257 = vsel %vm1256, %v1255, %v1250
    %v1258 = vadd.s32 %v1246, 4294967280
    %v1259 = vlaneseq
    %v1260 = vshrl.u32 %v1259, 7
    %v1261 = vsub.s32 %v1258, %v1260
    %v1262 = vrot.slane %v1119, %v1261
    %vm1263 = vcmask 195712
    %v1264 = vsel %vm1263, %v1262, %v1257
    %v1265 = vadd.s32 %v1246, 4294967272
    %v1266 = vlaneseq
    %v1267 = vshrl.u32 %v1266, 7
    %v1268 = vsub.s32 %v1265, %v1267
    %v1269 = vrot.slane %v1120, %v1268
    %vm1270 = vcmask 261312
    %v1271 = vsel %vm1270, %v1269, %v1264
    %v1272 = vadd.s32 %v1246, 4294967264
    %v1273 = vlaneseq
    %v1274 = vshrl.u32 %v1273, 7
    %v1275 = vsub.s32 %v1272, %v1274
    %v1276 = vrot.slane %v1121, %v1275
    %vm1277 = vcmask 326912
    %v1278 = vsel %vm1277, %v1276, %v1271
    %v1279 = vadd.s32 %v1246, 4294967256
    %v1280 = vlaneseq
    %v1281 = vshrl.u32 %v1280, 7
    %v1282 = vsub.s32 %v1279, %v1281
    %v1283 = vrot.slane %v1122, %v1282
    %vm1284 = vcmask 392512
    %v1285 = vsel %vm1284, %v1283, %v1278
    %v1286 = vadd.s32 %v1246, 4294967248
    %v1287 = vlaneseq
    %v1288 = vshrl.u32 %v1287, 7
    %v1289 = vsub.s32 %v1286, %v1288
    %v1290 = vrot.slane %v1123, %v1289
    %vm1291 = vcmask 458112
    %v1292 = vsel %vm1291, %v1290, %v1285
    %v1293 = vadd.s32 %v1246, 4294967240
    %v1294 = vlaneseq
    %v1295 = vshrl.u32 %v1294, 7
    %v1296 = vsub.s32 %v1293, %v1295
    %v1297 = vrot.slane %v1124, %v1296
    %vm1298 = vcmask 523712
    %v1299 = vsel %vm1298, %v1297, %v1292
    %v1300 = vadd.s32 %v1246, 4294967232
    %v1301 = vlaneseq
    %v1302 = vshrl.u32 %v1301, 7
    %v1303 = vsub.s32 %v1300, %v1302
    %v1304 = vrot.slane %v1125, %v1303
    %vm1305 = vcmask 589312
    %v1306 = vsel %vm1305, %v1304, %v1299
    %v1307 = vadd.s32 %v1246, 4294967224
    %v1308 = vlaneseq
    %v1309 = vshrl.u32 %v1308, 7
    %v1310 = vsub.s32 %v1307, %v1309
    %v1311 = vrot.slane %v1126, %v1310
    %vm1312 = vcmask 654912
    %v1313 = vsel %vm1312, %v1311, %v1306
    %v1314 = vadd.s32 %v1246, 4294967216
    %v1315 = vlaneseq
    %v1316 = vshrl.u32 %v1315, 7
    %v1317 = vsub.s32 %v1314, %v1316
    %v1318 = vrot.slane %v1127, %v1317
    %vm1319 = vcmask 720512
    %v1320 = vsel %vm1319, %v1318, %v1313
    %v1321 = vadd.s32 %v1246, 4294967208
    %v1322 = vlaneseq
    %v1323 = vshrl.u32 %v1322, 7
    %v1324 = vsub.s32 %v1321, %v1323
    %v1325 = vrot.slane %v1128, %v1324
    %vm1326 = vcmask 786112
    %v1327 = vsel %vm1326, %v1325, %v1320
    %v1328 = vadd.s32 %v1246, 4294967200
    %v1329 = vlaneseq
    %v1330 = vshrl.u32 %v1329, 7
    %v1331 = vsub.s32 %v1328, %v1330
    %v1332 = vrot.slane %v1129, %v1331
    %vm1333 = vcmask 851712
    %v1334 = vsel %vm1333, %v1332, %v1327
    %v1335 = vadd.s32 %v1246, 4294967192
    %v1336 = vlaneseq
    %v1337 = vshrl.u32 %v1336, 7
    %v1338 = vsub.s32 %v1335, %v1337
    %v1339 = vrot.slane %v1130, %v1338
    %vm1340 = vcmask 917312
    %v1341 = vsel %vm1340, %v1339, %v1334
    %v1342 = vadd.s32 %v1246, 4294967184
    %v1343 = vlaneseq
    %v1344 = vshrl.u32 %v1343, 7
    %v1345 = vsub.s32 %v1342, %v1344
    %v1346 = vrot.slane %v1131, %v1345
    %vm1347 = vcmask 982912
    %v1348 = vsel %vm1347, %v1346, %v1341
    %v1349 = vadd.s32 %v1246, 4294967176
    %v1350 = vlaneseq
    %v1351 = vshrl.u32 %v1350, 7
    %v1352 = vsub.s32 %v1349, %v1351
    %v1353 = vrot.slane %v1132, %v1352
    %vm1354 = vcmask 1048512
    %v1355 = vsel %vm1354, %v1353, %v1348
    %v1356 = vlaneseq
    %v1357 = vshrl.u32 %v1356, 7
    %v1358 = vsub.s32 %v1246, %v1357
    %v1359 = vrot.slane %v1133, %v1358
    %v1360 = vlaneseq
    %v1361 = vshrl.u32 %v1360, 7
    %v1362 = vsub.s32 %v1251, %v1361
    %v1363 = vrot.slane %v1134, %v1362
    %v1364 = vsel %vm1256, %v1363, %v1359
    %v1365 = vlaneseq
    %v1366 = vshrl.u32 %v1365, 7
    %v1367 = vsub.s32 %v1258, %v1366
    %v1368 = vrot.slane %v1135, %v1367
    %v1369 = vsel %vm1263, %v1368, %v1364
    %v1370 = vlaneseq
    %v1371 = vshrl.u32 %v1370, 7
    %v1372 = vsub.s32 %v1265, %v1371
    %v1373 = vrot.slane %v1136, %v1372
    %v1374 = vsel %vm1270, %v1373, %v1369
    %v1375 = vlaneseq
    %v1376 = vshrl.u32 %v1375, 7
    %v1377 = vsub.s32 %v1272, %v1376
    %v1378 = vrot.slane %v1137, %v1377
    %v1379 = vsel %vm1277, %v1378, %v1374
    %v1380 = vlaneseq
    %v1381 = vshrl.u32 %v1380, 7
    %v1382 = vsub.s32 %v1279, %v1381
    %v1383 = vrot.slane %v1138, %v1382
    %v1384 = vsel %vm1284, %v1383, %v1379
    %v1385 = vlaneseq
    %v1386 = vshrl.u32 %v1385, 7
    %v1387 = vsub.s32 %v1286, %v1386
    %v1388 = vrot.slane %v1139, %v1387
    %v1389 = vsel %vm1291, %v1388, %v1384
    %v1390 = vlaneseq
    %v1391 = vshrl.u32 %v1390, 7
    %v1392 = vsub.s32 %v1293, %v1391
    %v1393 = vrot.slane %v1140, %v1392
    %v1394 = vsel %vm1298, %v1393, %v1389
    %v1395 = vlaneseq
    %v1396 = vshrl.u32 %v1395, 7
    %v1397 = vsub.s32 %v1300, %v1396
    %v1398 = vrot.slane %v1141, %v1397
    %v1399 = vsel %vm1305, %v1398, %v1394
    %v1400 = vlaneseq
    %v1401 = vshrl.u32 %v1400, 7
    %v1402 = vsub.s32 %v1307, %v1401
    %v1403 = vrot.slane %v1142, %v1402
    %v1404 = vsel %vm1312, %v1403, %v1399
    %v1405 = vlaneseq
    %v1406 = vshrl.u32 %v1405, 7
    %v1407 = vsub.s32 %v1314, %v1406
    %v1408 = vrot.slane %v1143, %v1407
    %v1409 = vsel %vm1319, %v1408, %v1404
    %v1410 = vlaneseq
    %v1411 = vshrl.u32 %v1410, 7
    %v1412 = vsub.s32 %v1321, %v1411
    %v1413 = vrot.slane %v1144, %v1412
    %v1414 = vsel %vm1326, %v1413, %v1409
    %v1415 = vlaneseq
    %v1416 = vshrl.u32 %v1415, 7
    %v1417 = vsub.s32 %v1328, %v1416
    %v1418 = vrot.slane %v1145, %v1417
    %v1419 = vsel %vm1333, %v1418, %v1414
    %v1420 = vlaneseq
    %v1421 = vshrl.u32 %v1420, 7
    %v1422 = vsub.s32 %v1335, %v1421
    %v1423 = vrot.slane %v1146, %v1422
    %v1424 = vsel %vm1340, %v1423, %v1419
    %v1425 = vlaneseq
    %v1426 = vshrl.u32 %v1425, 7
    %v1427 = vsub.s32 %v1342, %v1426
    %v1428 = vrot.slane %v1147, %v1427
    %v1429 = vsel %vm1347, %v1428, %v1424
    %v1430 = vlaneseq
    %v1431 = vshrl.u32 %v1430, 7
    %v1432 = vsub.s32 %v1349, %v1431
    %v1433 = vrot.slane %v1148, %v1432
    %v1434 = vsel %vm1354, %v1433, %v1429
    %v1435 = vlaneseq
    %v1436 = vshrl.u32 %v1435, 7
    %v1437 = vsub.s32 %v1246, %v1436
    %v1438 = vrot.slane %v1149, %v1437
    %v1439 = vlaneseq
    %v1440 = vshrl.u32 %v1439, 7
    %v1441 = vsub.s32 %v1251, %v1440
    %v1442 = vrot.slane %v1150, %v1441
    %v1443 = vsel %vm1256, %v1442, %v1438
    %v1444 = vlaneseq
    %v1445 = vshrl.u32 %v1444, 7
    %v1446 = vsub.s32 %v1258, %v1445
    %v1447 = vrot.slane %v1151, %v1446
    %v1448 = vsel %vm1263, %v1447, %v1443
    %v1449 = vlaneseq
    %v1450 = vshrl.u32 %v1449, 7
    %v1451 = vsub.s32 %v1265, %v1450
    %v1452 = vrot.slane %v1152, %v1451
    %v1453 = vsel %vm1270, %v1452, %v1448
    %v1454 = vlaneseq
    %v1455 = vshrl.u32 %v1454, 7
    %v1456 = vsub.s32 %v1272, %v1455
    %v1457 = vrot.slane %v1153, %v1456
    %v1458 = vsel %vm1277, %v1457, %v1453
    %v1459 = vlaneseq
    %v1460 = vshrl.u32 %v1459, 7
    %v1461 = vsub.s32 %v1279, %v1460
    %v1462 = vrot.slane %v1154, %v1461
    %v1463 = vsel %vm1284, %v1462, %v1458
    %v1464 = vlaneseq
    %v1465 = vshrl.u32 %v1464, 7
    %v1466 = vsub.s32 %v1286, %v1465
    %v1467 = vrot.slane %v1155, %v1466
    %v1468 = vsel %vm1291, %v1467, %v1463
    %v1469 = vlaneseq
    %v1470 = vshrl.u32 %v1469, 7
    %v1471 = vsub.s32 %v1293, %v1470
    %v1472 = vrot.slane %v1156, %v1471
    %v1473 = vsel %vm1298, %v1472, %v1468
    %v1474 = vlaneseq
    %v1475 = vshrl.u32 %v1474, 7
    %v1476 = vsub.s32 %v1300, %v1475
    %v1477 = vrot.slane %v1157, %v1476
    %v1478 = vsel %vm1305, %v1477, %v1473
    %v1479 = vlaneseq
    %v1480 = vshrl.u32 %v1479, 7
    %v1481 = vsub.s32 %v1307, %v1480
    %v1482 = vrot.slane %v1158, %v1481
    %v1483 = vsel %vm1312, %v1482, %v1478
    %v1484 = vlaneseq
    %v1485 = vshrl.u32 %v1484, 7
    %v1486 = vsub.s32 %v1314, %v1485
    %v1487 = vrot.slane %v1159, %v1486
    %v1488 = vsel %vm1319, %v1487, %v1483
    %v1489 = vlaneseq
    %v1490 = vshrl.u32 %v1489, 7
    %v1491 = vsub.s32 %v1321, %v1490
    %v1492 = vrot.slane %v1160, %v1491
    %v1493 = vsel %vm1326, %v1492, %v1488
    %v1494 = vlaneseq
    %v1495 = vshrl.u32 %v1494, 7
    %v1496 = vsub.s32 %v1328, %v1495
    %v1497 = vrot.slane %v1161, %v1496
    %v1498 = vsel %vm1333, %v1497, %v1493
    %v1499 = vlaneseq
    %v1500 = vshrl.u32 %v1499, 7
    %v1501 = vsub.s32 %v1335, %v1500
    %v1502 = vrot.slane %v1162, %v1501
    %v1503 = vsel %vm1340, %v1502, %v1498
    %v1504 = vlaneseq
    %v1505 = vshrl.u32 %v1504, 7
    %v1506 = vsub.s32 %v1342, %v1505
    %v1507 = vrot.slane %v1163, %v1506
    %v1508 = vsel %vm1347, %v1507, %v1503
    %v1509 = vlaneseq
    %v1510 = vshrl.u32 %v1509, 7
    %v1511 = vsub.s32 %v1349, %v1510
    %v1512 = vrot.slane %v1164, %v1511
    %v1513 = vsel %vm1354, %v1512, %v1508
    %v1514 = vlaneseq
    %v1515 = vshrl.u32 %v1514, 7
    %v1516 = vsub.s32 %v1246, %v1515
    %v1517 = vrot.slane %v1165, %v1516
    %v1518 = vlaneseq
    %v1519 = vshrl.u32 %v1518, 7
    %v1520 = vsub.s32 %v1251, %v1519
    %v1521 = vrot.slane %v1166, %v1520
    %v1522 = vsel %vm1256, %v1521, %v1517
    %v1523 = vlaneseq
    %v1524 = vshrl.u32 %v1523, 7
    %v1525 = vsub.s32 %v1258, %v1524
    %v1526 = vrot.slane %v1167, %v1525
    %v1527 = vsel %vm1263, %v1526, %v1522
    %v1528 = vlaneseq
    %v1529 = vshrl.u32 %v1528, 7
    %v1530 = vsub.s32 %v1265, %v1529
    %v1531 = vrot.slane %v1168, %v1530
    %v1532 = vsel %vm1270, %v1531, %v1527
    %v1533 = vlaneseq
    %v1534 = vshrl.u32 %v1533, 7
    %v1535 = vsub.s32 %v1272, %v1534
    %v1536 = vrot.slane %v1169, %v1535
    %v1537 = vsel %vm1277, %v1536, %v1532
    %v1538 = vlaneseq
    %v1539 = vshrl.u32 %v1538, 7
    %v1540 = vsub.s32 %v1279, %v1539
    %v1541 = vrot.slane %v1170, %v1540
    %v1542 = vsel %vm1284, %v1541, %v1537
    %v1543 = vlaneseq
    %v1544 = vshrl.u32 %v1543, 7
    %v1545 = vsub.s32 %v1286, %v1544
    %v1546 = vrot.slane %v1171, %v1545
    %v1547 = vsel %vm1291, %v1546, %v1542
    %v1548 = vlaneseq
    %v1549 = vshrl.u32 %v1548, 7
    %v1550 = vsub.s32 %v1293, %v1549
    %v1551 = vrot.slane %v1172, %v1550
    %v1552 = vsel %vm1298, %v1551, %v1547
    %v1553 = vlaneseq
    %v1554 = vshrl.u32 %v1553, 7
    %v1555 = vsub.s32 %v1300, %v1554
    %v1556 = vrot.slane %v1173, %v1555
    %v1557 = vsel %vm1305, %v1556, %v1552
    %v1558 = vlaneseq
    %v1559 = vshrl.u32 %v1558, 7
    %v1560 = vsub.s32 %v1307, %v1559
    %v1561 = vrot.slane %v1174, %v1560
    %v1562 = vsel %vm1312, %v1561, %v1557
    %v1563 = vlaneseq
    %v1564 = vshrl.u32 %v1563, 7
    %v1565 = vsub.s32 %v1314, %v1564
    %v1566 = vrot.slane %v1175, %v1565
    %v1567 = vsel %vm1319, %v1566, %v1562
    %v1568 = vlaneseq
    %v1569 = vshrl.u32 %v1568, 7
    %v1570 = vsub.s32 %v1321, %v1569
    %v1571 = vrot.slane %v1176, %v1570
    %v1572 = vsel %vm1326, %v1571, %v1567
    %v1573 = vlaneseq
    %v1574 = vshrl.u32 %v1573, 7
    %v1575 = vsub.s32 %v1328, %v1574
    %v1576 = vrot.slane %v1177, %v1575
    %v1577 = vsel %vm1333, %v1576, %v1572
    %v1578 = vlaneseq
    %v1579 = vshrl.u32 %v1578, 7
    %v1580 = vsub.s32 %v1335, %v1579
    %v1581 = vrot.slane %v1178, %v1580
    %v1582 = vsel %vm1340, %v1581, %v1577
    %v1583 = vlaneseq
    %v1584 = vshrl.u32 %v1583, 7
    %v1585 = vsub.s32 %v1342, %v1584
    %v1586 = vrot.slane %v1179, %v1585
    %v1587 = vsel %vm1347, %v1586, %v1582
    %v1588 = vlaneseq
    %v1589 = vshrl.u32 %v1588, 7
    %v1590 = vsub.s32 %v1349, %v1589
    %v1591 = vrot.slane %v1180, %v1590
    %v1592 = vsel %vm1354, %v1591, %v1587
    %v1593 = vlaneseq
    %v1594 = vshrl.u32 %v1593, 7
    %v1595 = vsub.s32 %v1246, %v1594
    %v1596 = vrot.slane %v1181, %v1595
    %v1597 = vlaneseq
    %v1598 = vshrl.u32 %v1597, 7
    %v1599 = vsub.s32 %v1251, %v1598
    %v1600 = vrot.slane %v1182, %v1599
    %v1601 = vsel %vm1256, %v1600, %v1596
    %v1602 = vlaneseq
    %v1603 = vshrl.u32 %v1602, 7
    %v1604 = vsub.s32 %v1258, %v1603
    %v1605 = vrot.slane %v1183, %v1604
    %v1606 = vsel %vm1263, %v1605, %v1601
    %v1607 = vlaneseq
    %v1608 = vshrl.u32 %v1607, 7
    %v1609 = vsub.s32 %v1265, %v1608
    %v1610 = vrot.slane %v1184, %v1609
    %v1611 = vsel %vm1270, %v1610, %v1606
    %v1612 = vlaneseq
    %v1613 = vshrl.u32 %v1612, 7
    %v1614 = vsub.s32 %v1272, %v1613
    %v1615 = vrot.slane %v1185, %v1614
    %v1616 = vsel %vm1277, %v1615, %v1611
    %v1617 = vlaneseq
    %v1618 = vshrl.u32 %v1617, 7
    %v1619 = vsub.s32 %v1279, %v1618
    %v1620 = vrot.slane %v1186, %v1619
    %v1621 = vsel %vm1284, %v1620, %v1616
    %v1622 = vlaneseq
    %v1623 = vshrl.u32 %v1622, 7
    %v1624 = vsub.s32 %v1286, %v1623
    %v1625 = vrot.slane %v1187, %v1624
    %v1626 = vsel %vm1291, %v1625, %v1621
    %v1627 = vlaneseq
    %v1628 = vshrl.u32 %v1627, 7
    %v1629 = vsub.s32 %v1293, %v1628
    %v1630 = vrot.slane %v1188, %v1629
    %v1631 = vsel %vm1298, %v1630, %v1626
    %v1632 = vlaneseq
    %v1633 = vshrl.u32 %v1632, 7
    %v1634 = vsub.s32 %v1300, %v1633
    %v1635 = vrot.slane %v1189, %v1634
    %v1636 = vsel %vm1305, %v1635, %v1631
    %v1637 = vlaneseq
    %v1638 = vshrl.u32 %v1637, 7
    %v1639 = vsub.s32 %v1307, %v1638
    %v1640 = vrot.slane %v1190, %v1639
    %v1641 = vsel %vm1312, %v1640, %v1636
    %v1642 = vlaneseq
    %v1643 = vshrl.u32 %v1642, 7
    %v1644 = vsub.s32 %v1314, %v1643
    %v1645 = vrot.slane %v1191, %v1644
    %v1646 = vsel %vm1319, %v1645, %v1641
    %v1647 = vlaneseq
    %v1648 = vshrl.u32 %v1647, 7
    %v1649 = vsub.s32 %v1321, %v1648
    %v1650 = vrot.slane %v1192, %v1649
    %v1651 = vsel %vm1326, %v1650, %v1646
    %v1652 = vlaneseq
    %v1653 = vshrl.u32 %v1652, 7
    %v1654 = vsub.s32 %v1328, %v1653
    %v1655 = vrot.slane %v1193, %v1654
    %v1656 = vsel %vm1333, %v1655, %v1651
    %v1657 = vlaneseq
    %v1658 = vshrl.u32 %v1657, 7
    %v1659 = vsub.s32 %v1335, %v1658
    %v1660 = vrot.slane %v1194, %v1659
    %v1661 = vsel %vm1340, %v1660, %v1656
    %v1662 = vlaneseq
    %v1663 = vshrl.u32 %v1662, 7
    %v1664 = vsub.s32 %v1342, %v1663
    %v1665 = vrot.slane %v1195, %v1664
    %v1666 = vsel %vm1347, %v1665, %v1661
    %v1667 = vlaneseq
    %v1668 = vshrl.u32 %v1667, 7
    %v1669 = vsub.s32 %v1349, %v1668
    %v1670 = vrot.slane %v1196, %v1669
    %v1671 = vsel %vm1354, %v1670, %v1666
    %v1672 = vlaneseq
    %v1673 = vshrl.u32 %v1672, 7
    %v1674 = vsub.s32 %v1246, %v1673
    %v1675 = vrot.slane %v1197, %v1674
    %v1676 = vlaneseq
    %v1677 = vshrl.u32 %v1676, 7
    %v1678 = vsub.s32 %v1251, %v1677
    %v1679 = vrot.slane %v1198, %v1678
    %v1680 = vsel %vm1256, %v1679, %v1675
    %v1681 = vlaneseq
    %v1682 = vshrl.u32 %v1681, 7
    %v1683 = vsub.s32 %v1258, %v1682
    %v1684 = vrot.slane %v1199, %v1683
    %v1685 = vsel %vm1263, %v1684, %v1680
    %v1686 = vlaneseq
    %v1687 = vshrl.u32 %v1686, 7
    %v1688 = vsub.s32 %v1265, %v1687
    %v1689 = vrot.slane %v1200, %v1688
    %v1690 = vsel %vm1270, %v1689, %v1685
    %v1691 = vlaneseq
    %v1692 = vshrl.u32 %v1691, 7
    %v1693 = vsub.s32 %v1272, %v1692
    %v1694 = vrot.slane %v1201, %v1693
    %v1695 = vsel %vm1277, %v1694, %v1690
    %v1696 = vlaneseq
    %v1697 = vshrl.u32 %v1696, 7
    %v1698 = vsub.s32 %v1279, %v1697
    %v1699 = vrot.slane %v1202, %v1698
    %v1700 = vsel %vm1284, %v1699, %v1695
    %v1701 = vlaneseq
    %v1702 = vshrl.u32 %v1701, 7
    %v1703 = vsub.s32 %v1286, %v1702
    %v1704 = vrot.slane %v1203, %v1703
    %v1705 = vsel %vm1291, %v1704, %v1700
    %v1706 = vlaneseq
    %v1707 = vshrl.u32 %v1706, 7
    %v1708 = vsub.s32 %v1293, %v1707
    %v1709 = vrot.slane %v1204, %v1708
    %v1710 = vsel %vm1298, %v1709, %v1705
    %v1711 = vlaneseq
    %v1712 = vshrl.u32 %v1711, 7
    %v1713 = vsub.s32 %v1300, %v1712
    %v1714 = vrot.slane %v1205, %v1713
    %v1715 = vsel %vm1305, %v1714, %v1710
    %v1716 = vlaneseq
    %v1717 = vshrl.u32 %v1716, 7
    %v1718 = vsub.s32 %v1307, %v1717
    %v1719 = vrot.slane %v1206, %v1718
    %v1720 = vsel %vm1312, %v1719, %v1715
    %v1721 = vlaneseq
    %v1722 = vshrl.u32 %v1721, 7
    %v1723 = vsub.s32 %v1314, %v1722
    %v1724 = vrot.slane %v1207, %v1723
    %v1725 = vsel %vm1319, %v1724, %v1720
    %v1726 = vlaneseq
    %v1727 = vshrl.u32 %v1726, 7
    %v1728 = vsub.s32 %v1321, %v1727
    %v1729 = vrot.slane %v1208, %v1728
    %v1730 = vsel %vm1326, %v1729, %v1725
    %v1731 = vlaneseq
    %v1732 = vshrl.u32 %v1731, 7
    %v1733 = vsub.s32 %v1328, %v1732
    %v1734 = vrot.slane %v1209, %v1733
    %v1735 = vsel %vm1333, %v1734, %v1730
    %v1736 = vlaneseq
    %v1737 = vshrl.u32 %v1736, 7
    %v1738 = vsub.s32 %v1335, %v1737
    %v1739 = vrot.slane %v1210, %v1738
    %v1740 = vsel %vm1340, %v1739, %v1735
    %v1741 = vlaneseq
    %v1742 = vshrl.u32 %v1741, 7
    %v1743 = vsub.s32 %v1342, %v1742
    %v1744 = vrot.slane %v1211, %v1743
    %v1745 = vsel %vm1347, %v1744, %v1740
    %v1746 = vlaneseq
    %v1747 = vshrl.u32 %v1746, 7
    %v1748 = vsub.s32 %v1349, %v1747
    %v1749 = vrot.slane %v1212, %v1748
    %v1750 = vsel %vm1354, %v1749, %v1745
    %v1751 = vlaneseq
    %v1752 = vshrl.u32 %v1751, 7
    %v1753 = vsub.s32 %v1246, %v1752
    %v1754 = vrot.slane %v1213, %v1753
    %v1755 = vlaneseq
    %v1756 = vshrl.u32 %v1755, 7
    %v1757 = vsub.s32 %v1251, %v1756
    %v1758 = vrot.slane %v1214, %v1757
    %v1759 = vsel %vm1256, %v1758, %v1754
    %v1760 = vlaneseq
    %v1761 = vshrl.u32 %v1760, 7
    %v1762 = vsub.s32 %v1258, %v1761
    %v1763 = vrot.slane %v1215, %v1762
    %v1764 = vsel %vm1263, %v1763, %v1759
    %v1765 = vlaneseq
    %v1766 = vshrl.u32 %v1765, 7
    %v1767 = vsub.s32 %v1265, %v1766
    %v1768 = vrot.slane %v1216, %v1767
    %v1769 = vsel %vm1270, %v1768, %v1764
    %v1770 = vlaneseq
    %v1771 = vshrl.u32 %v1770, 7
    %v1772 = vsub.s32 %v1272, %v1771
    %v1773 = vrot.slane %v1217, %v1772
    %v1774 = vsel %vm1277, %v1773, %v1769
    %v1775 = vlaneseq
    %v1776 = vshrl.u32 %v1775, 7
    %v1777 = vsub.s32 %v1279, %v1776
    %v1778 = vrot.slane %v1218, %v1777
    %v1779 = vsel %vm1284, %v1778, %v1774
    %v1780 = vlaneseq
    %v1781 = vshrl.u32 %v1780, 7
    %v1782 = vsub.s32 %v1286, %v1781
    %v1783 = vrot.slane %v1219, %v1782
    %v1784 = vsel %vm1291, %v1783, %v1779
    %v1785 = vlaneseq
    %v1786 = vshrl.u32 %v1785, 7
    %v1787 = vsub.s32 %v1293, %v1786
    %v1788 = vrot.slane %v1220, %v1787
    %v1789 = vsel %vm1298, %v1788, %v1784
    %v1790 = vlaneseq
    %v1791 = vshrl.u32 %v1790, 7
    %v1792 = vsub.s32 %v1300, %v1791
    %v1793 = vrot.slane %v1221, %v1792
    %v1794 = vsel %vm1305, %v1793, %v1789
    %v1795 = vlaneseq
    %v1796 = vshrl.u32 %v1795, 7
    %v1797 = vsub.s32 %v1307, %v1796
    %v1798 = vrot.slane %v1222, %v1797
    %v1799 = vsel %vm1312, %v1798, %v1794
    %v1800 = vlaneseq
    %v1801 = vshrl.u32 %v1800, 7
    %v1802 = vsub.s32 %v1314, %v1801
    %v1803 = vrot.slane %v1223, %v1802
    %v1804 = vsel %vm1319, %v1803, %v1799
    %v1805 = vlaneseq
    %v1806 = vshrl.u32 %v1805, 7
    %v1807 = vsub.s32 %v1321, %v1806
    %v1808 = vrot.slane %v1224, %v1807
    %v1809 = vsel %vm1326, %v1808, %v1804
    %v1810 = vlaneseq
    %v1811 = vshrl.u32 %v1810, 7
    %v1812 = vsub.s32 %v1328, %v1811
    %v1813 = vrot.slane %v1225, %v1812
    %v1814 = vsel %vm1333, %v1813, %v1809
    %v1815 = vlaneseq
    %v1816 = vshrl.u32 %v1815, 7
    %v1817 = vsub.s32 %v1335, %v1816
    %v1818 = vrot.slane %v1226, %v1817
    %v1819 = vsel %vm1340, %v1818, %v1814
    %v1820 = vlaneseq
    %v1821 = vshrl.u32 %v1820, 7
    %v1822 = vsub.s32 %v1342, %v1821
    %v1823 = vrot.slane %v1227, %v1822
    %v1824 = vsel %vm1347, %v1823, %v1819
    %v1825 = vlaneseq
    %v1826 = vshrl.u32 %v1825, 7
    %v1827 = vsub.s32 %v1349, %v1826
    %v1828 = vrot.slane %v1228, %v1827
    %v1829 = vsel %vm1354, %v1828, %v1824
    %v1830 = vlaneseq
    %v1831 = vshrl.u32 %v1830, 7
    %v1832 = vsub.s32 %v1246, %v1831
    %v1833 = vrot.slane %v1229, %v1832
    %v1834 = vlaneseq
    %v1835 = vshrl.u32 %v1834, 7
    %v1836 = vsub.s32 %v1251, %v1835
    %v1837 = vrot.slane %v1230, %v1836
    %v1838 = vsel %vm1256, %v1837, %v1833
    %v1839 = vlaneseq
    %v1840 = vshrl.u32 %v1839, 7
    %v1841 = vsub.s32 %v1258, %v1840
    %v1842 = vrot.slane %v1231, %v1841
    %v1843 = vsel %vm1263, %v1842, %v1838
    %v1844 = vlaneseq
    %v1845 = vshrl.u32 %v1844, 7
    %v1846 = vsub.s32 %v1265, %v1845
    %v1847 = vrot.slane %v1232, %v1846
    %v1848 = vsel %vm1270, %v1847, %v1843
    %v1849 = vlaneseq
    %v1850 = vshrl.u32 %v1849, 7
    %v1851 = vsub.s32 %v1272, %v1850
    %v1852 = vrot.slane %v1233, %v1851
    %v1853 = vsel %vm1277, %v1852, %v1848
    %v1854 = vlaneseq
    %v1855 = vshrl.u32 %v1854, 7
    %v1856 = vsub.s32 %v1279, %v1855
    %v1857 = vrot.slane %v1234, %v1856
    %v1858 = vsel %vm1284, %v1857, %v1853
    %v1859 = vlaneseq
    %v1860 = vshrl.u32 %v1859, 7
    %v1861 = vsub.s32 %v1286, %v1860
    %v1862 = vrot.slane %v1235, %v1861
    %v1863 = vsel %vm1291, %v1862, %v1858
    %v1864 = vlaneseq
    %v1865 = vshrl.u32 %v1864, 7
    %v1866 = vsub.s32 %v1293, %v1865
    %v1867 = vrot.slane %v1236, %v1866
    %v1868 = vsel %vm1298, %v1867, %v1863
    %v1869 = vlaneseq
    %v1870 = vshrl.u32 %v1869, 7
    %v1871 = vsub.s32 %v1300, %v1870
    %v1872 = vrot.slane %v1237, %v1871
    %v1873 = vsel %vm1305, %v1872, %v1868
    %v1874 = vlaneseq
    %v1875 = vshrl.u32 %v1874, 7
    %v1876 = vsub.s32 %v1307, %v1875
    %v1877 = vrot.slane %v1238, %v1876
    %v1878 = vsel %vm1312, %v1877, %v1873
    %v1879 = vlaneseq
    %v1880 = vshrl.u32 %v1879, 7
    %v1881 = vsub.s32 %v1314, %v1880
    %v1882 = vrot.slane %v1239, %v1881
    %v1883 = vsel %vm1319, %v1882, %v1878
    %v1884 = vlaneseq
    %v1885 = vshrl.u32 %v1884, 7
    %v1886 = vsub.s32 %v1321, %v1885
    %v1887 = vrot.slane %v1240, %v1886
    %v1888 = vsel %vm1326, %v1887, %v1883
    %v1889 = vlaneseq
    %v1890 = vshrl.u32 %v1889, 7
    %v1891 = vsub.s32 %v1328, %v1890
    %v1892 = vrot.slane %v1241, %v1891
    %v1893 = vsel %vm1333, %v1892, %v1888
    %v1894 = vlaneseq
    %v1895 = vshrl.u32 %v1894, 7
    %v1896 = vsub.s32 %v1335, %v1895
    %v1897 = vrot.slane %v1242, %v1896
    %v1898 = vsel %vm1340, %v1897, %v1893
    %v1899 = vlaneseq
    %v1900 = vshrl.u32 %v1899, 7
    %v1901 = vsub.s32 %v1342, %v1900
    %v1902 = vrot.slane %v1243, %v1901
    %v1903 = vsel %vm1347, %v1902, %v1898
    %v1904 = vlaneseq
    %v1905 = vshrl.u32 %v1904, 7
    %v1906 = vsub.s32 %v1349, %v1905
    %v1907 = vrot.slane %v1244, %v1906
    %v1908 = vsel %vm1354, %v1907, %v1903
    %vm1909 = vcmask 1041409
    %v1910 = vsel %vm1909, %v1671, %v1355
    %v1911 = vsel %vm1909, %v1750, %v1434
    %v1912 = vsel %vm1909, %v1829, %v1513
    %v1913 = vsel %vm1909, %v1908, %v1592
    %v1914 = vpack.c.b16 %v1910, %v1910
    %v1915 = vpack.c.b16 %v1911, %v1911
    %v1916 = vpack.c.b16 %v1912, %v1912
    %v1917 = vpack.c.b16 %v1913, %v1913
    %v2178 = vunpack.c.l.b16 %v755
    %v2179 = vunpack.c.h.b16 %v755
    %v2180 = vunpack.c.l.b16 %v756
    %v2181 = vunpack.c.h.b16 %v756
    %v2182 = vunpack.c.l.b16 %v757
    %v2183 = vunpack.c.h.b16 %v757
    %v2184 = vunpack.c.l.b16 %v758
    %v2185 = vunpack.c.h.b16 %v758
    %v2186 = vunpack.c.l.b16 %v759
    %v2187 = vunpack.c.h.b16 %v759
    %v2188 = vunpack.c.l.b16 %v760
    %v2189 = vunpack.c.h.b16 %v760
    %v2190 = vunpack.c.l.b16 %v761
    %v2191 = vunpack.c.h.b16 %v761
    %v2192 = vunpack.c.l.b16 %v762
    %v2193 = vunpack.c.h.b16 %v762
    %v2194 = vunpack.c.l.b16 %v763
    %v2195 = vunpack.c.h.b16 %v763
    %v2196 = vunpack.c.l.b16 %v764
    %v2197 = vunpack.c.h.b16 %v764
    %v2198 = vunpack.c.l.b16 %v765
    %v2199 = vunpack.c.h.b16 %v765
    %v2200 = vunpack.c.l.b16 %v766
    %v2201 = vunpack.c.h.b16 %v766
    %v2202 = vunpack.c.l.b16 %v767
    %v2203 = vunpack.c.h.b16 %v767
    %v2204 = vunpack.c.l.b16 %v768
    %v2205 = vunpack.c.h.b16 %v768
    %v2206 = vunpack.c.l.b16 %v769
    %v2207 = vunpack.c.h.b16 %v769
    %v2208 = vunpack.c.l.b16 %v770
    %v2209 = vunpack.c.h.b16 %v770
    %v2210 = vunpack.c.l.b16 %v771
    %v2211 = vunpack.c.h.b16 %v771
    %v2212 = vunpack.c.l.b16 %v772
    %v2213 = vunpack.c.h.b16 %v772
    %v2214 = vunpack.c.l.b16 %v773
    %v2215 = vunpack.c.h.b16 %v773
    %v2216 = vunpack.c.l.b16 %v774
    %v2217 = vunpack.c.h.b16 %v774
    %v2218 = vunpack.c.l.b16 %v775
    %v2219 = vunpack.c.h.b16 %v775
    %v2220 = vunpack.c.l.b16 %v776
    %v2221 = vunpack.c.h.b16 %v776
    %v2222 = vunpack.c.l.b16 %v777
    %v2223 = vunpack.c.h.b16 %v777
    %v2224 = vunpack.c.l.b16 %v778
    %v2225 = vunpack.c.h.b16 %v778
    %v2226 = vunpack.c.l.b16 %v779
    %v2227 = vunpack.c.h.b16 %v779
    %v2228 = vunpack.c.l.b16 %v780
    %v2229 = vunpack.c.h.b16 %v780
    %v2230 = vunpack.c.l.b16 %v781
    %v2231 = vunpack.c.h.b16 %v781
    %v2232 = vunpack.c.l.b16 %v782
    %v2233 = vunpack.c.h.b16 %v782
    %v2234 = vunpack.c.l.b16 %v783
    %v2235 = vunpack.c.h.b16 %v783
    %v2236 = vunpack.c.l.b16 %v784
    %v2237 = vunpack.c.h.b16 %v784
    %v2238 = vunpack.c.l.b16 %v785
    %v2239 = vunpack.c.h.b16 %v785
    %v2240 = vunpack.c.l.b16 %v786
    %v2241 = vunpack.c.h.b16 %v786
    %v2242 = vunpack.c.l.b16 %v787
    %v2243 = vunpack.c.h.b16 %v787
    %v2244 = vunpack.c.l.b16 %v788
    %v2245 = vunpack.c.h.b16 %v788
    %v2246 = vunpack.c.l.b16 %v789
    %v2247 = vunpack.c.h.b16 %v789
    %v2248 = vunpack.c.l.b16 %v790
    %v2249 = vunpack.c.h.b16 %v790
    %v2250 = vunpack.c.l.b16 %v791
    %v2251 = vunpack.c.h.b16 %v791
    %v2252 = vunpack.c.l.b16 %v792
    %v2253 = vunpack.c.h.b16 %v792
    %v2254 = vunpack.c.l.b16 %v793
    %v2255 = vunpack.c.h.b16 %v793
    %v2256 = vunpack.c.l.b16 %v794
    %v2257 = vunpack.c.h.b16 %v794
    %v2258 = vunpack.c.l.b16 %v795
    %v2259 = vunpack.c.h.b16 %v795
    %v2260 = vunpack.c.l.b16 %v796
    %v2261 = vunpack.c.h.b16 %v796
    %v2262 = vunpack.c.l.b16 %v797
    %v2263 = vunpack.c.h.b16 %v797
    %v2264 = vunpack.c.l.b16 %v798
    %v2265 = vunpack.c.h.b16 %v798
    %v2266 = vunpack.c.l.b16 %v799
    %v2267 = vunpack.c.h.b16 %v799
    %v2268 = vunpack.c.l.b16 %v800
    %v2269 = vunpack.c.h.b16 %v800
    %v2270 = vunpack.c.l.b16 %v801
    %v2271 = vunpack.c.h.b16 %v801
    %v2272 = vunpack.c.l.b16 %v802
    %v2273 = vunpack.c.h.b16 %v802
    %v2274 = vunpack.c.l.b16 %v803
    %v2275 = vunpack.c.h.b16 %v803
    %v2276 = vunpack.c.l.b16 %v804
    %v2277 = vunpack.c.h.b16 %v804
    %v2278 = vunpack.c.l.b16 %v805
    %v2279 = vunpack.c.h.b16 %v805
    %v2280 = vunpack.c.l.b16 %v806
    %v2281 = vunpack.c.h.b16 %v806
    %v2282 = vunpack.c.l.b16 %v807
    %v2283 = vunpack.c.h.b16 %v807
    %v2284 = vunpack.c.l.b16 %v808
    %v2285 = vunpack.c.h.b16 %v808
    %v2286 = vunpack.c.l.b16 %v809
    %v2287 = vunpack.c.h.b16 %v809
    %v2288 = vunpack.c.l.b16 %v810
    %v2289 = vunpack.c.h.b16 %v810
    %v2290 = vunpack.c.l.b16 %v811
    %v2291 = vunpack.c.h.b16 %v811
    %v2292 = vunpack.c.l.b16 %v812
    %v2293 = vunpack.c.h.b16 %v812
    %v2294 = vunpack.c.l.b16 %v813
    %v2295 = vunpack.c.h.b16 %v813
    %v2296 = vunpack.c.l.b16 %v814
    %v2297 = vunpack.c.h.b16 %v814
    %v2298 = vunpack.c.l.b16 %v815
    %v2299 = vunpack.c.h.b16 %v815
    %v2300 = vunpack.c.l.b16 %v816
    %v2301 = vunpack.c.h.b16 %v816
    %v2302 = vunpack.c.l.b16 %v817
    %v2303 = vunpack.c.h.b16 %v817
    %v2304 = vunpack.c.l.b16 %v818
    %v2305 = vunpack.c.h.b16 %v818
    %v2306 = vunpack.c.l.b16 %v819
    %v2307 = vunpack.c.h.b16 %v819
    %v2308 = vunpack.c.l.b16 %v820
    %v2309 = vunpack.c.h.b16 %v820
    %v2310 = vunpack.c.l.b16 %v821
    %v2311 = vunpack.c.h.b16 %v821
    %v2312 = vunpack.c.l.b16 %v822
    %v2313 = vunpack.c.h.b16 %v822
    %v2314 = vunpack.c.l.b16 %v823
    %v2315 = vunpack.c.h.b16 %v823
    %v2316 = vunpack.c.l.b16 %v824
    %v2317 = vunpack.c.h.b16 %v824
    %v2318 = vunpack.c.l.b16 %v825
    %v2319 = vunpack.c.h.b16 %v825
    %v2320 = vunpack.c.l.b16 %v826
    %v2321 = vunpack.c.h.b16 %v826
    %v2322 = vunpack.c.l.b16 %v827
    %v2323 = vunpack.c.h.b16 %v827
    %v2324 = vunpack.c.l.b16 %v828
    %v2325 = vunpack.c.h.b16 %v828
    %v2326 = vunpack.c.l.b16 %v829
    %v2327 = vunpack.c.h.b16 %v829
    %v2328 = vunpack.c.l.b16 %v830
    %v2329 = vunpack.c.h.b16 %v830
    %v2330 = vunpack.c.l.b16 %v831
    %v2331 = vunpack.c.h.b16 %v831
    %v2332 = vunpack.c.l.b16 %v832
    %v2333 = vunpack.c.h.b16 %v832
    %v2334 = vunpack.c.l.b16 %v833
    %v2335 = vunpack.c.h.b16 %v833
    %v2336 = vunpack.c.l.b16 %v834
    %v2337 = vunpack.c.h.b16 %v834
    %v2338 = vunpack.c.l.b16 %v835
    %v2339 = vunpack.c.h.b16 %v835
    %v2340 = vunpack.c.l.b16 %v836
    %v2341 = vunpack.c.h.b16 %v836
    %v2342 = vunpack.c.l.b16 %v837
    %v2343 = vunpack.c.h.b16 %v837
    %v2344 = vunpack.c.l.b16 %v838
    %v2345 = vunpack.c.h.b16 %v838
    %v2346 = vunpack.c.l.b16 %v839
    %v2347 = vunpack.c.h.b16 %v839
    %v2348 = vunpack.c.l.b16 %v840
    %v2349 = vunpack.c.h.b16 %v840
    %v2350 = vunpack.c.l.b16 %v841
    %v2351 = vunpack.c.h.b16 %v841
    %v2352 = vunpack.c.l.b16 %v842
    %v2353 = vunpack.c.h.b16 %v842
    %v2354 = vunpack.c.l.b16 %v843
    %v2355 = vunpack.c.h.b16 %v843
    %v2356 = vunpack.c.l.b16 %v844
    %v2357 = vunpack.c.h.b16 %v844
    %v2358 = vunpack.c.l.b16 %v845
    %v2359 = vunpack.c.h.b16 %v845
    %v2360 = vunpack.c.l.b16 %v846
    %v2361 = vunpack.c.h.b16 %v846
    %v2362 = vunpack.c.l.b16 %v847
    %v2363 = vunpack.c.h.b16 %v847
    %v2364 = vunpack.c.l.b16 %v848
    %v2365 = vunpack.c.h.b16 %v848
    %v2366 = vunpack.c.l.b16 %v849
    %v2367 = vunpack.c.h.b16 %v849
    %v2368 = vunpack.c.l.b16 %v850
    %v2369 = vunpack.c.h.b16 %v850
    %v2370 = vunpack.c.l.b16 %v851
    %v2371 = vunpack.c.h.b16 %v851
    %v2372 = vunpack.c.l.b16 %v852
    %v2373 = vunpack.c.h.b16 %v852
    %v2374 = vunpack.c.l.b16 %v853
    %v2375 = vunpack.c.h.b16 %v853
    %v2376 = vunpack.c.l.b16 %v854
    %v2377 = vunpack.c.h.b16 %v854
    %v2378 = vunpack.c.l.b16 %v855
    %v2379 = vunpack.c.h.b16 %v855
    %v2380 = vunpack.c.l.b16 %v856
    %v2381 = vunpack.c.h.b16 %v856
    %v2382 = vunpack.c.l.b16 %v857
    %v2383 = vunpack.c.h.b16 %v857
    %v2384 = vunpack.c.l.b16 %v858
    %v2385 = vunpack.c.h.b16 %v858
    %v2386 = vunpack.c.l.b16 %v859
    %v2387 = vunpack.c.h.b16 %v859
    %v2388 = vunpack.c.l.b16 %v860
    %v2389 = vunpack.c.h.b16 %v860
    %v2390 = vunpack.c.l.b16 %v861
    %v2391 = vunpack.c.h.b16 %v861
    %v2392 = vunpack.c.l.b16 %v862
    %v2393 = vunpack.c.h.b16 %v862
    %v2394 = vunpack.c.l.b16 %v863
    %v2395 = vunpack.c.h.b16 %v863
    %v2396 = vunpack.c.l.b16 %v864
    %v2397 = vunpack.c.h.b16 %v864
    %v2398 = vunpack.c.l.b16 %v865
    %v2399 = vunpack.c.h.b16 %v865
    %v2400 = vunpack.c.l.b16 %v866
    %v2401 = vunpack.c.h.b16 %v866
    %v2402 = vunpack.c.l.b16 %v867
    %v2403 = vunpack.c.h.b16 %v867
    %v2404 = vunpack.c.l.b16 %v868
    %v2405 = vunpack.c.h.b16 %v868
    %v2406 = vunpack.c.l.b16 %v869
    %v2407 = vunpack.c.h.b16 %v869
    %v2408 = vunpack.c.l.b16 %v870
    %v2409 = vunpack.c.h.b16 %v870
    %v2410 = vunpack.c.l.b16 %v871
    %v2411 = vunpack.c.h.b16 %v871
    %v2412 = vunpack.c.l.b16 %v872
    %v2413 = vunpack.c.h.b16 %v872
    %v2414 = vunpack.c.l.b16 %v873
    %v2415 = vunpack.c.h.b16 %v873
    %v2416 = vunpack.c.l.b16 %v874
    %v2417 = vunpack.c.h.b16 %v874
    %v2418 = vunpack.c.l.b16 %v875
    %v2419 = vunpack.c.h.b16 %v875
    %v2420 = vunpack.c.l.b16 %v876
    %v2421 = vunpack.c.h.b16 %v876
    %v2422 = vunpack.c.l.b16 %v877
    %v2423 = vunpack.c.h.b16 %v877
    %v2424 = vunpack.c.l.b16 %v878
    %v2425 = vunpack.c.h.b16 %v878
    %v2426 = vunpack.c.l.b16 %v879
    %v2427 = vunpack.c.h.b16 %v879
    %v2428 = vunpack.c.l.b16 %v880
    %v2429 = vunpack.c.h.b16 %v880
    %v2430 = vunpack.c.l.b16 %v881
    %v2431 = vunpack.c.h.b16 %v881
    %v2432 = vunpack.c.l.b16 %v882
    %v2433 = vunpack.c.h.b16 %v882
    %v2434 = vunpack.c.l.b16 %v883
    %v2435 = vunpack.c.h.b16 %v883
    %v2436 = vunpack.c.l.b16 %v884
    %v2437 = vunpack.c.h.b16 %v884
    %v2438 = vunpack.c.l.b16 %v885
    %v2439 = vunpack.c.h.b16 %v885
    %v2440 = vunpack.c.l.b16 %v886
    %v2441 = vunpack.c.h.b16 %v886
    %v2442 = vunpack.c.l.b16 %v887
    %v2443 = vunpack.c.h.b16 %v887
    %v2444 = vunpack.c.l.b16 %v888
    %v2445 = vunpack.c.h.b16 %v888
    %v2446 = vunpack.c.l.b16 %v889
    %v2447 = vunpack.c.h.b16 %v889
    %v2448 = vunpack.c.l.b16 %v890
    %v2449 = vunpack.c.h.b16 %v890
    %v2450 = vunpack.c.l.b16 %v891
    %v2451 = vunpack.c.h.b16 %v891
    %v2452 = vunpack.c.l.b16 %v892
    %v2453 = vunpack.c.h.b16 %v892
    %v2454 = vunpack.c.l.b16 %v893
    %v2455 = vunpack.c.h.b16 %v893
    %v2456 = vunpack.c.l.b16 %v894
    %v2457 = vunpack.c.h.b16 %v894
    %v2458 = vunpack.c.l.b16 %v895
    %v2459 = vunpack.c.h.b16 %v895
    %v2460 = vunpack.c.l.b16 %v896
    %v2461 = vunpack.c.h.b16 %v896
    %v2462 = vunpack.c.l.b16 %v897
    %v2463 = vunpack.c.h.b16 %v897
    %v2464 = vunpack.c.l.b16 %v898
    %v2465 = vunpack.c.h.b16 %v898
    %v2466 = vunpack.c.l.b16 %v899
    %v2467 = vunpack.c.h.b16 %v899
    %v2468 = vunpack.c.l.b16 %v900
    %v2469 = vunpack.c.h.b16 %v900
    %v2470 = vunpack.c.l.b16 %v901
    %v2471 = vunpack.c.h.b16 %v901
    %v2472 = vunpack.c.l.b16 %v902
    %v2473 = vunpack.c.h.b16 %v902
    %v2474 = vunpack.c.l.b16 %v903
    %v2475 = vunpack.c.h.b16 %v903
    %v2476 = vunpack.c.l.b16 %v904
    %v2477 = vunpack.c.h.b16 %v904
    %v2478 = vunpack.c.l.b16 %v905
    %v2479 = vunpack.c.h.b16 %v905
    %v2480 = vunpack.c.l.b16 %v906
    %v2481 = vunpack.c.h.b16 %v906
    %v2482 = vunpack.c.l.b16 %v907
    %v2483 = vunpack.c.h.b16 %v907
    %v2484 = vunpack.c.l.b16 %v908
    %v2485 = vunpack.c.h.b16 %v908
    %v2486 = vunpack.c.l.b16 %v909
    %v2487 = vunpack.c.h.b16 %v909
    %v2488 = vunpack.c.l.b16 %v910
    %v2489 = vunpack.c.h.b16 %v910
    %v2490 = vunpack.c.l.b16 %v911
    %v2491 = vunpack.c.h.b16 %v911
    %v2492 = vunpack.c.l.b16 %v912
    %v2493 = vunpack.c.h.b16 %v912
    %v2494 = vunpack.c.l.b16 %v913
    %v2495 = vunpack.c.h.b16 %v913
    %v2496 = vunpack.c.l.b16 %v914
    %v2497 = vunpack.c.h.b16 %v914
    %v2498 = vunpack.c.l.b16 %v915
    %v2499 = vunpack.c.h.b16 %v915
    %v2500 = vunpack.c.l.b16 %v916
    %v2501 = vunpack.c.h.b16 %v916
    %v2502 = vunpack.c.l.b16 %v917
    %v2503 = vunpack.c.h.b16 %v917
    %v2504 = vunpack.c.l.b16 %v918
    %v2505 = vunpack.c.h.b16 %v918
    %v2506 = vunpack.c.l.b16 %v919
    %v2507 = vunpack.c.h.b16 %v919
    %v2508 = vunpack.c.l.b16 %v920
    %v2509 = vunpack.c.h.b16 %v920
    %v2510 = vunpack.c.l.b16 %v921
    %v2511 = vunpack.c.h.b16 %v921
    %v2512 = vunpack.c.l.b16 %v922
    %v2513 = vunpack.c.h.b16 %v922
    %v2514 = vunpack.c.l.b16 %v923
    %v2515 = vunpack.c.h.b16 %v923
    %v2516 = vunpack.c.l.b16 %v924
    %v2517 = vunpack.c.h.b16 %v924
    %v2518 = vunpack.c.l.b16 %v925
    %v2519 = vunpack.c.h.b16 %v925
    %v2520 = vunpack.c.l.b16 %v926
    %v2521 = vunpack.c.h.b16 %v926
    %v2522 = vunpack.c.l.b16 %v927
    %v2523 = vunpack.c.h.b16 %v927
    %v2524 = vunpack.c.l.b16 %v928
    %v2525 = vunpack.c.h.b16 %v928
    %v2526 = vunpack.c.l.b16 %v929
    %v2527 = vunpack.c.h.b16 %v929
    %v2528 = vunpack.c.l.b16 %v930
    %v2529 = vunpack.c.h.b16 %v930
    %v2530 = vunpack.c.l.b16 %v931
    %v2531 = vunpack.c.h.b16 %v931
    %v2532 = vunpack.c.l.b16 %v932
    %v2533 = vunpack.c.h.b16 %v932
    %v2534 = vunpack.c.l.b16 %v933
    %v2535 = vunpack.c.h.b16 %v933
    %v2536 = vunpack.c.l.b16 %v934
    %v2537 = vunpack.c.h.b16 %v934
    %v2538 = vunpack.c.l.b16 %v935
    %v2539 = vunpack.c.h.b16 %v935
    %v2540 = vunpack.c.l.b16 %v936
    %v2541 = vunpack.c.h.b16 %v936
    %v2542 = vunpack.c.l.b16 %v937
    %v2543 = vunpack.c.h.b16 %v937
    %v2544 = vunpack.c.l.b16 %v938
    %v2545 = vunpack.c.h.b16 %v938
    %v2546 = vunpack.c.l.b16 %v939
    %v2547 = vunpack.c.h.b16 %v939
    %v2548 = vunpack.c.l.b16 %v940
    %v2549 = vunpack.c.h.b16 %v940
    %v2550 = vunpack.c.l.b16 %v941
    %v2551 = vunpack.c.h.b16 %v941
    %v2552 = vunpack.c.l.b16 %v942
    %v2553 = vunpack.c.h.b16 %v942
    %v2554 = vunpack.c.l.b16 %v943
    %v2555 = vunpack.c.h.b16 %v943
    %v2556 = vunpack.c.l.b16 %v944
    %v2557 = vunpack.c.h.b16 %v944
    %v2558 = vunpack.c.l.b16 %v945
    %v2559 = vunpack.c.h.b16 %v945
    %v2560 = vunpack.c.l.b16 %v946
    %v2561 = vunpack.c.h.b16 %v946
    %v2562 = vunpack.c.l.b16 %v947
    %v2563 = vunpack.c.h.b16 %v947
    %v2564 = vunpack.c.l.b16 %v948
    %v2565 = vunpack.c.h.b16 %v948
    %v2566 = vunpack.c.l.b16 %v949
    %v2567 = vunpack.c.h.b16 %v949
    %v2568 = vunpack.c.l.b16 %v950
    %v2569 = vunpack.c.h.b16 %v950
    %v2570 = vunpack.c.l.b16 %v951
    %v2571 = vunpack.c.h.b16 %v951
    %v2572 = vunpack.c.l.b16 %v952
    %v2573 = vunpack.c.h.b16 %v952
    %v2574 = vunpack.c.l.b16 %v953
    %v2575 = vunpack.c.h.b16 %v953
    %v2576 = vunpack.c.l.b16 %v954
    %v2577 = vunpack.c.h.b16 %v954
    %v2578 = vunpack.c.l.b16 %v955
    %v2579 = vunpack.c.h.b16 %v955
    %v2580 = vunpack.c.l.b16 %v956
    %v2581 = vunpack.c.h.b16 %v956
    %v2582 = vunpack.c.l.b16 %v957
    %v2583 = vunpack.c.h.b16 %v957
    %v2584 = vunpack.c.l.b16 %v958
    %v2585 = vunpack.c.h.b16 %v958
    %v2586 = vunpack.c.l.b16 %v959
    %v2587 = vunpack.c.h.b16 %v959
    %v2588 = vunpack.c.l.b16 %v960
    %v2589 = vunpack.c.h.b16 %v960
    %v2590 = vunpack.c.l.b16 %v961
    %v2591 = vunpack.c.h.b16 %v961
    %v2592 = vunpack.c.l.b16 %v962
    %v2593 = vunpack.c.h.b16 %v962
    %v2594 = vunpack.c.l.b16 %v963
    %v2595 = vunpack.c.h.b16 %v963
    %v2596 = vunpack.c.l.b16 %v964
    %v2597 = vunpack.c.h.b16 %v964
    %v2598 = vunpack.c.l.b16 %v965
    %v2599 = vunpack.c.h.b16 %v965
    %v2600 = vunpack.c.l.b16 %v966
    %v2601 = vunpack.c.h.b16 %v966
    %v2602 = vunpack.c.l.b16 %v967
    %v2603 = vunpack.c.h.b16 %v967
    %v2604 = vunpack.c.l.b16 %v968
    %v2605 = vunpack.c.h.b16 %v968
    %v2606 = vunpack.c.l.b16 %v969
    %v2607 = vunpack.c.h.b16 %v969
    %v2608 = vunpack.c.l.b16 %v970
    %v2609 = vunpack.c.h.b16 %v970
    %v2610 = vunpack.c.l.b16 %v971
    %v2611 = vunpack.c.h.b16 %v971
    %v2612 = vunpack.c.l.b16 %v972
    %v2613 = vunpack.c.h.b16 %v972
    %v2614 = vunpack.c.l.b16 %v973
    %v2615 = vunpack.c.h.b16 %v973
    %v2616 = vunpack.c.l.b16 %v974
    %v2617 = vunpack.c.h.b16 %v974
    %v2618 = vunpack.c.l.b16 %v975
    %v2619 = vunpack.c.h.b16 %v975
    %v2620 = vunpack.c.l.b16 %v976
    %v2621 = vunpack.c.h.b16 %v976
    %v2622 = vunpack.c.l.b16 %v977
    %v2623 = vunpack.c.h.b16 %v977
    %v2624 = vunpack.c.l.b16 %v978
    %v2625 = vunpack.c.h.b16 %v978
    %v2626 = vunpack.c.l.b16 %v979
    %v2627 = vunpack.c.h.b16 %v979
    %v2628 = vunpack.c.l.b16 %v980
    %v2629 = vunpack.c.h.b16 %v980
    %v2630 = vunpack.c.l.b16 %v981
    %v2631 = vunpack.c.h.b16 %v981
    %v2632 = vunpack.c.l.b16 %v982
    %v2633 = vunpack.c.h.b16 %v982
    %v2634 = vunpack.c.l.b16 %v983
    %v2635 = vunpack.c.h.b16 %v983
    %v2636 = vunpack.c.l.b16 %v984
    %v2637 = vunpack.c.h.b16 %v984
    %v2638 = vunpack.c.l.b16 %v985
    %v2639 = vunpack.c.h.b16 %v985
    %v2640 = vunpack.c.l.b16 %v986
    %v2641 = vunpack.c.h.b16 %v986
    %v2642 = vunpack.c.l.b16 %v987
    %v2643 = vunpack.c.h.b16 %v987
    %v2644 = vunpack.c.l.b16 %v988
    %v2645 = vunpack.c.h.b16 %v988
    %v2646 = vunpack.c.l.b16 %v989
    %v2647 = vunpack.c.h.b16 %v989
    %v2648 = vunpack.c.l.b16 %v990
    %v2649 = vunpack.c.h.b16 %v990
    %v2650 = vunpack.c.l.b16 %v991
    %v2651 = vunpack.c.h.b16 %v991
    %v2652 = vunpack.c.l.b16 %v992
    %v2653 = vunpack.c.h.b16 %v992
    %v2654 = vunpack.c.l.b16 %v993
    %v2655 = vunpack.c.h.b16 %v993
    %v2656 = vunpack.c.l.b16 %v994
    %v2657 = vunpack.c.h.b16 %v994
    %v2658 = vunpack.c.l.b16 %v995
    %v2659 = vunpack.c.h.b16 %v995
    %v2660 = vunpack.c.l.b16 %v996
    %v2661 = vunpack.c.h.b16 %v996
    %v2662 = vunpack.c.l.b16 %v997
    %v2663 = vunpack.c.h.b16 %v997
    %v2664 = vunpack.c.l.b16 %v998
    %v2665 = vunpack.c.h.b16 %v998
    %v2666 = vunpack.c.l.b16 %v999
    %v2667 = vunpack.c.h.b16 %v999
    %v2668 = vunpack.c.l.b16 %v1000
    %v2669 = vunpack.c.h.b16 %v1000
    %v2670 = vunpack.c.l.b16 %v1001
    %v2671 = vunpack.c.h.b16 %v1001
    %v2672 = vunpack.c.l.b16 %v1002
    %v2673 = vunpack.c.h.b16 %v1002
    %v2674 = vunpack.c.l.b16 %v1003
    %v2675 = vunpack.c.h.b16 %v1003
    %v2676 = vunpack.c.l.b16 %v1004
    %v2677 = vunpack.c.h.b16 %v1004
    %v2678 = vunpack.c.l.b16 %v1005
    %v2679 = vunpack.c.h.b16 %v1005
    %v2680 = vunpack.c.l.b16 %v1006
    %v2681 = vunpack.c.h.b16 %v1006
    %v2682 = vunpack.c.l.b16 %v1007
    %v2683 = vunpack.c.h.b16 %v1007
    %v2684 = vunpack.c.l.b16 %v1008
    %v2685 = vunpack.c.h.b16 %v1008
    %v2686 = vunpack.c.l.b16 %v1009
    %v2687 = vunpack.c.h.b16 %v1009
    %v2688 = vunpack.c.l.b16 %v1010
    %v2689 = vunpack.c.h.b16 %v1010
    %v2690 = vpack.c.b16 %v2186, %v2178
    %v2691 = vpack.c.b16 %v2187, %v2179
    %v2692 = vpack.c.b16 %v2188, %v2180
    %v2693 = vpack.c.b16 %v2189, %v2181
    %v2694 = vpack.c.b16 %v2190, %v2182
    %v2695 = vpack.c.b16 %v2191, %v2183
    %v2696 = vpack.c.b16 %v2192, %v2184
    %v2697 = vpack.c.b16 %v2193, %v2185
    %v2698 = vpack.c.b16 %v2202, %v2194
    %v2699 = vpack.c.b16 %v2203, %v2195
    %v2700 = vpack.c.b16 %v2204, %v2196
    %v2701 = vpack.c.b16 %v2205, %v2197
    %v2702 = vpack.c.b16 %v2206, %v2198
    %v2703 = vpack.c.b16 %v2207, %v2199
    %v2704 = vpack.c.b16 %v2208, %v2200
    %v2705 = vpack.c.b16 %v2209, %v2201
    %v2706 = vpack.c.b16 %v2218, %v2210
    %v2707 = vpack.c.b16 %v2219, %v2211
    %v2708 = vpack.c.b16 %v2220, %v2212
    %v2709 = vpack.c.b16 %v2221, %v2213
    %v2710 = vpack.c.b16 %v2222, %v2214
    %v2711 = vpack.c.b16 %v2223, %v2215
    %v2712 = vpack.c.b16 %v2224, %v2216
    %v2713 = vpack.c.b16 %v2225, %v2217
    %v2714 = vpack.c.b16 %v2234, %v2226
    %v2715 = vpack.c.b16 %v2235, %v2227
    %v2716 = vpack.c.b16 %v2236, %v2228
    %v2717 = vpack.c.b16 %v2237, %v2229
    %v2718 = vpack.c.b16 %v2238, %v2230
    %v2719 = vpack.c.b16 %v2239, %v2231
    %v2720 = vpack.c.b16 %v2240, %v2232
    %v2721 = vpack.c.b16 %v2241, %v2233
    %v2722 = vpack.c.b16 %v2250, %v2242
    %v2723 = vpack.c.b16 %v2251, %v2243
    %v2724 = vpack.c.b16 %v2252, %v2244
    %v2725 = vpack.c.b16 %v2253, %v2245
    %v2726 = vpack.c.b16 %v2254, %v2246
    %v2727 = vpack.c.b16 %v2255, %v2247
    %v2728 = vpack.c.b16 %v2256, %v2248
    %v2729 = vpack.c.b16 %v2257, %v2249
    %v2730 = vpack.c.b16 %v2266, %v2258
    %v2731 = vpack.c.b16 %v2267, %v2259
    %v2732 = vpack.c.b16 %v2268, %v2260
    %v2733 = vpack.c.b16 %v2269, %v2261
    %v2734 = vpack.c.b16 %v2270, %v2262
    %v2735 = vpack.c.b16 %v2271, %v2263
    %v2736 = vpack.c.b16 %v2272, %v2264
    %v2737 = vpack.c.b16 %v2273, %v2265
    %v2738 = vpack.c.b16 %v2282, %v2274
    %v2739 = vpack.c.b16 %v2283, %v2275
    %v2740 = vpack.c.b16 %v2284, %v2276
    %v2741 = vpack.c.b16 %v2285, %v2277
    %v2742 = vpack.c.b16 %v2286, %v2278
    %v2743 = vpack.c.b16 %v2287, %v2279
    %v2744 = vpack.c.b16 %v2288, %v2280
    %v2745 = vpack.c.b16 %v2289, %v2281
    %v2746 = vpack.c.b16 %v2298, %v2290
    %v2747 = vpack.c.b16 %v2299, %v2291
    %v2748 = vpack.c.b16 %v2300, %v2292
    %v2749 = vpack.c.b16 %v2301, %v2293
    %v2750 = vpack.c.b16 %v2302, %v2294
    %v2751 = vpack.c.b16 %v2303, %v2295
    %v2752 = vpack.c.b16 %v2304, %v2296
    %v2753 = vpack.c.b16 %v2305, %v2297
    %v2754 = vpack.c.b16 %v2314, %v2306
    %v2755 = vpack.c.b16 %v2315, %v2307
    %v2756 = vpack.c.b16 %v2316, %v2308
    %v2757 = vpack.c.b16 %v2317, %v2309
    %v2758 = vpack.c.b16 %v2318, %v2310
    %v2759 = vpack.c.b16 %v2319, %v2311
    %v2760 = vpack.c.b16 %v2320, %v2312
    %v2761 = vpack.c.b16 %v2321, %v2313
    %v2762 = vpack.c.b16 %v2330, %v2322
    %v2763 = vpack.c.b16 %v2331, %v2323
    %v2764 = vpack.c.b16 %v2332, %v2324
    %v2765 = vpack.c.b16 %v2333, %v2325
    %v2766 = vpack.c.b16 %v2334, %v2326
    %v2767 = vpack.c.b16 %v2335, %v2327
    %v2768 = vpack.c.b16 %v2336, %v2328
    %v2769 = vpack.c.b16 %v2337, %v2329
    %v2770 = vpack.c.b16 %v2346, %v2338
    %v2771 = vpack.c.b16 %v2347, %v2339
    %v2772 = vpack.c.b16 %v2348, %v2340
    %v2773 = vpack.c.b16 %v2349, %v2341
    %v2774 = vpack.c.b16 %v2350, %v2342
    %v2775 = vpack.c.b16 %v2351, %v2343
    %v2776 = vpack.c.b16 %v2352, %v2344
    %v2777 = vpack.c.b16 %v2353, %v2345
    %v2778 = vpack.c.b16 %v2362, %v2354
    %v2779 = vpack.c.b16 %v2363, %v2355
    %v2780 = vpack.c.b16 %v2364, %v2356
    %v2781 = vpack.c.b16 %v2365, %v2357
    %v2782 = vpack.c.b16 %v2366, %v2358
    %v2783 = vpack.c.b16 %v2367, %v2359
    %v2784 = vpack.c.b16 %v2368, %v2360
    %v2785 = vpack.c.b16 %v2369, %v2361
    %v2786 = vpack.c.b16 %v2378, %v2370
    %v2787 = vpack.c.b16 %v2379, %v2371
    %v2788 = vpack.c.b16 %v2380, %v2372
    %v2789 = vpack.c.b16 %v2381, %v2373
    %v2790 = vpack.c.b16 %v2382, %v2374
    %v2791 = vpack.c.b16 %v2383, %v2375
    %v2792 = vpack.c.b16 %v2384, %v2376
    %v2793 = vpack.c.b16 %v2385, %v2377
    %v2794 = vpack.c.b16 %v2394, %v2386
    %v2795 = vpack.c.b16 %v2395, %v2387
    %v2796 = vpack.c.b16 %v2396, %v2388
    %v2797 = vpack.c.b16 %v2397, %v2389
    %v2798 = vpack.c.b16 %v2398, %v2390
    %v2799 = vpack.c.b16 %v2399, %v2391
    %v2800 = vpack.c.b16 %v2400, %v2392
    %v2801 = vpack.c.b16 %v2401, %v2393
    %v2802 = vpack.c.b16 %v2410, %v2402
    %v2803 = vpack.c.b16 %v2411, %v2403
    %v2804 = vpack.c.b16 %v2412, %v2404
    %v2805 = vpack.c.b16 %v2413, %v2405
    %v2806 = vpack.c.b16 %v2414, %v2406
    %v2807 = vpack.c.b16 %v2415, %v2407
    %v2808 = vpack.c.b16 %v2416, %v2408
    %v2809 = vpack.c.b16 %v2417, %v2409
    %v2810 = vpack.c.b16 %v2426, %v2418
    %v2811 = vpack.c.b16 %v2427, %v2419
    %v2812 = vpack.c.b16 %v2428, %v2420
    %v2813 = vpack.c.b16 %v2429, %v2421
    %v2814 = vpack.c.b16 %v2430, %v2422
    %v2815 = vpack.c.b16 %v2431, %v2423
    %v2816 = vpack.c.b16 %v2432, %v2424
    %v2817 = vpack.c.b16 %v2433, %v2425
    %v2818 = vpack.c.b16 %v2442, %v2434
    %v2819 = vpack.c.b16 %v2443, %v2435
    %v2820 = vpack.c.b16 %v2444, %v2436
    %v2821 = vpack.c.b16 %v2445, %v2437
    %v2822 = vpack.c.b16 %v2446, %v2438
    %v2823 = vpack.c.b16 %v2447, %v2439
    %v2824 = vpack.c.b16 %v2448, %v2440
    %v2825 = vpack.c.b16 %v2449, %v2441
    %v2826 = vpack.c.b16 %v2458, %v2450
    %v2827 = vpack.c.b16 %v2459, %v2451
    %v2828 = vpack.c.b16 %v2460, %v2452
    %v2829 = vpack.c.b16 %v2461, %v2453
    %v2830 = vpack.c.b16 %v2462, %v2454
    %v2831 = vpack.c.b16 %v2463, %v2455
    %v2832 = vpack.c.b16 %v2464, %v2456
    %v2833 = vpack.c.b16 %v2465, %v2457
    %v2834 = vpack.c.b16 %v2474, %v2466
    %v2835 = vpack.c.b16 %v2475, %v2467
    %v2836 = vpack.c.b16 %v2476, %v2468
    %v2837 = vpack.c.b16 %v2477, %v2469
    %v2838 = vpack.c.b16 %v2478, %v2470
    %v2839 = vpack.c.b16 %v2479, %v2471
    %v2840 = vpack.c.b16 %v2480, %v2472
    %v2841 = vpack.c.b16 %v2481, %v2473
    %v2842 = vpack.c.b16 %v2490, %v2482
    %v2843 = vpack.c.b16 %v2491, %v2483
    %v2844 = vpack.c.b16 %v2492, %v2484
    %v2845 = vpack.c.b16 %v2493, %v2485
    %v2846 = vpack.c.b16 %v2494, %v2486
    %v2847 = vpack.c.b16 %v2495, %v2487
    %v2848 = vpack.c.b16 %v2496, %v2488
    %v2849 = vpack.c.b16 %v2497, %v2489
    %v2850 = vpack.c.b16 %v2506, %v2498
    %v2851 = vpack.c.b16 %v2507, %v2499
    %v2852 = vpack.c.b16 %v2508, %v2500
    %v2853 = vpack.c.b16 %v2509, %v2501
    %v2854 = vpack.c.b16 %v2510, %v2502
    %v2855 = vpack.c.b16 %v2511, %v2503
    %v2856 = vpack.c.b16 %v2512, %v2504
    %v2857 = vpack.c.b16 %v2513, %v2505
    %v2858 = vpack.c.b16 %v2522, %v2514
    %v2859 = vpack.c.b16 %v2523, %v2515
    %v2860 = vpack.c.b16 %v2524, %v2516
    %v2861 = vpack.c.b16 %v2525, %v2517
    %v2862 = vpack.c.b16 %v2526, %v2518
    %v2863 = vpack.c.b16 %v2527, %v2519
    %v2864 = vpack.c.b16 %v2528, %v2520
    %v2865 = vpack.c.b16 %v2529, %v2521
    %v2866 = vpack.c.b16 %v2538, %v2530
    %v2867 = vpack.c.b16 %v2539, %v2531
    %v2868 = vpack.c.b16 %v2540, %v2532
    %v2869 = vpack.c.b16 %v2541, %v2533
    %v2870 = vpack.c.b16 %v2542, %v2534
    %v2871 = vpack.c.b16 %v2543, %v2535
    %v2872 = vpack.c.b16 %v2544, %v2536
    %v2873 = vpack.c.b16 %v2545, %v2537
    %v2874 = vpack.c.b16 %v2554, %v2546
    %v2875 = vpack.c.b16 %v2555, %v2547
    %v2876 = vpack.c.b16 %v2556, %v2548
    %v2877 = vpack.c.b16 %v2557, %v2549
    %v2878 = vpack.c.b16 %v2558, %v2550
    %v2879 = vpack.c.b16 %v2559, %v2551
    %v2880 = vpack.c.b16 %v2560, %v2552
    %v2881 = vpack.c.b16 %v2561, %v2553
    %v2882 = vpack.c.b16 %v2570, %v2562
    %v2883 = vpack.c.b16 %v2571, %v2563
    %v2884 = vpack.c.b16 %v2572, %v2564
    %v2885 = vpack.c.b16 %v2573, %v2565
    %v2886 = vpack.c.b16 %v2574, %v2566
    %v2887 = vpack.c.b16 %v2575, %v2567
    %v2888 = vpack.c.b16 %v2576, %v2568
    %v2889 = vpack.c.b16 %v2577, %v2569
    %v2890 = vpack.c.b16 %v2586, %v2578
    %v2891 = vpack.c.b16 %v2587, %v2579
    %v2892 = vpack.c.b16 %v2588, %v2580
    %v2893 = vpack.c.b16 %v2589, %v2581
    %v2894 = vpack.c.b16 %v2590, %v2582
    %v2895 = vpack.c.b16 %v2591, %v2583
    %v2896 = vpack.c.b16 %v2592, %v2584
    %v2897 = vpack.c.b16 %v2593, %v2585
    %v2898 = vpack.c.b16 %v2602, %v2594
    %v2899 = vpack.c.b16 %v2603, %v2595
    %v2900 = vpack.c.b16 %v2604, %v2596
    %v2901 = vpack.c.b16 %v2605, %v2597
    %v2902 = vpack.c.b16 %v2606, %v2598
    %v2903 = vpack.c.b16 %v2607, %v2599
    %v2904 = vpack.c.b16 %v2608, %v2600
    %v2905 = vpack.c.b16 %v2609, %v2601
    %v2906 = vpack.c.b16 %v2618, %v2610
    %v2907 = vpack.c.b16 %v2619, %v2611
    %v2908 = vpack.c.b16 %v2620, %v2612
    %v2909 = vpack.c.b16 %v2621, %v2613
    %v2910 = vpack.c.b16 %v2622, %v2614
    %v2911 = vpack.c.b16 %v2623, %v2615
    %v2912 = vpack.c.b16 %v2624, %v2616
    %v2913 = vpack.c.b16 %v2625, %v2617
    %v2914 = vpack.c.b16 %v2634, %v2626
    %v2915 = vpack.c.b16 %v2635, %v2627
    %v2916 = vpack.c.b16 %v2636, %v2628
    %v2917 = vpack.c.b16 %v2637, %v2629
    %v2918 = vpack.c.b16 %v2638, %v2630
    %v2919 = vpack.c.b16 %v2639, %v2631
    %v2920 = vpack.c.b16 %v2640, %v2632
    %v2921 = vpack.c.b16 %v2641, %v2633
    %v2922 = vpack.c.b16 %v2650, %v2642
    %v2923 = vpack.c.b16 %v2651, %v2643
    %v2924 = vpack.c.b16 %v2652, %v2644
    %v2925 = vpack.c.b16 %v2653, %v2645
    %v2926 = vpack.c.b16 %v2654, %v2646
    %v2927 = vpack.c.b16 %v2655, %v2647
    %v2928 = vpack.c.b16 %v2656, %v2648
    %v2929 = vpack.c.b16 %v2657, %v2649
    %v2930 = vpack.c.b16 %v2666, %v2658
    %v2931 = vpack.c.b16 %v2667, %v2659
    %v2932 = vpack.c.b16 %v2668, %v2660
    %v2933 = vpack.c.b16 %v2669, %v2661
    %v2934 = vpack.c.b16 %v2670, %v2662
    %v2935 = vpack.c.b16 %v2671, %v2663
    %v2936 = vpack.c.b16 %v2672, %v2664
    %v2937 = vpack.c.b16 %v2673, %v2665
    %v2938 = vpack.c.b16 %v2682, %v2674
    %v2939 = vpack.c.b16 %v2683, %v2675
    %v2940 = vpack.c.b16 %v2684, %v2676
    %v2941 = vpack.c.b16 %v2685, %v2677
    %v2942 = vpack.c.b16 %v2686, %v2678
    %v2943 = vpack.c.b16 %v2687, %v2679
    %v2944 = vpack.c.b16 %v2688, %v2680
    %v2945 = vpack.c.b16 %v2689, %v2681
    %3202 = vmatprep.subr.bf16.mxu0 %v2691
    %3203 = vmatpush1.bf16.msra.mxu0 %v2690
    %3204 = vmatprep.subr.bf16.mxu0 %v2699
    %3205 = vmatpush1.bf16.msra.mxu0 %v2698
    %3206 = vmatprep.subr.bf16.mxu0 %v2707
    %3207 = vmatpush1.bf16.msra.mxu0 %v2706
    %3208 = vmatprep.subr.bf16.mxu0 %v2715
    %3209 = vmatpush1.bf16.msra.mxu0 %v2714
    %3210 = vmatprep.subr.bf16.mxu0 %v2723
    %3211 = vmatpush1.bf16.msra.mxu0 %v2722
    %3212 = vmatprep.subr.bf16.mxu0 %v2731
    %3213 = vmatpush1.bf16.msra.mxu0 %v2730
    %3214 = vmatprep.subr.bf16.mxu0 %v2739
    %3215 = vmatpush1.bf16.msra.mxu0 %v2738
    %3216 = vmatprep.subr.bf16.mxu0 %v2747
    %3217 = vmatpush1.bf16.msra.mxu0 %v2746
    %3218 = vmatprep.subr.bf16.mxu0 %v2755
    %3219 = vmatpush1.bf16.msra.mxu0 %v2754
    %3220 = vmatprep.subr.bf16.mxu0 %v2763
    %3221 = vmatpush1.bf16.msra.mxu0 %v2762
    %3222 = vmatprep.subr.bf16.mxu0 %v2771
    %3223 = vmatpush1.bf16.msra.mxu0 %v2770
    %3224 = vmatprep.subr.bf16.mxu0 %v2779
    %3225 = vmatpush1.bf16.msra.mxu0 %v2778
    %3226 = vmatprep.subr.bf16.mxu0 %v2787
    %3227 = vmatpush1.bf16.msra.mxu0 %v2786
    %3228 = vmatprep.subr.bf16.mxu0 %v2795
    %3229 = vmatpush1.bf16.msra.mxu0 %v2794
    %3230 = vmatprep.subr.bf16.mxu0 %v2803
    %3231 = vmatpush1.bf16.msra.mxu0 %v2802
    %3232 = vmatprep.subr.bf16.mxu0 %v2811
    %3233 = vmatpush1.bf16.msra.mxu0 %v2810
    %3234 = vmatprep.mubr.bf16.mxu0 %v1915
    %3235 = vmatmul.mubr.bf16.gmra.mrb[0].mxu0 %v1914
    %v3236 = vpop.f32.mrb[0].mxu0
    %v3237 = vadd.f32 %v1016, %v3236
    %v3238 = vpop.f32.mrb[0].mxu0
    %v3239 = vadd.f32 %v1020, %v3238
    %v3240 = vpop.f32.mrb[0].mxu0
    %v3241 = vpop.f32.mrb[0].mxu0
    %3242 = vdwg.mxu0
    %3243 = vmatprep.subr.bf16.mxu0 %v2819
    %3244 = vmatpush1.bf16.msra.mxu0 %v2818
    %3245 = vmatprep.subr.bf16.mxu0 %v2827
    %3246 = vmatpush1.bf16.msra.mxu0 %v2826
    %3247 = vmatprep.subr.bf16.mxu0 %v2835
    %3248 = vmatpush1.bf16.msra.mxu0 %v2834
    %3249 = vmatprep.subr.bf16.mxu0 %v2843
    %3250 = vmatpush1.bf16.msra.mxu0 %v2842
    %3251 = vmatprep.subr.bf16.mxu0 %v2851
    %3252 = vmatpush1.bf16.msra.mxu0 %v2850
    %3253 = vmatprep.subr.bf16.mxu0 %v2859
    %3254 = vmatpush1.bf16.msra.mxu0 %v2858
    %3255 = vmatprep.subr.bf16.mxu0 %v2867
    %3256 = vmatpush1.bf16.msra.mxu0 %v2866
    %3257 = vmatprep.subr.bf16.mxu0 %v2875
    %3258 = vmatpush1.bf16.msra.mxu0 %v2874
    %3259 = vmatprep.subr.bf16.mxu0 %v2883
    %3260 = vmatpush1.bf16.msra.mxu0 %v2882
    %3261 = vmatprep.subr.bf16.mxu0 %v2891
    %3262 = vmatpush1.bf16.msra.mxu0 %v2890
    %3263 = vmatprep.subr.bf16.mxu0 %v2899
    %3264 = vmatpush1.bf16.msra.mxu0 %v2898
    %3265 = vmatprep.subr.bf16.mxu0 %v2907
    %3266 = vmatpush1.bf16.msra.mxu0 %v2906
    %3267 = vmatprep.subr.bf16.mxu0 %v2915
    %3268 = vmatpush1.bf16.msra.mxu0 %v2914
    %3269 = vmatprep.subr.bf16.mxu0 %v2923
    %3270 = vmatpush1.bf16.msra.mxu0 %v2922
    %3271 = vmatprep.subr.bf16.mxu0 %v2931
    %3272 = vmatpush1.bf16.msra.mxu0 %v2930
    %3273 = vmatprep.subr.bf16.mxu0 %v2939
    %3274 = vmatpush1.bf16.msra.mxu0 %v2938
    %3275 = vmatprep.mubr.bf16.mxu0 %v1917
    %3276 = vmatmul.mubr.bf16.gmra.mrb[0].mxu0 %v1916
    %v3277 = vpop.f32.mrb[0].mxu0
    %v3278 = vadd.f32 %v3237, %v3277
    %v3279 = vpop.f32.mrb[0].mxu0
    %v3280 = vadd.f32 %v3239, %v3279
    %v3281 = vpop.f32.mrb[0].mxu0
    %v3282 = vpop.f32.mrb[0].mxu0
    %3283 = vdwg.mxu0
    %3284 = vmatprep.subr.bf16.mxu0 %v2693
    %3285 = vmatpush1.bf16.msra.mxu0 %v2692
    %3286 = vmatprep.subr.bf16.mxu0 %v2701
    %3287 = vmatpush1.bf16.msra.mxu0 %v2700
    %3288 = vmatprep.subr.bf16.mxu0 %v2709
    %3289 = vmatpush1.bf16.msra.mxu0 %v2708
    %3290 = vmatprep.subr.bf16.mxu0 %v2717
    %3291 = vmatpush1.bf16.msra.mxu0 %v2716
    %3292 = vmatprep.subr.bf16.mxu0 %v2725
    %3293 = vmatpush1.bf16.msra.mxu0 %v2724
    %3294 = vmatprep.subr.bf16.mxu0 %v2733
    %3295 = vmatpush1.bf16.msra.mxu0 %v2732
    %3296 = vmatprep.subr.bf16.mxu0 %v2741
    %3297 = vmatpush1.bf16.msra.mxu0 %v2740
    %3298 = vmatprep.subr.bf16.mxu0 %v2749
    %3299 = vmatpush1.bf16.msra.mxu0 %v2748
    %3300 = vmatprep.subr.bf16.mxu0 %v2757
    %3301 = vmatpush1.bf16.msra.mxu0 %v2756
    %3302 = vmatprep.subr.bf16.mxu0 %v2765
    %3303 = vmatpush1.bf16.msra.mxu0 %v2764
    %3304 = vmatprep.subr.bf16.mxu0 %v2773
    %3305 = vmatpush1.bf16.msra.mxu0 %v2772
    %3306 = vmatprep.subr.bf16.mxu0 %v2781
    %3307 = vmatpush1.bf16.msra.mxu0 %v2780
    %3308 = vmatprep.subr.bf16.mxu0 %v2789
    %3309 = vmatpush1.bf16.msra.mxu0 %v2788
    %3310 = vmatprep.subr.bf16.mxu0 %v2797
    %3311 = vmatpush1.bf16.msra.mxu0 %v2796
    %3312 = vmatprep.subr.bf16.mxu0 %v2805
    %3313 = vmatpush1.bf16.msra.mxu0 %v2804
    %3314 = vmatprep.subr.bf16.mxu0 %v2813
    %3315 = vmatpush1.bf16.msra.mxu0 %v2812
    %3316 = vmatprep.mubr.bf16.mxu0 %v1915
    %3317 = vmatmul.mubr.bf16.gmra.mrb[0].mxu0 %v1914
    %v3318 = vpop.f32.mrb[0].mxu0
    %v3319 = vadd.f32 %v1024, %v3318
    %v3320 = vpop.f32.mrb[0].mxu0
    %v3321 = vadd.f32 %v1028, %v3320
    %v3322 = vpop.f32.mrb[0].mxu0
    %v3323 = vpop.f32.mrb[0].mxu0
    %3324 = vdwg.mxu0
    %3325 = vmatprep.subr.bf16.mxu0 %v2821
    %3326 = vmatpush1.bf16.msra.mxu0 %v2820
    %3327 = vmatprep.subr.bf16.mxu0 %v2829
    %3328 = vmatpush1.bf16.msra.mxu0 %v2828
    %3329 = vmatprep.subr.bf16.mxu0 %v2837
    %3330 = vmatpush1.bf16.msra.mxu0 %v2836
    %3331 = vmatprep.subr.bf16.mxu0 %v2845
    %3332 = vmatpush1.bf16.msra.mxu0 %v2844
    %3333 = vmatprep.subr.bf16.mxu0 %v2853
    %3334 = vmatpush1.bf16.msra.mxu0 %v2852
    %3335 = vmatprep.subr.bf16.mxu0 %v2861
    %3336 = vmatpush1.bf16.msra.mxu0 %v2860
    %3337 = vmatprep.subr.bf16.mxu0 %v2869
    %3338 = vmatpush1.bf16.msra.mxu0 %v2868
    %3339 = vmatprep.subr.bf16.mxu0 %v2877
    %3340 = vmatpush1.bf16.msra.mxu0 %v2876
    %3341 = vmatprep.subr.bf16.mxu0 %v2885
    %3342 = vmatpush1.bf16.msra.mxu0 %v2884
    %3343 = vmatprep.subr.bf16.mxu0 %v2893
    %3344 = vmatpush1.bf16.msra.mxu0 %v2892
    %3345 = vmatprep.subr.bf16.mxu0 %v2901
    %3346 = vmatpush1.bf16.msra.mxu0 %v2900
    %3347 = vmatprep.subr.bf16.mxu0 %v2909
    %3348 = vmatpush1.bf16.msra.mxu0 %v2908
    %3349 = vmatprep.subr.bf16.mxu0 %v2917
    %3350 = vmatpush1.bf16.msra.mxu0 %v2916
    %3351 = vmatprep.subr.bf16.mxu0 %v2925
    %3352 = vmatpush1.bf16.msra.mxu0 %v2924
    %3353 = vmatprep.subr.bf16.mxu0 %v2933
    %3354 = vmatpush1.bf16.msra.mxu0 %v2932
    %3355 = vmatprep.subr.bf16.mxu0 %v2941
    %3356 = vmatpush1.bf16.msra.mxu0 %v2940
    %3357 = vmatprep.mubr.bf16.mxu0 %v1917
    %3358 = vmatmul.mubr.bf16.gmra.mrb[0].mxu0 %v1916
    %v3359 = vpop.f32.mrb[0].mxu0
    %v3360 = vadd.f32 %v3319, %v3359
    %v3361 = vpop.f32.mrb[0].mxu0
    %v3362 = vadd.f32 %v3321, %v3361
    %v3363 = vpop.f32.mrb[0].mxu0
    %v3364 = vpop.f32.mrb[0].mxu0
    %3365 = vdwg.mxu0
    %3366 = vmatprep.subr.bf16.mxu0 %v2695
    %3367 = vmatpush1.bf16.msra.mxu0 %v2694
    %3368 = vmatprep.subr.bf16.mxu0 %v2703
    %3369 = vmatpush1.bf16.msra.mxu0 %v2702
    %3370 = vmatprep.subr.bf16.mxu0 %v2711
    %3371 = vmatpush1.bf16.msra.mxu0 %v2710
    %3372 = vmatprep.subr.bf16.mxu0 %v2719
    %3373 = vmatpush1.bf16.msra.mxu0 %v2718
    %3374 = vmatprep.subr.bf16.mxu0 %v2727
    %3375 = vmatpush1.bf16.msra.mxu0 %v2726
    %3376 = vmatprep.subr.bf16.mxu0 %v2735
    %3377 = vmatpush1.bf16.msra.mxu0 %v2734
    %3378 = vmatprep.subr.bf16.mxu0 %v2743
    %3379 = vmatpush1.bf16.msra.mxu0 %v2742
    %3380 = vmatprep.subr.bf16.mxu0 %v2751
    %3381 = vmatpush1.bf16.msra.mxu0 %v2750
    %3382 = vmatprep.subr.bf16.mxu0 %v2759
    %3383 = vmatpush1.bf16.msra.mxu0 %v2758
    %3384 = vmatprep.subr.bf16.mxu0 %v2767
    %3385 = vmatpush1.bf16.msra.mxu0 %v2766
    %3386 = vmatprep.subr.bf16.mxu0 %v2775
    %3387 = vmatpush1.bf16.msra.mxu0 %v2774
    %3388 = vmatprep.subr.bf16.mxu0 %v2783
    %3389 = vmatpush1.bf16.msra.mxu0 %v2782
    %3390 = vmatprep.subr.bf16.mxu0 %v2791
    %3391 = vmatpush1.bf16.msra.mxu0 %v2790
    %3392 = vmatprep.subr.bf16.mxu0 %v2799
    %3393 = vmatpush1.bf16.msra.mxu0 %v2798
    %3394 = vmatprep.subr.bf16.mxu0 %v2807
    %3395 = vmatpush1.bf16.msra.mxu0 %v2806
    %3396 = vmatprep.subr.bf16.mxu0 %v2815
    %3397 = vmatpush1.bf16.msra.mxu0 %v2814
    %3398 = vmatprep.mubr.bf16.mxu0 %v1915
    %3399 = vmatmul.mubr.bf16.gmra.mrb[0].mxu0 %v1914
    %v3400 = vpop.f32.mrb[0].mxu0
    %v3401 = vadd.f32 %v1032, %v3400
    %v3402 = vpop.f32.mrb[0].mxu0
    %v3403 = vadd.f32 %v1036, %v3402
    %v3404 = vpop.f32.mrb[0].mxu0
    %v3405 = vpop.f32.mrb[0].mxu0
    %3406 = vdwg.mxu0
    %3407 = vmatprep.subr.bf16.mxu0 %v2823
    %3408 = vmatpush1.bf16.msra.mxu0 %v2822
    %3409 = vmatprep.subr.bf16.mxu0 %v2831
    %3410 = vmatpush1.bf16.msra.mxu0 %v2830
    %3411 = vmatprep.subr.bf16.mxu0 %v2839
    %3412 = vmatpush1.bf16.msra.mxu0 %v2838
    %3413 = vmatprep.subr.bf16.mxu0 %v2847
    %3414 = vmatpush1.bf16.msra.mxu0 %v2846
    %3415 = vmatprep.subr.bf16.mxu0 %v2855
    %3416 = vmatpush1.bf16.msra.mxu0 %v2854
    %3417 = vmatprep.subr.bf16.mxu0 %v2863
    %3418 = vmatpush1.bf16.msra.mxu0 %v2862
    %3419 = vmatprep.subr.bf16.mxu0 %v2871
    %3420 = vmatpush1.bf16.msra.mxu0 %v2870
    %3421 = vmatprep.subr.bf16.mxu0 %v2879
    %3422 = vmatpush1.bf16.msra.mxu0 %v2878
    %3423 = vmatprep.subr.bf16.mxu0 %v2887
    %3424 = vmatpush1.bf16.msra.mxu0 %v2886
    %3425 = vmatprep.subr.bf16.mxu0 %v2895
    %3426 = vmatpush1.bf16.msra.mxu0 %v2894
    %3427 = vmatprep.subr.bf16.mxu0 %v2903
    %3428 = vmatpush1.bf16.msra.mxu0 %v2902
    %3429 = vmatprep.subr.bf16.mxu0 %v2911
    %3430 = vmatpush1.bf16.msra.mxu0 %v2910
    %3431 = vmatprep.subr.bf16.mxu0 %v2919
    %3432 = vmatpush1.bf16.msra.mxu0 %v2918
    %3433 = vmatprep.subr.bf16.mxu0 %v2927
    %3434 = vmatpush1.bf16.msra.mxu0 %v2926
    %3435 = vmatprep.subr.bf16.mxu0 %v2935
    %3436 = vmatpush1.bf16.msra.mxu0 %v2934
    %3437 = vmatprep.subr.bf16.mxu0 %v2943
    %3438 = vmatpush1.bf16.msra.mxu0 %v2942
    %3439 = vmatprep.mubr.bf16.mxu0 %v1917
    %3440 = vmatmul.mubr.bf16.gmra.mrb[0].mxu0 %v1916
    %v3441 = vpop.f32.mrb[0].mxu0
    %v3442 = vadd.f32 %v3401, %v3441
    %v3443 = vpop.f32.mrb[0].mxu0
    %v3444 = vadd.f32 %v3403, %v3443
    %v3445 = vpop.f32.mrb[0].mxu0
    %v3446 = vpop.f32.mrb[0].mxu0
    %3447 = vdwg.mxu0
    %3448 = vmatprep.subr.bf16.mxu0 %v2697
    %3449 = vmatpush1.bf16.msra.mxu0 %v2696
    %3450 = vmatprep.subr.bf16.mxu0 %v2705
    %3451 = vmatpush1.bf16.msra.mxu0 %v2704
    %3452 = vmatprep.subr.bf16.mxu0 %v2713
    %3453 = vmatpush1.bf16.msra.mxu0 %v2712
    %3454 = vmatprep.subr.bf16.mxu0 %v2721
    %3455 = vmatpush1.bf16.msra.mxu0 %v2720
    %3456 = vmatprep.subr.bf16.mxu0 %v2729
    %3457 = vmatpush1.bf16.msra.mxu0 %v2728
    %3458 = vmatprep.subr.bf16.mxu0 %v2737
    %3459 = vmatpush1.bf16.msra.mxu0 %v2736
    %3460 = vmatprep.subr.bf16.mxu0 %v2745
    %3461 = vmatpush1.bf16.msra.mxu0 %v2744
    %3462 = vmatprep.subr.bf16.mxu0 %v2753
    %3463 = vmatpush1.bf16.msra.mxu0 %v2752
    %3464 = vmatprep.subr.bf16.mxu0 %v2761
    %3465 = vmatpush1.bf16.msra.mxu0 %v2760
    %3466 = vmatprep.subr.bf16.mxu0 %v2769
    %3467 = vmatpush1.bf16.msra.mxu0 %v2768
    %3468 = vmatprep.subr.bf16.mxu0 %v2777
    %3469 = vmatpush1.bf16.msra.mxu0 %v2776
    %3470 = vmatprep.subr.bf16.mxu0 %v2785
    %3471 = vmatpush1.bf16.msra.mxu0 %v2784
    %3472 = vmatprep.subr.bf16.mxu0 %v2793
    %3473 = vmatpush1.bf16.msra.mxu0 %v2792
    %3474 = vmatprep.subr.bf16.mxu0 %v2801
    %3475 = vmatpush1.bf16.msra.mxu0 %v2800
    %3476 = vmatprep.subr.bf16.mxu0 %v2809
    %3477 = vmatpush1.bf16.msra.mxu0 %v2808
    %3478 = vmatprep.subr.bf16.mxu0 %v2817
    %3479 = vmatpush1.bf16.msra.mxu0 %v2816
    %3480 = vmatprep.mubr.bf16.mxu0 %v1915
    %3481 = vmatmul.mubr.bf16.gmra.mrb[0].mxu0 %v1914
    %v3482 = vpop.f32.mrb[0].mxu0
    %v3483 = vadd.f32 %v1040, %v3482
    %v3484 = vpop.f32.mrb[0].mxu0
    %v3485 = vadd.f32 %v1044, %v3484
    %v3486 = vpop.f32.mrb[0].mxu0
    %v3487 = vpop.f32.mrb[0].mxu0
    %3488 = vdwg.mxu0
    %3489 = vmatprep.subr.bf16.mxu0 %v2825
    %3490 = vmatpush1.bf16.msra.mxu0 %v2824
    %3491 = vmatprep.subr.bf16.mxu0 %v2833
    %3492 = vmatpush1.bf16.msra.mxu0 %v2832
    %3493 = vmatprep.subr.bf16.mxu0 %v2841
    %3494 = vmatpush1.bf16.msra.mxu0 %v2840
    %3495 = vmatprep.subr.bf16.mxu0 %v2849
    %3496 = vmatpush1.bf16.msra.mxu0 %v2848
    %3497 = vmatprep.subr.bf16.mxu0 %v2857
    %3498 = vmatpush1.bf16.msra.mxu0 %v2856
    %3499 = vmatprep.subr.bf16.mxu0 %v2865
    %3500 = vmatpush1.bf16.msra.mxu0 %v2864
    %3501 = vmatprep.subr.bf16.mxu0 %v2873
    %3502 = vmatpush1.bf16.msra.mxu0 %v2872
    %3503 = vmatprep.subr.bf16.mxu0 %v2881
    %3504 = vmatpush1.bf16.msra.mxu0 %v2880
    %3505 = vmatprep.subr.bf16.mxu0 %v2889
    %3506 = vmatpush1.bf16.msra.mxu0 %v2888
    %3507 = vmatprep.subr.bf16.mxu0 %v2897
    %3508 = vmatpush1.bf16.msra.mxu0 %v2896
    %3509 = vmatprep.subr.bf16.mxu0 %v2905
    %3510 = vmatpush1.bf16.msra.mxu0 %v2904
    %3511 = vmatprep.subr.bf16.mxu0 %v2913
    %3512 = vmatpush1.bf16.msra.mxu0 %v2912
    %3513 = vmatprep.subr.bf16.mxu0 %v2921
    %3514 = vmatpush1.bf16.msra.mxu0 %v2920
    %3515 = vmatprep.subr.bf16.mxu0 %v2929
    %3516 = vmatpush1.bf16.msra.mxu0 %v2928
    %3517 = vmatprep.subr.bf16.mxu0 %v2937
    %3518 = vmatpush1.bf16.msra.mxu0 %v2936
    %3519 = vmatprep.subr.bf16.mxu0 %v2945
    %3520 = vmatpush1.bf16.msra.mxu0 %v2944
    %3521 = vmatprep.mubr.bf16.mxu0 %v1917
    %3522 = vmatmul.mubr.bf16.gmra.mrb[0].mxu0 %v1916
    %v3523 = vpop.f32.mrb[0].mxu0
    %v3524 = vadd.f32 %v3483, %v3523
    %v3525 = vpop.f32.mrb[0].mxu0
    %v3526 = vadd.f32 %v3485, %v3525
    %v3527 = vpop.f32.mrb[0].mxu0
    %v3528 = vpop.f32.mrb[0].mxu0
    %3529 = vdwg.mxu0
    %v3530 = vmax.f32 %v3278, 0.0
    %v3531 = vmax.f32 %v3280, 0.0
    %v3532 = vmax.f32 %v3360, 0.0
    %v3533 = vmax.f32 %v3362, 0.0
    %v3534 = vmax.f32 %v3442, 0.0
    %v3535 = vmax.f32 %v3444, 0.0
    %v3536 = vmax.f32 %v3524, 0.0
    %v3537 = vmax.f32 %v3526, 0.0
    %v3538 = vpack.c.bf16 %v3530, %v3530
    %v3539 = vpack.c.bf16 %v3531, %v3531
    %v3540 = vpack.c.bf16 %v3532, %v3532
    %v3541 = vpack.c.bf16 %v3533, %v3533
    %v3542 = vpack.c.bf16 %v3534, %v3534
    %v3543 = vpack.c.bf16 %v3535, %v3535
    %v3544 = vpack.c.bf16 %v3536, %v3536
    %v3545 = vpack.c.bf16 %v3537, %v3537
    %v3546 = vld [vmem:[#allocation5] sm:$0xff]
    %v3547 = vld [vmem:[#allocation5 + $0x8] sm:$0xff]
    %v3548 = vld [vmem:[#allocation5 + $0x10] sm:$0xff]
    %v3549 = vld [vmem:[#allocation5 + $0x18] sm:$0xff]
    %v3550 = vld [vmem:[#allocation5 + $0x20] sm:$0xff]
    %v3551 = vld [vmem:[#allocation5 + $0x28] sm:$0xff]
    %v3552 = vld [vmem:[#allocation5 + $0x30] sm:$0xff]
    %v3553 = vld [vmem:[#allocation5 + $0x38] sm:$0xff]
    %v3554 = vld [vmem:[#allocation5 + $0x40] sm:$0xff]
    %v3555 = vld [vmem:[#allocation5 + $0x48] sm:$0xff]
    %v3556 = vld [vmem:[#allocation5 + $0x50] sm:$0xff]
    %v3557 = vld [vmem:[#allocation5 + $0x58] sm:$0xff]
    %v3558 = vld [vmem:[#allocation5 + $0x60] sm:$0xff]
    %v3559 = vld [vmem:[#allocation5 + $0x68] sm:$0xff]
    %v3560 = vld [vmem:[#allocation5 + $0x70] sm:$0xff]
    %v3561 = vld [vmem:[#allocation5 + $0x78] sm:$0xff]
    %v3562 = vld [vmem:[#allocation5 + $0x80] sm:$0xff]
    %v3563 = vld [vmem:[#allocation5 + $0x88] sm:$0xff]
    %v3564 = vld [vmem:[#allocation5 + $0x90] sm:$0xff]
    %v3565 = vld [vmem:[#allocation5 + $0x98] sm:$0xff]
    %v3566 = vld [vmem:[#allocation5 + $0xa0] sm:$0xff]
    %v3567 = vld [vmem:[#allocation5 + $0xa8] sm:$0xff]
    %v3568 = vld [vmem:[#allocation5 + $0xb0] sm:$0xff]
    %v3569 = vld [vmem:[#allocation5 + $0xb8] sm:$0xff]
    %v3570 = vld [vmem:[#allocation5 + $0xc0] sm:$0xff]
    %v3571 = vld [vmem:[#allocation5 + $0xc8] sm:$0xff]
    %v3572 = vld [vmem:[#allocation5 + $0xd0] sm:$0xff]
    %v3573 = vld [vmem:[#allocation5 + $0xd8] sm:$0xff]
    %v3574 = vld [vmem:[#allocation5 + $0xe0] sm:$0xff]
    %v3575 = vld [vmem:[#allocation5 + $0xe8] sm:$0xff]
    %v3576 = vld [vmem:[#allocation5 + $0xf0] sm:$0xff]
    %v3577 = vld [vmem:[#allocation5 + $0xf8] sm:$0xff]
    %v3578 = vld [vmem:[#allocation5 + $0x100] sm:$0xff]
    %v3579 = vld [vmem:[#allocation5 + $0x108] sm:$0xff]
    %v3580 = vld [vmem:[#allocation5 + $0x110] sm:$0xff]
    %v3581 = vld [vmem:[#allocation5 + $0x118] sm:$0xff]
    %v3582 = vld [vmem:[#allocation5 + $0x120] sm:$0xff]
    %v3583 = vld [vmem:[#allocation5 + $0x128] sm:$0xff]
    %v3584 = vld [vmem:[#allocation5 + $0x130] sm:$0xff]
    %v3585 = vld [vmem:[#allocation5 + $0x138] sm:$0xff]
    %v3586 = vld [vmem:[#allocation5 + $0x140] sm:$0xff]
    %v3587 = vld [vmem:[#allocation5 + $0x148] sm:$0xff]
    %v3588 = vld [vmem:[#allocation5 + $0x150] sm:$0xff]
    %v3589 = vld [vmem:[#allocation5 + $0x158] sm:$0xff]
    %v3590 = vld [vmem:[#allocation5 + $0x160] sm:$0xff]
    %v3591 = vld [vmem:[#allocation5 + $0x168] sm:$0xff]
    %v3592 = vld [vmem:[#allocation5 + $0x170] sm:$0xff]
    %v3593 = vld [vmem:[#allocation5 + $0x178] sm:$0xff]
    %v3594 = vld [vmem:[#allocation5 + $0x180] sm:$0xff]
    %v3595 = vld [vmem:[#allocation5 + $0x188] sm:$0xff]
    %v3596 = vld [vmem:[#allocation5 + $0x190] sm:$0xff]
    %v3597 = vld [vmem:[#allocation5 + $0x198] sm:$0xff]
    %v3598 = vld [vmem:[#allocation5 + $0x1a0] sm:$0xff]
    %v3599 = vld [vmem:[#allocation5 + $0x1a8] sm:$0xff]
    %v3600 = vld [vmem:[#allocation5 + $0x1b0] sm:$0xff]
    %v3601 = vld [vmem:[#allocation5 + $0x1b8] sm:$0xff]
    %v3602 = vld [vmem:[#allocation5 + $0x1c0] sm:$0xff]
    %v3603 = vld [vmem:[#allocation5 + $0x1c8] sm:$0xff]
    %v3604 = vld [vmem:[#allocation5 + $0x1d0] sm:$0xff]
    %v3605 = vld [vmem:[#allocation5 + $0x1d8] sm:$0xff]
    %v3606 = vld [vmem:[#allocation5 + $0x1e0] sm:$0xff]
    %v3607 = vld [vmem:[#allocation5 + $0x1e8] sm:$0xff]
    %v3608 = vld [vmem:[#allocation5 + $0x1f0] sm:$0xff]
    %v3609 = vld [vmem:[#allocation5 + $0x1f8] sm:$0xff]
    %v3610 = vld [vmem:[#allocation5 + $0x200] sm:$0xff]
    %v3611 = vld [vmem:[#allocation5 + $0x208] sm:$0xff]
    %v3612 = vld [vmem:[#allocation5 + $0x210] sm:$0xff]
    %v3613 = vld [vmem:[#allocation5 + $0x218] sm:$0xff]
    %v3614 = vld [vmem:[#allocation5 + $0x220] sm:$0xff]
    %v3615 = vld [vmem:[#allocation5 + $0x228] sm:$0xff]
    %v3616 = vld [vmem:[#allocation5 + $0x230] sm:$0xff]
    %v3617 = vld [vmem:[#allocation5 + $0x238] sm:$0xff]
    %v3618 = vld [vmem:[#allocation5 + $0x240] sm:$0xff]
    %v3619 = vld [vmem:[#allocation5 + $0x248] sm:$0xff]
    %v3620 = vld [vmem:[#allocation5 + $0x250] sm:$0xff]
    %v3621 = vld [vmem:[#allocation5 + $0x258] sm:$0xff]
    %v3622 = vld [vmem:[#allocation5 + $0x260] sm:$0xff]
    %v3623 = vld [vmem:[#allocation5 + $0x268] sm:$0xff]
    %v3624 = vld [vmem:[#allocation5 + $0x270] sm:$0xff]
    %v3625 = vld [vmem:[#allocation5 + $0x278] sm:$0xff]
    %v3626 = vld [vmem:[#allocation5 + $0x280] sm:$0xff]
    %v3627 = vld [vmem:[#allocation5 + $0x288] sm:$0xff]
    %v3628 = vld [vmem:[#allocation5 + $0x290] sm:$0xff]
    %v3629 = vld [vmem:[#allocation5 + $0x298] sm:$0xff]
    %v3630 = vld [vmem:[#allocation5 + $0x2a0] sm:$0xff]
    %v3631 = vld [vmem:[#allocation5 + $0x2a8] sm:$0xff]
    %v3632 = vld [vmem:[#allocation5 + $0x2b0] sm:$0xff]
    %v3633 = vld [vmem:[#allocation5 + $0x2b8] sm:$0xff]
    %v3634 = vld [vmem:[#allocation5 + $0x2c0] sm:$0xff]
    %v3635 = vld [vmem:[#allocation5 + $0x2c8] sm:$0xff]
    %v3636 = vld [vmem:[#allocation5 + $0x2d0] sm:$0xff]
    %v3637 = vld [vmem:[#allocation5 + $0x2d8] sm:$0xff]
    %v3638 = vld [vmem:[#allocation5 + $0x2e0] sm:$0xff]
    %v3639 = vld [vmem:[#allocation5 + $0x2e8] sm:$0xff]
    %v3640 = vld [vmem:[#allocation5 + $0x2f0] sm:$0xff]
    %v3641 = vld [vmem:[#allocation5 + $0x2f8] sm:$0xff]
    %v3642 = vld [vmem:[#allocation5 + $0x300] sm:$0xff]
    %v3643 = vld [vmem:[#allocation5 + $0x308] sm:$0xff]
    %v3644 = vld [vmem:[#allocation5 + $0x310] sm:$0xff]
    %v3645 = vld [vmem:[#allocation5 + $0x318] sm:$0xff]
    %v3646 = vld [vmem:[#allocation5 + $0x320] sm:$0xff]
    %v3647 = vld [vmem:[#allocation5 + $0x328] sm:$0xff]
    %v3648 = vld [vmem:[#allocation5 + $0x330] sm:$0xff]
    %v3649 = vld [vmem:[#allocation5 + $0x338] sm:$0xff]
    %v3650 = vld [vmem:[#allocation5 + $0x340] sm:$0xff]
    %v3651 = vld [vmem:[#allocation5 + $0x348] sm:$0xff]
    %v3652 = vld [vmem:[#allocation5 + $0x350] sm:$0xff]
    %v3653 = vld [vmem:[#allocation5 + $0x358] sm:$0xff]
    %v3654 = vld [vmem:[#allocation5 + $0x360] sm:$0xff]
    %v3655 = vld [vmem:[#allocation5 + $0x368] sm:$0xff]
    %v3656 = vld [vmem:[#allocation5 + $0x370] sm:$0xff]
    %v3657 = vld [vmem:[#allocation5 + $0x378] sm:$0xff]
    %v3658 = vld [vmem:[#allocation5 + $0x380] sm:$0xff]
    %v3659 = vld [vmem:[#allocation5 + $0x388] sm:$0xff]
    %v3660 = vld [vmem:[#allocation5 + $0x390] sm:$0xff]
    %v3661 = vld [vmem:[#allocation5 + $0x398] sm:$0xff]
    %v3662 = vld [vmem:[#allocation5 + $0x3a0] sm:$0xff]
    %v3663 = vld [vmem:[#allocation5 + $0x3a8] sm:$0xff]
    %v3664 = vld [vmem:[#allocation5 + $0x3b0] sm:$0xff]
    %v3665 = vld [vmem:[#allocation5 + $0x3b8] sm:$0xff]
    %v3666 = vld [vmem:[#allocation5 + $0x3c0] sm:$0xff]
    %v3667 = vld [vmem:[#allocation5 + $0x3c8] sm:$0xff]
    %v3668 = vld [vmem:[#allocation5 + $0x3d0] sm:$0xff]
    %v3669 = vld [vmem:[#allocation5 + $0x3d8] sm:$0xff]
    %v3670 = vld [vmem:[#allocation5 + $0x3e0] sm:$0xff]
    %v3671 = vld [vmem:[#allocation5 + $0x3e8] sm:$0xff]
    %v3672 = vld [vmem:[#allocation5 + $0x3f0] sm:$0xff]
    %v3673 = vld [vmem:[#allocation5 + $0x3f8] sm:$0xff]
    %v3674 = vld [vmem:[#allocation5 + $0x400] sm:$0xff]
    %v3675 = vld [vmem:[#allocation5 + $0x408] sm:$0xff]
    %v3676 = vld [vmem:[#allocation5 + $0x410] sm:$0xff]
    %v3677 = vld [vmem:[#allocation5 + $0x418] sm:$0xff]
    %v3678 = vld [vmem:[#allocation5 + $0x420] sm:$0xff]
    %v3679 = vld [vmem:[#allocation5 + $0x428] sm:$0xff]
    %v3680 = vld [vmem:[#allocation5 + $0x430] sm:$0xff]
    %v3681 = vld [vmem:[#allocation5 + $0x438] sm:$0xff]
    %v3682 = vld [vmem:[#allocation5 + $0x440] sm:$0xff]
    %v3683 = vld [vmem:[#allocation5 + $0x448] sm:$0xff]
    %v3684 = vld [vmem:[#allocation5 + $0x450] sm:$0xff]
    %v3685 = vld [vmem:[#allocation5 + $0x458] sm:$0xff]
    %v3686 = vld [vmem:[#allocation5 + $0x460] sm:$0xff]
    %v3687 = vld [vmem:[#allocation5 + $0x468] sm:$0xff]
    %v3688 = vld [vmem:[#allocation5 + $0x470] sm:$0xff]
    %v3689 = vld [vmem:[#allocation5 + $0x478] sm:$0xff]
    %v3690 = vld [vmem:[#allocation5 + $0x480] sm:$0xff]
    %v3691 = vld [vmem:[#allocation5 + $0x488] sm:$0xff]
    %v3692 = vld [vmem:[#allocation5 + $0x490] sm:$0xff]
    %v3693 = vld [vmem:[#allocation5 + $0x498] sm:$0xff]
    %v3694 = vld [vmem:[#allocation5 + $0x4a0] sm:$0xff]
    %v3695 = vld [vmem:[#allocation5 + $0x4a8] sm:$0xff]
    %v3696 = vld [vmem:[#allocation5 + $0x4b0] sm:$0xff]
    %v3697 = vld [vmem:[#allocation5 + $0x4b8] sm:$0xff]
    %v3698 = vld [vmem:[#allocation5 + $0x4c0] sm:$0xff]
    %v3699 = vld [vmem:[#allocation5 + $0x4c8] sm:$0xff]
    %v3700 = vld [vmem:[#allocation5 + $0x4d0] sm:$0xff]
    %v3701 = vld [vmem:[#allocation5 + $0x4d8] sm:$0xff]
    %v3702 = vld [vmem:[#allocation5 + $0x4e0] sm:$0xff]
    %v3703 = vld [vmem:[#allocation5 + $0x4e8] sm:$0xff]
    %v3704 = vld [vmem:[#allocation5 + $0x4f0] sm:$0xff]
    %v3705 = vld [vmem:[#allocation5 + $0x4f8] sm:$0xff]
    %v3706 = vld [vmem:[#allocation5 + $0x500] sm:$0xff]
    %v3707 = vld [vmem:[#allocation5 + $0x508] sm:$0xff]
    %v3708 = vld [vmem:[#allocation5 + $0x510] sm:$0xff]
    %v3709 = vld [vmem:[#allocation5 + $0x518] sm:$0xff]
    %v3710 = vld [vmem:[#allocation5 + $0x520] sm:$0xff]
    %v3711 = vld [vmem:[#allocation5 + $0x528] sm:$0xff]
    %v3712 = vld [vmem:[#allocation5 + $0x530] sm:$0xff]
    %v3713 = vld [vmem:[#allocation5 + $0x538] sm:$0xff]
    %v3714 = vld [vmem:[#allocation5 + $0x540] sm:$0xff]
    %v3715 = vld [vmem:[#allocation5 + $0x548] sm:$0xff]
    %v3716 = vld [vmem:[#allocation5 + $0x550] sm:$0xff]
    %v3717 = vld [vmem:[#allocation5 + $0x558] sm:$0xff]
    %v3718 = vld [vmem:[#allocation5 + $0x560] sm:$0xff]
    %v3719 = vld [vmem:[#allocation5 + $0x568] sm:$0xff]
    %v3720 = vld [vmem:[#allocation5 + $0x570] sm:$0xff]
    %v3721 = vld [vmem:[#allocation5 + $0x578] sm:$0xff]
    %v3722 = vld [vmem:[#allocation5 + $0x580] sm:$0xff]
    %v3723 = vld [vmem:[#allocation5 + $0x588] sm:$0xff]
    %v3724 = vld [vmem:[#allocation5 + $0x590] sm:$0xff]
    %v3725 = vld [vmem:[#allocation5 + $0x598] sm:$0xff]
    %v3726 = vld [vmem:[#allocation5 + $0x5a0] sm:$0xff]
    %v3727 = vld [vmem:[#allocation5 + $0x5a8] sm:$0xff]
    %v3728 = vld [vmem:[#allocation5 + $0x5b0] sm:$0xff]
    %v3729 = vld [vmem:[#allocation5 + $0x5b8] sm:$0xff]
    %v3730 = vld [vmem:[#allocation5 + $0x5c0] sm:$0xff]
    %v3731 = vld [vmem:[#allocation5 + $0x5c8] sm:$0xff]
    %v3732 = vld [vmem:[#allocation5 + $0x5d0] sm:$0xff]
    %v3733 = vld [vmem:[#allocation5 + $0x5d8] sm:$0xff]
    %v3734 = vld [vmem:[#allocation5 + $0x5e0] sm:$0xff]
    %v3735 = vld [vmem:[#allocation5 + $0x5e8] sm:$0xff]
    %v3736 = vld [vmem:[#allocation5 + $0x5f0] sm:$0xff]
    %v3737 = vld [vmem:[#allocation5 + $0x5f8] sm:$0xff]
    %v3738 = vld [vmem:[#allocation5 + $0x600] sm:$0xff]
    %v3739 = vld [vmem:[#allocation5 + $0x608] sm:$0xff]
    %v3740 = vld [vmem:[#allocation5 + $0x610] sm:$0xff]
    %v3741 = vld [vmem:[#allocation5 + $0x618] sm:$0xff]
    %v3742 = vld [vmem:[#allocation5 + $0x620] sm:$0xff]
    %v3743 = vld [vmem:[#allocation5 + $0x628] sm:$0xff]
    %v3744 = vld [vmem:[#allocation5 + $0x630] sm:$0xff]
    %v3745 = vld [vmem:[#allocation5 + $0x638] sm:$0xff]
    %v3746 = vld [vmem:[#allocation5 + $0x640] sm:$0xff]
    %v3747 = vld [vmem:[#allocation5 + $0x648] sm:$0xff]
    %v3748 = vld [vmem:[#allocation5 + $0x650] sm:$0xff]
    %v3749 = vld [vmem:[#allocation5 + $0x658] sm:$0xff]
    %v3750 = vld [vmem:[#allocation5 + $0x660] sm:$0xff]
    %v3751 = vld [vmem:[#allocation5 + $0x668] sm:$0xff]
    %v3752 = vld [vmem:[#allocation5 + $0x670] sm:$0xff]
    %v3753 = vld [vmem:[#allocation5 + $0x678] sm:$0xff]
    %v3754 = vld [vmem:[#allocation5 + $0x680] sm:$0xff]
    %v3755 = vld [vmem:[#allocation5 + $0x688] sm:$0xff]
    %v3756 = vld [vmem:[#allocation5 + $0x690] sm:$0xff]
    %v3757 = vld [vmem:[#allocation5 + $0x698] sm:$0xff]
    %v3758 = vld [vmem:[#allocation5 + $0x6a0] sm:$0xff]
    %v3759 = vld [vmem:[#allocation5 + $0x6a8] sm:$0xff]
    %v3760 = vld [vmem:[#allocation5 + $0x6b0] sm:$0xff]
    %v3761 = vld [vmem:[#allocation5 + $0x6b8] sm:$0xff]
    %v3762 = vld [vmem:[#allocation5 + $0x6c0] sm:$0xff]
    %v3763 = vld [vmem:[#allocation5 + $0x6c8] sm:$0xff]
    %v3764 = vld [vmem:[#allocation5 + $0x6d0] sm:$0xff]
    %v3765 = vld [vmem:[#allocation5 + $0x6d8] sm:$0xff]
    %v3766 = vld [vmem:[#allocation5 + $0x6e0] sm:$0xff]
    %v3767 = vld [vmem:[#allocation5 + $0x6e8] sm:$0xff]
    %v3768 = vld [vmem:[#allocation5 + $0x6f0] sm:$0xff]
    %v3769 = vld [vmem:[#allocation5 + $0x6f8] sm:$0xff]
    %v3770 = vld [vmem:[#allocation5 + $0x700] sm:$0xff]
    %v3771 = vld [vmem:[#allocation5 + $0x708] sm:$0xff]
    %v3772 = vld [vmem:[#allocation5 + $0x710] sm:$0xff]
    %v3773 = vld [vmem:[#allocation5 + $0x718] sm:$0xff]
    %v3774 = vld [vmem:[#allocation5 + $0x720] sm:$0xff]
    %v3775 = vld [vmem:[#allocation5 + $0x728] sm:$0xff]
    %v3776 = vld [vmem:[#allocation5 + $0x730] sm:$0xff]
    %v3777 = vld [vmem:[#allocation5 + $0x738] sm:$0xff]
    %v3778 = vld [vmem:[#allocation5 + $0x740] sm:$0xff]
    %v3779 = vld [vmem:[#allocation5 + $0x748] sm:$0xff]
    %v3780 = vld [vmem:[#allocation5 + $0x750] sm:$0xff]
    %v3781 = vld [vmem:[#allocation5 + $0x758] sm:$0xff]
    %v3782 = vld [vmem:[#allocation5 + $0x760] sm:$0xff]
    %v3783 = vld [vmem:[#allocation5 + $0x768] sm:$0xff]
    %v3784 = vld [vmem:[#allocation5 + $0x770] sm:$0xff]
    %v3785 = vld [vmem:[#allocation5 + $0x778] sm:$0xff]
    %v3786 = vld [vmem:[#allocation5 + $0x780] sm:$0xff]
    %v3787 = vld [vmem:[#allocation5 + $0x788] sm:$0xff]
    %v3788 = vld [vmem:[#allocation5 + $0x790] sm:$0xff]
    %v3789 = vld [vmem:[#allocation5 + $0x798] sm:$0xff]
    %v3790 = vld [vmem:[#allocation5 + $0x7a0] sm:$0xff]
    %v3791 = vld [vmem:[#allocation5 + $0x7a8] sm:$0xff]
    %v3792 = vld [vmem:[#allocation5 + $0x7b0] sm:$0xff]
    %v3793 = vld [vmem:[#allocation5 + $0x7b8] sm:$0xff]
    %v3794 = vld [vmem:[#allocation5 + $0x7c0] sm:$0xff]
    %v3795 = vld [vmem:[#allocation5 + $0x7c8] sm:$0xff]
    %v3796 = vld [vmem:[#allocation5 + $0x7d0] sm:$0xff]
    %v3797 = vld [vmem:[#allocation5 + $0x7d8] sm:$0xff]
    %v3798 = vld [vmem:[#allocation5 + $0x7e0] sm:$0xff]
    %v3799 = vld [vmem:[#allocation5 + $0x7e8] sm:$0xff]
    %v3800 = vld [vmem:[#allocation5 + $0x7f0] sm:$0xff]
    %v3801 = vld [vmem:[#allocation5 + $0x7f8] sm:$0xff]
    %v3802 = vld [vmem:[%s4] sm:$0xf]
    %v3804 = vlaneseq
    %v3805 = vshrl.u32 %v3804, 7
    %v3806 = vsub.s32 0, %v3805
    %v3807 = vrot.slane %v3802, %v3806
    %v3808 = vlaneseq
    %v3809 = vshrl.u32 %v3808, 7
    %v3810 = vsub.s32 1, %v3809
    %v3811 = vrot.slane %v3802, %v3810
    %v3812 = vlaneseq
    %v3813 = vshrl.u32 %v3812, 7
    %v3814 = vsub.s32 2, %v3813
    %v3815 = vrot.slane %v3802, %v3814
    %v3816 = vlaneseq
    %v3817 = vshrl.u32 %v3816, 7
    %v3818 = vsub.s32 3, %v3817
    %v3819 = vrot.slane %v3802, %v3818
    %v4080 = vunpack.c.l.b16 %v3546
    %v4081 = vunpack.c.h.b16 %v3546
    %v4082 = vunpack.c.l.b16 %v3547
    %v4083 = vunpack.c.h.b16 %v3547
    %v4084 = vunpack.c.l.b16 %v3548
    %v4085 = vunpack.c.h.b16 %v3548
    %v4086 = vunpack.c.l.b16 %v3549
    %v4087 = vunpack.c.h.b16 %v3549
    %v4088 = vunpack.c.l.b16 %v3550
    %v4089 = vunpack.c.h.b16 %v3550
    %v4090 = vunpack.c.l.b16 %v3551
    %v4091 = vunpack.c.h.b16 %v3551
    %v4092 = vunpack.c.l.b16 %v3552
    %v4093 = vunpack.c.h.b16 %v3552
    %v4094 = vunpack.c.l.b16 %v3553
    %v4095 = vunpack.c.h.b16 %v3553
    %v4096 = vunpack.c.l.b16 %v3554
    %v4097 = vunpack.c.h.b16 %v3554
    %v4098 = vunpack.c.l.b16 %v3555
    %v4099 = vunpack.c.h.b16 %v3555
    %v4100 = vunpack.c.l.b16 %v3556
    %v4101 = vunpack.c.h.b16 %v3556
    %v4102 = vunpack.c.l.b16 %v3557
    %v4103 = vunpack.c.h.b16 %v3557
    %v4104 = vunpack.c.l.b16 %v3558
    %v4105 = vunpack.c.h.b16 %v3558
    %v4106 = vunpack.c.l.b16 %v3559
    %v4107 = vunpack.c.h.b16 %v3559
    %v4108 = vunpack.c.l.b16 %v3560
    %v4109 = vunpack.c.h.b16 %v3560
    %v4110 = vunpack.c.l.b16 %v3561
    %v4111 = vunpack.c.h.b16 %v3561
    %v4112 = vunpack.c.l.b16 %v3562
    %v4113 = vunpack.c.h.b16 %v3562
    %v4114 = vunpack.c.l.b16 %v3563
    %v4115 = vunpack.c.h.b16 %v3563
    %v4116 = vunpack.c.l.b16 %v3564
    %v4117 = vunpack.c.h.b16 %v3564
    %v4118 = vunpack.c.l.b16 %v3565
    %v4119 = vunpack.c.h.b16 %v3565
    %v4120 = vunpack.c.l.b16 %v3566
    %v4121 = vunpack.c.h.b16 %v3566
    %v4122 = vunpack.c.l.b16 %v3567
    %v4123 = vunpack.c.h.b16 %v3567
    %v4124 = vunpack.c.l.b16 %v3568
    %v4125 = vunpack.c.h.b16 %v3568
    %v4126 = vunpack.c.l.b16 %v3569
    %v4127 = vunpack.c.h.b16 %v3569
    %v4128 = vunpack.c.l.b16 %v3570
    %v4129 = vunpack.c.h.b16 %v3570
    %v4130 = vunpack.c.l.b16 %v3571
    %v4131 = vunpack.c.h.b16 %v3571
    %v4132 = vunpack.c.l.b16 %v3572
    %v4133 = vunpack.c.h.b16 %v3572
    %v4134 = vunpack.c.l.b16 %v3573
    %v4135 = vunpack.c.h.b16 %v3573
    %v4136 = vunpack.c.l.b16 %v3574
    %v4137 = vunpack.c.h.b16 %v3574
    %v4138 = vunpack.c.l.b16 %v3575
    %v4139 = vunpack.c.h.b16 %v3575
    %v4140 = vunpack.c.l.b16 %v3576
    %v4141 = vunpack.c.h.b16 %v3576
    %v4142 = vunpack.c.l.b16 %v3577
    %v4143 = vunpack.c.h.b16 %v3577
    %v4144 = vunpack.c.l.b16 %v3578
    %v4145 = vunpack.c.h.b16 %v3578
    %v4146 = vunpack.c.l.b16 %v3579
    %v4147 = vunpack.c.h.b16 %v3579
    %v4148 = vunpack.c.l.b16 %v3580
    %v4149 = vunpack.c.h.b16 %v3580
    %v4150 = vunpack.c.l.b16 %v3581
    %v4151 = vunpack.c.h.b16 %v3581
    %v4152 = vunpack.c.l.b16 %v3582
    %v4153 = vunpack.c.h.b16 %v3582
    %v4154 = vunpack.c.l.b16 %v3583
    %v4155 = vunpack.c.h.b16 %v3583
    %v4156 = vunpack.c.l.b16 %v3584
    %v4157 = vunpack.c.h.b16 %v3584
    %v4158 = vunpack.c.l.b16 %v3585
    %v4159 = vunpack.c.h.b16 %v3585
    %v4160 = vunpack.c.l.b16 %v3586
    %v4161 = vunpack.c.h.b16 %v3586
    %v4162 = vunpack.c.l.b16 %v3587
    %v4163 = vunpack.c.h.b16 %v3587
    %v4164 = vunpack.c.l.b16 %v3588
    %v4165 = vunpack.c.h.b16 %v3588
    %v4166 = vunpack.c.l.b16 %v3589
    %v4167 = vunpack.c.h.b16 %v3589
    %v4168 = vunpack.c.l.b16 %v3590
    %v4169 = vunpack.c.h.b16 %v3590
    %v4170 = vunpack.c.l.b16 %v3591
    %v4171 = vunpack.c.h.b16 %v3591
    %v4172 = vunpack.c.l.b16 %v3592
    %v4173 = vunpack.c.h.b16 %v3592
    %v4174 = vunpack.c.l.b16 %v3593
    %v4175 = vunpack.c.h.b16 %v3593
    %v4176 = vunpack.c.l.b16 %v3594
    %v4177 = vunpack.c.h.b16 %v3594
    %v4178 = vunpack.c.l.b16 %v3595
    %v4179 = vunpack.c.h.b16 %v3595
    %v4180 = vunpack.c.l.b16 %v3596
    %v4181 = vunpack.c.h.b16 %v3596
    %v4182 = vunpack.c.l.b16 %v3597
    %v4183 = vunpack.c.h.b16 %v3597
    %v4184 = vunpack.c.l.b16 %v3598
    %v4185 = vunpack.c.h.b16 %v3598
    %v4186 = vunpack.c.l.b16 %v3599
    %v4187 = vunpack.c.h.b16 %v3599
    %v4188 = vunpack.c.l.b16 %v3600
    %v4189 = vunpack.c.h.b16 %v3600
    %v4190 = vunpack.c.l.b16 %v3601
    %v4191 = vunpack.c.h.b16 %v3601
    %v4192 = vunpack.c.l.b16 %v3602
    %v4193 = vunpack.c.h.b16 %v3602
    %v4194 = vunpack.c.l.b16 %v3603
    %v4195 = vunpack.c.h.b16 %v3603
    %v4196 = vunpack.c.l.b16 %v3604
    %v4197 = vunpack.c.h.b16 %v3604
    %v4198 = vunpack.c.l.b16 %v3605
    %v4199 = vunpack.c.h.b16 %v3605
    %v4200 = vunpack.c.l.b16 %v3606
    %v4201 = vunpack.c.h.b16 %v3606
    %v4202 = vunpack.c.l.b16 %v3607
    %v4203 = vunpack.c.h.b16 %v3607
    %v4204 = vunpack.c.l.b16 %v3608
    %v4205 = vunpack.c.h.b16 %v3608
    %v4206 = vunpack.c.l.b16 %v3609
    %v4207 = vunpack.c.h.b16 %v3609
    %v4208 = vunpack.c.l.b16 %v3610
    %v4209 = vunpack.c.h.b16 %v3610
    %v4210 = vunpack.c.l.b16 %v3611
    %v4211 = vunpack.c.h.b16 %v3611
    %v4212 = vunpack.c.l.b16 %v3612
    %v4213 = vunpack.c.h.b16 %v3612
    %v4214 = vunpack.c.l.b16 %v3613
    %v4215 = vunpack.c.h.b16 %v3613
    %v4216 = vunpack.c.l.b16 %v3614
    %v4217 = vunpack.c.h.b16 %v3614
    %v4218 = vunpack.c.l.b16 %v3615
    %v4219 = vunpack.c.h.b16 %v3615
    %v4220 = vunpack.c.l.b16 %v3616
    %v4221 = vunpack.c.h.b16 %v3616
    %v4222 = vunpack.c.l.b16 %v3617
    %v4223 = vunpack.c.h.b16 %v3617
    %v4224 = vunpack.c.l.b16 %v3618
    %v4225 = vunpack.c.h.b16 %v3618
    %v4226 = vunpack.c.l.b16 %v3619
    %v4227 = vunpack.c.h.b16 %v3619
    %v4228 = vunpack.c.l.b16 %v3620
    %v4229 = vunpack.c.h.b16 %v3620
    %v4230 = vunpack.c.l.b16 %v3621
    %v4231 = vunpack.c.h.b16 %v3621
    %v4232 = vunpack.c.l.b16 %v3622
    %v4233 = vunpack.c.h.b16 %v3622
    %v4234 = vunpack.c.l.b16 %v3623
    %v4235 = vunpack.c.h.b16 %v3623
    %v4236 = vunpack.c.l.b16 %v3624
    %v4237 = vunpack.c.h.b16 %v3624
    %v4238 = vunpack.c.l.b16 %v3625
    %v4239 = vunpack.c.h.b16 %v3625
    %v4240 = vunpack.c.l.b16 %v3626
    %v4241 = vunpack.c.h.b16 %v3626
    %v4242 = vunpack.c.l.b16 %v3627
    %v4243 = vunpack.c.h.b16 %v3627
    %v4244 = vunpack.c.l.b16 %v3628
    %v4245 = vunpack.c.h.b16 %v3628
    %v4246 = vunpack.c.l.b16 %v3629
    %v4247 = vunpack.c.h.b16 %v3629
    %v4248 = vunpack.c.l.b16 %v3630
    %v4249 = vunpack.c.h.b16 %v3630
    %v4250 = vunpack.c.l.b16 %v3631
    %v4251 = vunpack.c.h.b16 %v3631
    %v4252 = vunpack.c.l.b16 %v3632
    %v4253 = vunpack.c.h.b16 %v3632
    %v4254 = vunpack.c.l.b16 %v3633
    %v4255 = vunpack.c.h.b16 %v3633
    %v4256 = vunpack.c.l.b16 %v3634
    %v4257 = vunpack.c.h.b16 %v3634
    %v4258 = vunpack.c.l.b16 %v3635
    %v4259 = vunpack.c.h.b16 %v3635
    %v4260 = vunpack.c.l.b16 %v3636
    %v4261 = vunpack.c.h.b16 %v3636
    %v4262 = vunpack.c.l.b16 %v3637
    %v4263 = vunpack.c.h.b16 %v3637
    %v4264 = vunpack.c.l.b16 %v3638
    %v4265 = vunpack.c.h.b16 %v3638
    %v4266 = vunpack.c.l.b16 %v3639
    %v4267 = vunpack.c.h.b16 %v3639
    %v4268 = vunpack.c.l.b16 %v3640
    %v4269 = vunpack.c.h.b16 %v3640
    %v4270 = vunpack.c.l.b16 %v3641
    %v4271 = vunpack.c.h.b16 %v3641
    %v4272 = vunpack.c.l.b16 %v3642
    %v4273 = vunpack.c.h.b16 %v3642
    %v4274 = vunpack.c.l.b16 %v3643
    %v4275 = vunpack.c.h.b16 %v3643
    %v4276 = vunpack.c.l.b16 %v3644
    %v4277 = vunpack.c.h.b16 %v3644
    %v4278 = vunpack.c.l.b16 %v3645
    %v4279 = vunpack.c.h.b16 %v3645
    %v4280 = vunpack.c.l.b16 %v3646
    %v4281 = vunpack.c.h.b16 %v3646
    %v4282 = vunpack.c.l.b16 %v3647
    %v4283 = vunpack.c.h.b16 %v3647
    %v4284 = vunpack.c.l.b16 %v3648
    %v4285 = vunpack.c.h.b16 %v3648
    %v4286 = vunpack.c.l.b16 %v3649
    %v4287 = vunpack.c.h.b16 %v3649
    %v4288 = vunpack.c.l.b16 %v3650
    %v4289 = vunpack.c.h.b16 %v3650
    %v4290 = vunpack.c.l.b16 %v3651
    %v4291 = vunpack.c.h.b16 %v3651
    %v4292 = vunpack.c.l.b16 %v3652
    %v4293 = vunpack.c.h.b16 %v3652
    %v4294 = vunpack.c.l.b16 %v3653
    %v4295 = vunpack.c.h.b16 %v3653
    %v4296 = vunpack.c.l.b16 %v3654
    %v4297 = vunpack.c.h.b16 %v3654
    %v4298 = vunpack.c.l.b16 %v3655
    %v4299 = vunpack.c.h.b16 %v3655
    %v4300 = vunpack.c.l.b16 %v3656
    %v4301 = vunpack.c.h.b16 %v3656
    %v4302 = vunpack.c.l.b16 %v3657
    %v4303 = vunpack.c.h.b16 %v3657
    %v4304 = vunpack.c.l.b16 %v3658
    %v4305 = vunpack.c.h.b16 %v3658
    %v4306 = vunpack.c.l.b16 %v3659
    %v4307 = vunpack.c.h.b16 %v3659
    %v4308 = vunpack.c.l.b16 %v3660
    %v4309 = vunpack.c.h.b16 %v3660
    %v4310 = vunpack.c.l.b16 %v3661
    %v4311 = vunpack.c.h.b16 %v3661
    %v4312 = vunpack.c.l.b16 %v3662
    %v4313 = vunpack.c.h.b16 %v3662
    %v4314 = vunpack.c.l.b16 %v3663
    %v4315 = vunpack.c.h.b16 %v3663
    %v4316 = vunpack.c.l.b16 %v3664
    %v4317 = vunpack.c.h.b16 %v3664
    %v4318 = vunpack.c.l.b16 %v3665
    %v4319 = vunpack.c.h.b16 %v3665
    %v4320 = vunpack.c.l.b16 %v3666
    %v4321 = vunpack.c.h.b16 %v3666
    %v4322 = vunpack.c.l.b16 %v3667
    %v4323 = vunpack.c.h.b16 %v3667
    %v4324 = vunpack.c.l.b16 %v3668
    %v4325 = vunpack.c.h.b16 %v3668
    %v4326 = vunpack.c.l.b16 %v3669
    %v4327 = vunpack.c.h.b16 %v3669
    %v4328 = vunpack.c.l.b16 %v3670
    %v4329 = vunpack.c.h.b16 %v3670
    %v4330 = vunpack.c.l.b16 %v3671
    %v4331 = vunpack.c.h.b16 %v3671
    %v4332 = vunpack.c.l.b16 %v3672
    %v4333 = vunpack.c.h.b16 %v3672
    %v4334 = vunpack.c.l.b16 %v3673
    %v4335 = vunpack.c.h.b16 %v3673
    %v4336 = vunpack.c.l.b16 %v3674
    %v4337 = vunpack.c.h.b16 %v3674
    %v4338 = vunpack.c.l.b16 %v3675
    %v4339 = vunpack.c.h.b16 %v3675
    %v4340 = vunpack.c.l.b16 %v3676
    %v4341 = vunpack.c.h.b16 %v3676
    %v4342 = vunpack.c.l.b16 %v3677
    %v4343 = vunpack.c.h.b16 %v3677
    %v4344 = vunpack.c.l.b16 %v3678
    %v4345 = vunpack.c.h.b16 %v3678
    %v4346 = vunpack.c.l.b16 %v3679
    %v4347 = vunpack.c.h.b16 %v3679
    %v4348 = vunpack.c.l.b16 %v3680
    %v4349 = vunpack.c.h.b16 %v3680
    %v4350 = vunpack.c.l.b16 %v3681
    %v4351 = vunpack.c.h.b16 %v3681
    %v4352 = vunpack.c.l.b16 %v3682
    %v4353 = vunpack.c.h.b16 %v3682
    %v4354 = vunpack.c.l.b16 %v3683
    %v4355 = vunpack.c.h.b16 %v3683
    %v4356 = vunpack.c.l.b16 %v3684
    %v4357 = vunpack.c.h.b16 %v3684
    %v4358 = vunpack.c.l.b16 %v3685
    %v4359 = vunpack.c.h.b16 %v3685
    %v4360 = vunpack.c.l.b16 %v3686
    %v4361 = vunpack.c.h.b16 %v3686
    %v4362 = vunpack.c.l.b16 %v3687
    %v4363 = vunpack.c.h.b16 %v3687
    %v4364 = vunpack.c.l.b16 %v3688
    %v4365 = vunpack.c.h.b16 %v3688
    %v4366 = vunpack.c.l.b16 %v3689
    %v4367 = vunpack.c.h.b16 %v3689
    %v4368 = vunpack.c.l.b16 %v3690
    %v4369 = vunpack.c.h.b16 %v3690
    %v4370 = vunpack.c.l.b16 %v3691
    %v4371 = vunpack.c.h.b16 %v3691
    %v4372 = vunpack.c.l.b16 %v3692
    %v4373 = vunpack.c.h.b16 %v3692
    %v4374 = vunpack.c.l.b16 %v3693
    %v4375 = vunpack.c.h.b16 %v3693
    %v4376 = vunpack.c.l.b16 %v3694
    %v4377 = vunpack.c.h.b16 %v3694
    %v4378 = vunpack.c.l.b16 %v3695
    %v4379 = vunpack.c.h.b16 %v3695
    %v4380 = vunpack.c.l.b16 %v3696
    %v4381 = vunpack.c.h.b16 %v3696
    %v4382 = vunpack.c.l.b16 %v3697
    %v4383 = vunpack.c.h.b16 %v3697
    %v4384 = vunpack.c.l.b16 %v3698
    %v4385 = vunpack.c.h.b16 %v3698
    %v4386 = vunpack.c.l.b16 %v3699
    %v4387 = vunpack.c.h.b16 %v3699
    %v4388 = vunpack.c.l.b16 %v3700
    %v4389 = vunpack.c.h.b16 %v3700
    %v4390 = vunpack.c.l.b16 %v3701
    %v4391 = vunpack.c.h.b16 %v3701
    %v4392 = vunpack.c.l.b16 %v3702
    %v4393 = vunpack.c.h.b16 %v3702
    %v4394 = vunpack.c.l.b16 %v3703
    %v4395 = vunpack.c.h.b16 %v3703
    %v4396 = vunpack.c.l.b16 %v3704
    %v4397 = vunpack.c.h.b16 %v3704
    %v4398 = vunpack.c.l.b16 %v3705
    %v4399 = vunpack.c.h.b16 %v3705
    %v4400 = vunpack.c.l.b16 %v3706
    %v4401 = vunpack.c.h.b16 %v3706
    %v4402 = vunpack.c.l.b16 %v3707
    %v4403 = vunpack.c.h.b16 %v3707
    %v4404 = vunpack.c.l.b16 %v3708
    %v4405 = vunpack.c.h.b16 %v3708
    %v4406 = vunpack.c.l.b16 %v3709
    %v4407 = vunpack.c.h.b16 %v3709
    %v4408 = vunpack.c.l.b16 %v3710
    %v4409 = vunpack.c.h.b16 %v3710
    %v4410 = vunpack.c.l.b16 %v3711
    %v4411 = vunpack.c.h.b16 %v3711
    %v4412 = vunpack.c.l.b16 %v3712
    %v4413 = vunpack.c.h.b16 %v3712
    %v4414 = vunpack.c.l.b16 %v3713
    %v4415 = vunpack.c.h.b16 %v3713
    %v4416 = vunpack.c.l.b16 %v3714
    %v4417 = vunpack.c.h.b16 %v3714
    %v4418 = vunpack.c.l.b16 %v3715
    %v4419 = vunpack.c.h.b16 %v3715
    %v4420 = vunpack.c.l.b16 %v3716
    %v4421 = vunpack.c.h.b16 %v3716
    %v4422 = vunpack.c.l.b16 %v3717
    %v4423 = vunpack.c.h.b16 %v3717
    %v4424 = vunpack.c.l.b16 %v3718
    %v4425 = vunpack.c.h.b16 %v3718
    %v4426 = vunpack.c.l.b16 %v3719
    %v4427 = vunpack.c.h.b16 %v3719
    %v4428 = vunpack.c.l.b16 %v3720
    %v4429 = vunpack.c.h.b16 %v3720
    %v4430 = vunpack.c.l.b16 %v3721
    %v4431 = vunpack.c.h.b16 %v3721
    %v4432 = vunpack.c.l.b16 %v3722
    %v4433 = vunpack.c.h.b16 %v3722
    %v4434 = vunpack.c.l.b16 %v3723
    %v4435 = vunpack.c.h.b16 %v3723
    %v4436 = vunpack.c.l.b16 %v3724
    %v4437 = vunpack.c.h.b16 %v3724
    %v4438 = vunpack.c.l.b16 %v3725
    %v4439 = vunpack.c.h.b16 %v3725
    %v4440 = vunpack.c.l.b16 %v3726
    %v4441 = vunpack.c.h.b16 %v3726
    %v4442 = vunpack.c.l.b16 %v3727
    %v4443 = vunpack.c.h.b16 %v3727
    %v4444 = vunpack.c.l.b16 %v3728
    %v4445 = vunpack.c.h.b16 %v3728
    %v4446 = vunpack.c.l.b16 %v3729
    %v4447 = vunpack.c.h.b16 %v3729
    %v4448 = vunpack.c.l.b16 %v3730
    %v4449 = vunpack.c.h.b16 %v3730
    %v4450 = vunpack.c.l.b16 %v3731
    %v4451 = vunpack.c.h.b16 %v3731
    %v4452 = vunpack.c.l.b16 %v3732
    %v4453 = vunpack.c.h.b16 %v3732
    %v4454 = vunpack.c.l.b16 %v3733
    %v4455 = vunpack.c.h.b16 %v3733
    %v4456 = vunpack.c.l.b16 %v3734
    %v4457 = vunpack.c.h.b16 %v3734
    %v4458 = vunpack.c.l.b16 %v3735
    %v4459 = vunpack.c.h.b16 %v3735
    %v4460 = vunpack.c.l.b16 %v3736
    %v4461 = vunpack.c.h.b16 %v3736
    %v4462 = vunpack.c.l.b16 %v3737
    %v4463 = vunpack.c.h.b16 %v3737
    %v4464 = vunpack.c.l.b16 %v3738
    %v4465 = vunpack.c.h.b16 %v3738
    %v4466 = vunpack.c.l.b16 %v3739
    %v4467 = vunpack.c.h.b16 %v3739
    %v4468 = vunpack.c.l.b16 %v3740
    %v4469 = vunpack.c.h.b16 %v3740
    %v4470 = vunpack.c.l.b16 %v3741
    %v4471 = vunpack.c.h.b16 %v3741
    %v4472 = vunpack.c.l.b16 %v3742
    %v4473 = vunpack.c.h.b16 %v3742
    %v4474 = vunpack.c.l.b16 %v3743
    %v4475 = vunpack.c.h.b16 %v3743
    %v4476 = vunpack.c.l.b16 %v3744
    %v4477 = vunpack.c.h.b16 %v3744
    %v4478 = vunpack.c.l.b16 %v3745
    %v4479 = vunpack.c.h.b16 %v3745
    %v4480 = vunpack.c.l.b16 %v3746
    %v4481 = vunpack.c.h.b16 %v3746
    %v4482 = vunpack.c.l.b16 %v3747
    %v4483 = vunpack.c.h.b16 %v3747
    %v4484 = vunpack.c.l.b16 %v3748
    %v4485 = vunpack.c.h.b16 %v3748
    %v4486 = vunpack.c.l.b16 %v3749
    %v4487 = vunpack.c.h.b16 %v3749
    %v4488 = vunpack.c.l.b16 %v3750
    %v4489 = vunpack.c.h.b16 %v3750
    %v4490 = vunpack.c.l.b16 %v3751
    %v4491 = vunpack.c.h.b16 %v3751
    %v4492 = vunpack.c.l.b16 %v3752
    %v4493 = vunpack.c.h.b16 %v3752
    %v4494 = vunpack.c.l.b16 %v3753
    %v4495 = vunpack.c.h.b16 %v3753
    %v4496 = vunpack.c.l.b16 %v3754
    %v4497 = vunpack.c.h.b16 %v3754
    %v4498 = vunpack.c.l.b16 %v3755
    %v4499 = vunpack.c.h.b16 %v3755
    %v4500 = vunpack.c.l.b16 %v3756
    %v4501 = vunpack.c.h.b16 %v3756
    %v4502 = vunpack.c.l.b16 %v3757
    %v4503 = vunpack.c.h.b16 %v3757
    %v4504 = vunpack.c.l.b16 %v3758
    %v4505 = vunpack.c.h.b16 %v3758
    %v4506 = vunpack.c.l.b16 %v3759
    %v4507 = vunpack.c.h.b16 %v3759
    %v4508 = vunpack.c.l.b16 %v3760
    %v4509 = vunpack.c.h.b16 %v3760
    %v4510 = vunpack.c.l.b16 %v3761
    %v4511 = vunpack.c.h.b16 %v3761
    %v4512 = vunpack.c.l.b16 %v3762
    %v4513 = vunpack.c.h.b16 %v3762
    %v4514 = vunpack.c.l.b16 %v3763
    %v4515 = vunpack.c.h.b16 %v3763
    %v4516 = vunpack.c.l.b16 %v3764
    %v4517 = vunpack.c.h.b16 %v3764
    %v4518 = vunpack.c.l.b16 %v3765
    %v4519 = vunpack.c.h.b16 %v3765
    %v4520 = vunpack.c.l.b16 %v3766
    %v4521 = vunpack.c.h.b16 %v3766
    %v4522 = vunpack.c.l.b16 %v3767
    %v4523 = vunpack.c.h.b16 %v3767
    %v4524 = vunpack.c.l.b16 %v3768
    %v4525 = vunpack.c.h.b16 %v3768
    %v4526 = vunpack.c.l.b16 %v3769
    %v4527 = vunpack.c.h.b16 %v3769
    %v4528 = vunpack.c.l.b16 %v3770
    %v4529 = vunpack.c.h.b16 %v3770
    %v4530 = vunpack.c.l.b16 %v3771
    %v4531 = vunpack.c.h.b16 %v3771
    %v4532 = vunpack.c.l.b16 %v3772
    %v4533 = vunpack.c.h.b16 %v3772
    %v4534 = vunpack.c.l.b16 %v3773
    %v4535 = vunpack.c.h.b16 %v3773
    %v4536 = vunpack.c.l.b16 %v3774
    %v4537 = vunpack.c.h.b16 %v3774
    %v4538 = vunpack.c.l.b16 %v3775
    %v4539 = vunpack.c.h.b16 %v3775
    %v4540 = vunpack.c.l.b16 %v3776
    %v4541 = vunpack.c.h.b16 %v3776
    %v4542 = vunpack.c.l.b16 %v3777
    %v4543 = vunpack.c.h.b16 %v3777
    %v4544 = vunpack.c.l.b16 %v3778
    %v4545 = vunpack.c.h.b16 %v3778
    %v4546 = vunpack.c.l.b16 %v3779
    %v4547 = vunpack.c.h.b16 %v3779
    %v4548 = vunpack.c.l.b16 %v3780
    %v4549 = vunpack.c.h.b16 %v3780
    %v4550 = vunpack.c.l.b16 %v3781
    %v4551 = vunpack.c.h.b16 %v3781
    %v4552 = vunpack.c.l.b16 %v3782
    %v4553 = vunpack.c.h.b16 %v3782
    %v4554 = vunpack.c.l.b16 %v3783
    %v4555 = vunpack.c.h.b16 %v3783
    %v4556 = vunpack.c.l.b16 %v3784
    %v4557 = vunpack.c.h.b16 %v3784
    %v4558 = vunpack.c.l.b16 %v3785
    %v4559 = vunpack.c.h.b16 %v3785
    %v4560 = vunpack.c.l.b16 %v3786
    %v4561 = vunpack.c.h.b16 %v3786
    %v4562 = vunpack.c.l.b16 %v3787
    %v4563 = vunpack.c.h.b16 %v3787
    %v4564 = vunpack.c.l.b16 %v3788
    %v4565 = vunpack.c.h.b16 %v3788
    %v4566 = vunpack.c.l.b16 %v3789
    %v4567 = vunpack.c.h.b16 %v3789
    %v4568 = vunpack.c.l.b16 %v3790
    %v4569 = vunpack.c.h.b16 %v3790
    %v4570 = vunpack.c.l.b16 %v3791
    %v4571 = vunpack.c.h.b16 %v3791
    %v4572 = vunpack.c.l.b16 %v3792
    %v4573 = vunpack.c.h.b16 %v3792
    %v4574 = vunpack.c.l.b16 %v3793
    %v4575 = vunpack.c.h.b16 %v3793
    %v4576 = vunpack.c.l.b16 %v3794
    %v4577 = vunpack.c.h.b16 %v3794
    %v4578 = vunpack.c.l.b16 %v3795
    %v4579 = vunpack.c.h.b16 %v3795
    %v4580 = vunpack.c.l.b16 %v3796
    %v4581 = vunpack.c.h.b16 %v3796
    %v4582 = vunpack.c.l.b16 %v3797
    %v4583 = vunpack.c.h.b16 %v3797
    %v4584 = vunpack.c.l.b16 %v3798
    %v4585 = vunpack.c.h.b16 %v3798
    %v4586 = vunpack.c.l.b16 %v3799
    %v4587 = vunpack.c.h.b16 %v3799
    %v4588 = vunpack.c.l.b16 %v3800
    %v4589 = vunpack.c.h.b16 %v3800
    %v4590 = vunpack.c.l.b16 %v3801
    %v4591 = vunpack.c.h.b16 %v3801
    %v4592 = vpack.c.b16 %v4084, %v4080
    %v4593 = vpack.c.b16 %v4085, %v4081
    %v4594 = vpack.c.b16 %v4086, %v4082
    %v4595 = vpack.c.b16 %v4087, %v4083
    %v4596 = vpack.c.b16 %v4092, %v4088
    %v4597 = vpack.c.b16 %v4093, %v4089
    %v4598 = vpack.c.b16 %v4094, %v4090
    %v4599 = vpack.c.b16 %v4095, %v4091
    %v4600 = vpack.c.b16 %v4100, %v4096
    %v4601 = vpack.c.b16 %v4101, %v4097
    %v4602 = vpack.c.b16 %v4102, %v4098
    %v4603 = vpack.c.b16 %v4103, %v4099
    %v4604 = vpack.c.b16 %v4108, %v4104
    %v4605 = vpack.c.b16 %v4109, %v4105
    %v4606 = vpack.c.b16 %v4110, %v4106
    %v4607 = vpack.c.b16 %v4111, %v4107
    %v4608 = vpack.c.b16 %v4116, %v4112
    %v4609 = vpack.c.b16 %v4117, %v4113
    %v4610 = vpack.c.b16 %v4118, %v4114
    %v4611 = vpack.c.b16 %v4119, %v4115
    %v4612 = vpack.c.b16 %v4124, %v4120
    %v4613 = vpack.c.b16 %v4125, %v4121
    %v4614 = vpack.c.b16 %v4126, %v4122
    %v4615 = vpack.c.b16 %v4127, %v4123
    %v4616 = vpack.c.b16 %v4132, %v4128
    %v4617 = vpack.c.b16 %v4133, %v4129
    %v4618 = vpack.c.b16 %v4134, %v4130
    %v4619 = vpack.c.b16 %v4135, %v4131
    %v4620 = vpack.c.b16 %v4140, %v4136
    %v4621 = vpack.c.b16 %v4141, %v4137
    %v4622 = vpack.c.b16 %v4142, %v4138
    %v4623 = vpack.c.b16 %v4143, %v4139
    %v4624 = vpack.c.b16 %v4148, %v4144
    %v4625 = vpack.c.b16 %v4149, %v4145
    %v4626 = vpack.c.b16 %v4150, %v4146
    %v4627 = vpack.c.b16 %v4151, %v4147
    %v4628 = vpack.c.b16 %v4156, %v4152
    %v4629 = vpack.c.b16 %v4157, %v4153
    %v4630 = vpack.c.b16 %v4158, %v4154
    %v4631 = vpack.c.b16 %v4159, %v4155
    %v4632 = vpack.c.b16 %v4164, %v4160
    %v4633 = vpack.c.b16 %v4165, %v4161
    %v4634 = vpack.c.b16 %v4166, %v4162
    %v4635 = vpack.c.b16 %v4167, %v4163
    %v4636 = vpack.c.b16 %v4172, %v4168
    %v4637 = vpack.c.b16 %v4173, %v4169
    %v4638 = vpack.c.b16 %v4174, %v4170
    %v4639 = vpack.c.b16 %v4175, %v4171
    %v4640 = vpack.c.b16 %v4180, %v4176
    %v4641 = vpack.c.b16 %v4181, %v4177
    %v4642 = vpack.c.b16 %v4182, %v4178
    %v4643 = vpack.c.b16 %v4183, %v4179
    %v4644 = vpack.c.b16 %v4188, %v4184
    %v4645 = vpack.c.b16 %v4189, %v4185
    %v4646 = vpack.c.b16 %v4190, %v4186
    %v4647 = vpack.c.b16 %v4191, %v4187
    %v4648 = vpack.c.b16 %v4196, %v4192
    %v4649 = vpack.c.b16 %v4197, %v4193
    %v4650 = vpack.c.b16 %v4198, %v4194
    %v4651 = vpack.c.b16 %v4199, %v4195
    %v4652 = vpack.c.b16 %v4204, %v4200
    %v4653 = vpack.c.b16 %v4205, %v4201
    %v4654 = vpack.c.b16 %v4206, %v4202
    %v4655 = vpack.c.b16 %v4207, %v4203
    %v4656 = vpack.c.b16 %v4212, %v4208
    %v4657 = vpack.c.b16 %v4213, %v4209
    %v4658 = vpack.c.b16 %v4214, %v4210
    %v4659 = vpack.c.b16 %v4215, %v4211
    %v4660 = vpack.c.b16 %v4220, %v4216
    %v4661 = vpack.c.b16 %v4221, %v4217
    %v4662 = vpack.c.b16 %v4222, %v4218
    %v4663 = vpack.c.b16 %v4223, %v4219
    %v4664 = vpack.c.b16 %v4228, %v4224
    %v4665 = vpack.c.b16 %v4229, %v4225
    %v4666 = vpack.c.b16 %v4230, %v4226
    %v4667 = vpack.c.b16 %v4231, %v4227
    %v4668 = vpack.c.b16 %v4236, %v4232
    %v4669 = vpack.c.b16 %v4237, %v4233
    %v4670 = vpack.c.b16 %v4238, %v4234
    %v4671 = vpack.c.b16 %v4239, %v4235
    %v4672 = vpack.c.b16 %v4244, %v4240
    %v4673 = vpack.c.b16 %v4245, %v4241
    %v4674 = vpack.c.b16 %v4246, %v4242
    %v4675 = vpack.c.b16 %v4247, %v4243
    %v4676 = vpack.c.b16 %v4252, %v4248
    %v4677 = vpack.c.b16 %v4253, %v4249
    %v4678 = vpack.c.b16 %v4254, %v4250
    %v4679 = vpack.c.b16 %v4255, %v4251
    %v4680 = vpack.c.b16 %v4260, %v4256
    %v4681 = vpack.c.b16 %v4261, %v4257
    %v4682 = vpack.c.b16 %v4262, %v4258
    %v4683 = vpack.c.b16 %v4263, %v4259
    %v4684 = vpack.c.b16 %v4268, %v4264
    %v4685 = vpack.c.b16 %v4269, %v4265
    %v4686 = vpack.c.b16 %v4270, %v4266
    %v4687 = vpack.c.b16 %v4271, %v4267
    %v4688 = vpack.c.b16 %v4276, %v4272
    %v4689 = vpack.c.b16 %v4277, %v4273
    %v4690 = vpack.c.b16 %v4278, %v4274
    %v4691 = vpack.c.b16 %v4279, %v4275
    %v4692 = vpack.c.b16 %v4284, %v4280
    %v4693 = vpack.c.b16 %v4285, %v4281
    %v4694 = vpack.c.b16 %v4286, %v4282
    %v4695 = vpack.c.b16 %v4287, %v4283
    %v4696 = vpack.c.b16 %v4292, %v4288
    %v4697 = vpack.c.b16 %v4293, %v4289
    %v4698 = vpack.c.b16 %v4294, %v4290
    %v4699 = vpack.c.b16 %v4295, %v4291
    %v4700 = vpack.c.b16 %v4300, %v4296
    %v4701 = vpack.c.b16 %v4301, %v4297
    %v4702 = vpack.c.b16 %v4302, %v4298
    %v4703 = vpack.c.b16 %v4303, %v4299
    %v4704 = vpack.c.b16 %v4308, %v4304
    %v4705 = vpack.c.b16 %v4309, %v4305
    %v4706 = vpack.c.b16 %v4310, %v4306
    %v4707 = vpack.c.b16 %v4311, %v4307
    %v4708 = vpack.c.b16 %v4316, %v4312
    %v4709 = vpack.c.b16 %v4317, %v4313
    %v4710 = vpack.c.b16 %v4318, %v4314
    %v4711 = vpack.c.b16 %v4319, %v4315
    %v4712 = vpack.c.b16 %v4324, %v4320
    %v4713 = vpack.c.b16 %v4325, %v4321
    %v4714 = vpack.c.b16 %v4326, %v4322
    %v4715 = vpack.c.b16 %v4327, %v4323
    %v4716 = vpack.c.b16 %v4332, %v4328
    %v4717 = vpack.c.b16 %v4333, %v4329
    %v4718 = vpack.c.b16 %v4334, %v4330
    %v4719 = vpack.c.b16 %v4335, %v4331
    %v4720 = vpack.c.b16 %v4340, %v4336
    %v4721 = vpack.c.b16 %v4341, %v4337
    %v4722 = vpack.c.b16 %v4342, %v4338
    %v4723 = vpack.c.b16 %v4343, %v4339
    %v4724 = vpack.c.b16 %v4348, %v4344
    %v4725 = vpack.c.b16 %v4349, %v4345
    %v4726 = vpack.c.b16 %v4350, %v4346
    %v4727 = vpack.c.b16 %v4351, %v4347
    %v4728 = vpack.c.b16 %v4356, %v4352
    %v4729 = vpack.c.b16 %v4357, %v4353
    %v4730 = vpack.c.b16 %v4358, %v4354
    %v4731 = vpack.c.b16 %v4359, %v4355
    %v4732 = vpack.c.b16 %v4364, %v4360
    %v4733 = vpack.c.b16 %v4365, %v4361
    %v4734 = vpack.c.b16 %v4366, %v4362
    %v4735 = vpack.c.b16 %v4367, %v4363
    %v4736 = vpack.c.b16 %v4372, %v4368
    %v4737 = vpack.c.b16 %v4373, %v4369
    %v4738 = vpack.c.b16 %v4374, %v4370
    %v4739 = vpack.c.b16 %v4375, %v4371
    %v4740 = vpack.c.b16 %v4380, %v4376
    %v4741 = vpack.c.b16 %v4381, %v4377
    %v4742 = vpack.c.b16 %v4382, %v4378
    %v4743 = vpack.c.b16 %v4383, %v4379
    %v4744 = vpack.c.b16 %v4388, %v4384
    %v4745 = vpack.c.b16 %v4389, %v4385
    %v4746 = vpack.c.b16 %v4390, %v4386
    %v4747 = vpack.c.b16 %v4391, %v4387
    %v4748 = vpack.c.b16 %v4396, %v4392
    %v4749 = vpack.c.b16 %v4397, %v4393
    %v4750 = vpack.c.b16 %v4398, %v4394
    %v4751 = vpack.c.b16 %v4399, %v4395
    %v4752 = vpack.c.b16 %v4404, %v4400
    %v4753 = vpack.c.b16 %v4405, %v4401
    %v4754 = vpack.c.b16 %v4406, %v4402
    %v4755 = vpack.c.b16 %v4407, %v4403
    %v4756 = vpack.c.b16 %v4412, %v4408
    %v4757 = vpack.c.b16 %v4413, %v4409
    %v4758 = vpack.c.b16 %v4414, %v4410
    %v4759 = vpack.c.b16 %v4415, %v4411
    %v4760 = vpack.c.b16 %v4420, %v4416
    %v4761 = vpack.c.b16 %v4421, %v4417
    %v4762 = vpack.c.b16 %v4422, %v4418
    %v4763 = vpack.c.b16 %v4423, %v4419
    %v4764 = vpack.c.b16 %v4428, %v4424
    %v4765 = vpack.c.b16 %v4429, %v4425
    %v4766 = vpack.c.b16 %v4430, %v4426
    %v4767 = vpack.c.b16 %v4431, %v4427
    %v4768 = vpack.c.b16 %v4436, %v4432
    %v4769 = vpack.c.b16 %v4437, %v4433
    %v4770 = vpack.c.b16 %v4438, %v4434
    %v4771 = vpack.c.b16 %v4439, %v4435
    %v4772 = vpack.c.b16 %v4444, %v4440
    %v4773 = vpack.c.b16 %v4445, %v4441
    %v4774 = vpack.c.b16 %v4446, %v4442
    %v4775 = vpack.c.b16 %v4447, %v4443
    %v4776 = vpack.c.b16 %v4452, %v4448
    %v4777 = vpack.c.b16 %v4453, %v4449
    %v4778 = vpack.c.b16 %v4454, %v4450
    %v4779 = vpack.c.b16 %v4455, %v4451
    %v4780 = vpack.c.b16 %v4460, %v4456
    %v4781 = vpack.c.b16 %v4461, %v4457
    %v4782 = vpack.c.b16 %v4462, %v4458
    %v4783 = vpack.c.b16 %v4463, %v4459
    %v4784 = vpack.c.b16 %v4468, %v4464
    %v4785 = vpack.c.b16 %v4469, %v4465
    %v4786 = vpack.c.b16 %v4470, %v4466
    %v4787 = vpack.c.b16 %v4471, %v4467
    %v4788 = vpack.c.b16 %v4476, %v4472
    %v4789 = vpack.c.b16 %v4477, %v4473
    %v4790 = vpack.c.b16 %v4478, %v4474
    %v4791 = vpack.c.b16 %v4479, %v4475
    %v4792 = vpack.c.b16 %v4484, %v4480
    %v4793 = vpack.c.b16 %v4485, %v4481
    %v4794 = vpack.c.b16 %v4486, %v4482
    %v4795 = vpack.c.b16 %v4487, %v4483
    %v4796 = vpack.c.b16 %v4492, %v4488
    %v4797 = vpack.c.b16 %v4493, %v4489
    %v4798 = vpack.c.b16 %v4494, %v4490
    %v4799 = vpack.c.b16 %v4495, %v4491
    %v4800 = vpack.c.b16 %v4500, %v4496
    %v4801 = vpack.c.b16 %v4501, %v4497
    %v4802 = vpack.c.b16 %v4502, %v4498
    %v4803 = vpack.c.b16 %v4503, %v4499
    %v4804 = vpack.c.b16 %v4508, %v4504
    %v4805 = vpack.c.b16 %v4509, %v4505
    %v4806 = vpack.c.b16 %v4510, %v4506
    %v4807 = vpack.c.b16 %v4511, %v4507
    %v4808 = vpack.c.b16 %v4516, %v4512
    %v4809 = vpack.c.b16 %v4517, %v4513
    %v4810 = vpack.c.b16 %v4518, %v4514
    %v4811 = vpack.c.b16 %v4519, %v4515
    %v4812 = vpack.c.b16 %v4524, %v4520
    %v4813 = vpack.c.b16 %v4525, %v4521
    %v4814 = vpack.c.b16 %v4526, %v4522
    %v4815 = vpack.c.b16 %v4527, %v4523
    %v4816 = vpack.c.b16 %v4532, %v4528
    %v4817 = vpack.c.b16 %v4533, %v4529
    %v4818 = vpack.c.b16 %v4534, %v4530
    %v4819 = vpack.c.b16 %v4535, %v4531
    %v4820 = vpack.c.b16 %v4540, %v4536
    %v4821 = vpack.c.b16 %v4541, %v4537
    %v4822 = vpack.c.b16 %v4542, %v4538
    %v4823 = vpack.c.b16 %v4543, %v4539
    %v4824 = vpack.c.b16 %v4548, %v4544
    %v4825 = vpack.c.b16 %v4549, %v4545
    %v4826 = vpack.c.b16 %v4550, %v4546
    %v4827 = vpack.c.b16 %v4551, %v4547
    %v4828 = vpack.c.b16 %v4556, %v4552
    %v4829 = vpack.c.b16 %v4557, %v4553
    %v4830 = vpack.c.b16 %v4558, %v4554
    %v4831 = vpack.c.b16 %v4559, %v4555
    %v4832 = vpack.c.b16 %v4564, %v4560
    %v4833 = vpack.c.b16 %v4565, %v4561
    %v4834 = vpack.c.b16 %v4566, %v4562
    %v4835 = vpack.c.b16 %v4567, %v4563
    %v4836 = vpack.c.b16 %v4572, %v4568
    %v4837 = vpack.c.b16 %v4573, %v4569
    %v4838 = vpack.c.b16 %v4574, %v4570
    %v4839 = vpack.c.b16 %v4575, %v4571
    %v4840 = vpack.c.b16 %v4580, %v4576
    %v4841 = vpack.c.b16 %v4581, %v4577
    %v4842 = vpack.c.b16 %v4582, %v4578
    %v4843 = vpack.c.b16 %v4583, %v4579
    %v4844 = vpack.c.b16 %v4588, %v4584
    %v4845 = vpack.c.b16 %v4589, %v4585
    %v4846 = vpack.c.b16 %v4590, %v4586
    %v4847 = vpack.c.b16 %v4591, %v4587
    %5104 = vmatprep.subr.bf16.mxu0 %v4593
    %5105 = vmatpush1.bf16.msra.mxu0 %v4592
    %5106 = vmatprep.subr.bf16.mxu0 %v4597
    %5107 = vmatpush1.bf16.msra.mxu0 %v4596
    %5108 = vmatprep.subr.bf16.mxu0 %v4601
    %5109 = vmatpush1.bf16.msra.mxu0 %v4600
    %5110 = vmatprep.subr.bf16.mxu0 %v4605
    %5111 = vmatpush1.bf16.msra.mxu0 %v4604
    %5112 = vmatprep.subr.bf16.mxu0 %v4609
    %5113 = vmatpush1.bf16.msra.mxu0 %v4608
    %5114 = vmatprep.subr.bf16.mxu0 %v4613
    %5115 = vmatpush1.bf16.msra.mxu0 %v4612
    %5116 = vmatprep.subr.bf16.mxu0 %v4617
    %5117 = vmatpush1.bf16.msra.mxu0 %v4616
    %5118 = vmatprep.subr.bf16.mxu0 %v4621
    %5119 = vmatpush1.bf16.msra.mxu0 %v4620
    %5120 = vmatprep.subr.bf16.mxu0 %v4625
    %5121 = vmatpush1.bf16.msra.mxu0 %v4624
    %5122 = vmatprep.subr.bf16.mxu0 %v4629
    %5123 = vmatpush1.bf16.msra.mxu0 %v4628
    %5124 = vmatprep.subr.bf16.mxu0 %v4633
    %5125 = vmatpush1.bf16.msra.mxu0 %v4632
    %5126 = vmatprep.subr.bf16.mxu0 %v4637
    %5127 = vmatpush1.bf16.msra.mxu0 %v4636
    %5128 = vmatprep.subr.bf16.mxu0 %v4641
    %5129 = vmatpush1.bf16.msra.mxu0 %v4640
    %5130 = vmatprep.subr.bf16.mxu0 %v4645
    %5131 = vmatpush1.bf16.msra.mxu0 %v4644
    %5132 = vmatprep.subr.bf16.mxu0 %v4649
    %5133 = vmatpush1.bf16.msra.mxu0 %v4648
    %5134 = vmatprep.subr.bf16.mxu0 %v4653
    %5135 = vmatpush1.bf16.msra.mxu0 %v4652
    %5136 = vmatprep.mubr.bf16.mxu0 %v3539
    %5137 = vmatmul.mubr.bf16.gmra.mrb[0].mxu0 %v3538
    %v5138 = vpop.f32.mrb[0].mxu0
    %v5139 = vadd.f32 %v3807, %v5138
    %v5140 = vpop.f32.mrb[0].mxu0
    %v5141 = vadd.f32 %v3811, %v5140
    %v5142 = vpop.f32.mrb[0].mxu0
    %v5143 = vpop.f32.mrb[0].mxu0
    %5144 = vdwg.mxu0
    %5145 = vmatprep.subr.bf16.mxu0 %v4657
    %5146 = vmatpush1.bf16.msra.mxu0 %v4656
    %5147 = vmatprep.subr.bf16.mxu0 %v4661
    %5148 = vmatpush1.bf16.msra.mxu0 %v4660
    %5149 = vmatprep.subr.bf16.mxu0 %v4665
    %5150 = vmatpush1.bf16.msra.mxu0 %v4664
    %5151 = vmatprep.subr.bf16.mxu0 %v4669
    %5152 = vmatpush1.bf16.msra.mxu0 %v4668
    %5153 = vmatprep.subr.bf16.mxu0 %v4673
    %5154 = vmatpush1.bf16.msra.mxu0 %v4672
    %5155 = vmatprep.subr.bf16.mxu0 %v4677
    %5156 = vmatpush1.bf16.msra.mxu0 %v4676
    %5157 = vmatprep.subr.bf16.mxu0 %v4681
    %5158 = vmatpush1.bf16.msra.mxu0 %v4680
    %5159 = vmatprep.subr.bf16.mxu0 %v4685
    %5160 = vmatpush1.bf16.msra.mxu0 %v4684
    %5161 = vmatprep.subr.bf16.mxu0 %v4689
    %5162 = vmatpush1.bf16.msra.mxu0 %v4688
    %5163 = vmatprep.subr.bf16.mxu0 %v4693
    %5164 = vmatpush1.bf16.msra.mxu0 %v4692
    %5165 = vmatprep.subr.bf16.mxu0 %v4697
    %5166 = vmatpush1.bf16.msra.mxu0 %v4696
    %5167 = vmatprep.subr.bf16.mxu0 %v4701
    %5168 = vmatpush1.bf16.msra.mxu0 %v4700
    %5169 = vmatprep.subr.bf16.mxu0 %v4705
    %5170 = vmatpush1.bf16.msra.mxu0 %v4704
    %5171 = vmatprep.subr.bf16.mxu0 %v4709
    %5172 = vmatpush1.bf16.msra.mxu0 %v4708
    %5173 = vmatprep.subr.bf16.mxu0 %v4713
    %5174 = vmatpush1.bf16.msra.mxu0 %v4712
    %5175 = vmatprep.subr.bf16.mxu0 %v4717
    %5176 = vmatpush1.bf16.msra.mxu0 %v4716
    %5177 = vmatprep.mubr.bf16.mxu0 %v3541
    %5178 = vmatmul.mubr.bf16.gmra.mrb[0].mxu0 %v3540
    %v5179 = vpop.f32.mrb[0].mxu0
    %v5180 = vadd.f32 %v5139, %v5179
    %v5181 = vpop.f32.mrb[0].mxu0
    %v5182 = vadd.f32 %v5141, %v5181
    %v5183 = vpop.f32.mrb[0].mxu0
    %v5184 = vpop.f32.mrb[0].mxu0
    %5185 = vdwg.mxu0
    %5186 = vmatprep.subr.bf16.mxu0 %v4721
    %5187 = vmatpush1.bf16.msra.mxu0 %v4720
    %5188 = vmatprep.subr.bf16.mxu0 %v4725
    %5189 = vmatpush1.bf16.msra.mxu0 %v4724
    %5190 = vmatprep.subr.bf16.mxu0 %v4729
    %5191 = vmatpush1.bf16.msra.mxu0 %v4728
    %5192 = vmatprep.subr.bf16.mxu0 %v4733
    %5193 = vmatpush1.bf16.msra.mxu0 %v4732
    %5194 = vmatprep.subr.bf16.mxu0 %v4737
    %5195 = vmatpush1.bf16.msra.mxu0 %v4736
    %5196 = vmatprep.subr.bf16.mxu0 %v4741
    %5197 = vmatpush1.bf16.msra.mxu0 %v4740
    %5198 = vmatprep.subr.bf16.mxu0 %v4745
    %5199 = vmatpush1.bf16.msra.mxu0 %v4744
    %5200 = vmatprep.subr.bf16.mxu0 %v4749
    %5201 = vmatpush1.bf16.msra.mxu0 %v4748
    %5202 = vmatprep.subr.bf16.mxu0 %v4753
    %5203 = vmatpush1.bf16.msra.mxu0 %v4752
    %5204 = vmatprep.subr.bf16.mxu0 %v4757
    %5205 = vmatpush1.bf16.msra.mxu0 %v4756
    %5206 = vmatprep.subr.bf16.mxu0 %v4761
    %5207 = vmatpush1.bf16.msra.mxu0 %v4760
    %5208 = vmatprep.subr.bf16.mxu0 %v4765
    %5209 = vmatpush1.bf16.msra.mxu0 %v4764
    %5210 = vmatprep.subr.bf16.mxu0 %v4769
    %5211 = vmatpush1.bf16.msra.mxu0 %v4768
    %5212 = vmatprep.subr.bf16.mxu0 %v4773
    %5213 = vmatpush1.bf16.msra.mxu0 %v4772
    %5214 = vmatprep.subr.bf16.mxu0 %v4777
    %5215 = vmatpush1.bf16.msra.mxu0 %v4776
    %5216 = vmatprep.subr.bf16.mxu0 %v4781
    %5217 = vmatpush1.bf16.msra.mxu0 %v4780
    %5218 = vmatprep.mubr.bf16.mxu0 %v3543
    %5219 = vmatmul.mubr.bf16.gmra.mrb[0].mxu0 %v3542
    %v5220 = vpop.f32.mrb[0].mxu0
    %v5221 = vadd.f32 %v5180, %v5220
    %v5222 = vpop.f32.mrb[0].mxu0
    %v5223 = vadd.f32 %v5182, %v5222
    %v5224 = vpop.f32.mrb[0].mxu0
    %v5225 = vpop.f32.mrb[0].mxu0
    %5226 = vdwg.mxu0
    %5227 = vmatprep.subr.bf16.mxu0 %v4785
    %5228 = vmatpush1.bf16.msra.mxu0 %v4784
    %5229 = vmatprep.subr.bf16.mxu0 %v4789
    %5230 = vmatpush1.bf16.msra.mxu0 %v4788
    %5231 = vmatprep.subr.bf16.mxu0 %v4793
    %5232 = vmatpush1.bf16.msra.mxu0 %v4792
    %5233 = vmatprep.subr.bf16.mxu0 %v4797
    %5234 = vmatpush1.bf16.msra.mxu0 %v4796
    %5235 = vmatprep.subr.bf16.mxu0 %v4801
    %5236 = vmatpush1.bf16.msra.mxu0 %v4800
    %5237 = vmatprep.subr.bf16.mxu0 %v4805
    %5238 = vmatpush1.bf16.msra.mxu0 %v4804
    %5239 = vmatprep.subr.bf16.mxu0 %v4809
    %5240 = vmatpush1.bf16.msra.mxu0 %v4808
    %5241 = vmatprep.subr.bf16.mxu0 %v4813
    %5242 = vmatpush1.bf16.msra.mxu0 %v4812
    %5243 = vmatprep.subr.bf16.mxu0 %v4817
    %5244 = vmatpush1.bf16.msra.mxu0 %v4816
    %5245 = vmatprep.subr.bf16.mxu0 %v4821
    %5246 = vmatpush1.bf16.msra.mxu0 %v4820
    %5247 = vmatprep.subr.bf16.mxu0 %v4825
    %5248 = vmatpush1.bf16.msra.mxu0 %v4824
    %5249 = vmatprep.subr.bf16.mxu0 %v4829
    %5250 = vmatpush1.bf16.msra.mxu0 %v4828
    %5251 = vmatprep.subr.bf16.mxu0 %v4833
    %5252 = vmatpush1.bf16.msra.mxu0 %v4832
    %5253 = vmatprep.subr.bf16.mxu0 %v4837
    %5254 = vmatpush1.bf16.msra.mxu0 %v4836
    %5255 = vmatprep.subr.bf16.mxu0 %v4841
    %5256 = vmatpush1.bf16.msra.mxu0 %v4840
    %5257 = vmatprep.subr.bf16.mxu0 %v4845
    %5258 = vmatpush1.bf16.msra.mxu0 %v4844
    %5259 = vmatprep.mubr.bf16.mxu0 %v3545
    %5260 = vmatmul.mubr.bf16.gmra.mrb[0].mxu0 %v3544
    %v5261 = vpop.f32.mrb[0].mxu0
    %v5262 = vadd.f32 %v5221, %v5261
    %v5263 = vpop.f32.mrb[0].mxu0
    %v5264 = vadd.f32 %v5223, %v5263
    %v5265 = vpop.f32.mrb[0].mxu0
    %v5266 = vpop.f32.mrb[0].mxu0
    %5267 = vdwg.mxu0
    %5268 = vmatprep.subr.bf16.mxu0 %v4595
    %5269 = vmatpush1.bf16.msra.mxu0 %v4594
    %5270 = vmatprep.subr.bf16.mxu0 %v4599
    %5271 = vmatpush1.bf16.msra.mxu0 %v4598
    %5272 = vmatprep.subr.bf16.mxu0 %v4603
    %5273 = vmatpush1.bf16.msra.mxu0 %v4602
    %5274 = vmatprep.subr.bf16.mxu0 %v4607
    %5275 = vmatpush1.bf16.msra.mxu0 %v4606
    %5276 = vmatprep.subr.bf16.mxu0 %v4611
    %5277 = vmatpush1.bf16.msra.mxu0 %v4610
    %5278 = vmatprep.subr.bf16.mxu0 %v4615
    %5279 = vmatpush1.bf16.msra.mxu0 %v4614
    %5280 = vmatprep.subr.bf16.mxu0 %v4619
    %5281 = vmatpush1.bf16.msra.mxu0 %v4618
    %5282 = vmatprep.subr.bf16.mxu0 %v4623
    %5283 = vmatpush1.bf16.msra.mxu0 %v4622
    %5284 = vmatprep.subr.bf16.mxu0 %v4627
    %5285 = vmatpush1.bf16.msra.mxu0 %v4626
    %5286 = vmatprep.subr.bf16.mxu0 %v4631
    %5287 = vmatpush1.bf16.msra.mxu0 %v4630
    %5288 = vmatprep.subr.bf16.mxu0 %v4635
    %5289 = vmatpush1.bf16.msra.mxu0 %v4634
    %5290 = vmatprep.subr.bf16.mxu0 %v4639
    %5291 = vmatpush1.bf16.msra.mxu0 %v4638
    %5292 = vmatprep.subr.bf16.mxu0 %v4643
    %5293 = vmatpush1.bf16.msra.mxu0 %v4642
    %5294 = vmatprep.subr.bf16.mxu0 %v4647
    %5295 = vmatpush1.bf16.msra.mxu0 %v4646
    %5296 = vmatprep.subr.bf16.mxu0 %v4651
    %5297 = vmatpush1.bf16.msra.mxu0 %v4650
    %5298 = vmatprep.subr.bf16.mxu0 %v4655
    %5299 = vmatpush1.bf16.msra.mxu0 %v4654
    %5300 = vmatprep.mubr.bf16.mxu0 %v3539
    %5301 = vmatmul.mubr.bf16.gmra.mrb[0].mxu0 %v3538
    %v5302 = vpop.f32.mrb[0].mxu0
    %v5303 = vadd.f32 %v3815, %v5302
    %v5304 = vpop.f32.mrb[0].mxu0
    %v5305 = vadd.f32 %v3819, %v5304
    %v5306 = vpop.f32.mrb[0].mxu0
    %v5307 = vpop.f32.mrb[0].mxu0
    %5308 = vdwg.mxu0
    %5309 = vmatprep.subr.bf16.mxu0 %v4659
    %5310 = vmatpush1.bf16.msra.mxu0 %v4658
    %5311 = vmatprep.subr.bf16.mxu0 %v4663
    %5312 = vmatpush1.bf16.msra.mxu0 %v4662
    %5313 = vmatprep.subr.bf16.mxu0 %v4667
    %5314 = vmatpush1.bf16.msra.mxu0 %v4666
    %5315 = vmatprep.subr.bf16.mxu0 %v4671
    %5316 = vmatpush1.bf16.msra.mxu0 %v4670
    %5317 = vmatprep.subr.bf16.mxu0 %v4675
    %5318 = vmatpush1.bf16.msra.mxu0 %v4674
    %5319 = vmatprep.subr.bf16.mxu0 %v4679
    %5320 = vmatpush1.bf16.msra.mxu0 %v4678
    %5321 = vmatprep.subr.bf16.mxu0 %v4683
    %5322 = vmatpush1.bf16.msra.mxu0 %v4682
    %5323 = vmatprep.subr.bf16.mxu0 %v4687
    %5324 = vmatpush1.bf16.msra.mxu0 %v4686
    %5325 = vmatprep.subr.bf16.mxu0 %v4691
    %5326 = vmatpush1.bf16.msra.mxu0 %v4690
    %5327 = vmatprep.subr.bf16.mxu0 %v4695
    %5328 = vmatpush1.bf16.msra.mxu0 %v4694
    %5329 = vmatprep.subr.bf16.mxu0 %v4699
    %5330 = vmatpush1.bf16.msra.mxu0 %v4698
    %5331 = vmatprep.subr.bf16.mxu0 %v4703
    %5332 = vmatpush1.bf16.msra.mxu0 %v4702
    %5333 = vmatprep.subr.bf16.mxu0 %v4707
    %5334 = vmatpush1.bf16.msra.mxu0 %v4706
    %5335 = vmatprep.subr.bf16.mxu0 %v4711
    %5336 = vmatpush1.bf16.msra.mxu0 %v4710
    %5337 = vmatprep.subr.bf16.mxu0 %v4715
    %5338 = vmatpush1.bf16.msra.mxu0 %v4714
    %5339 = vmatprep.subr.bf16.mxu0 %v4719
    %5340 = vmatpush1.bf16.msra.mxu0 %v4718
    %5341 = vmatprep.mubr.bf16.mxu0 %v3541
    %5342 = vmatmul.mubr.bf16.gmra.mrb[0].mxu0 %v3540
    %v5343 = vpop.f32.mrb[0].mxu0
    %v5344 = vadd.f32 %v5303, %v5343
    %v5345 = vpop.f32.mrb[0].mxu0
    %v5346 = vadd.f32 %v5305, %v5345
    %v5347 = vpop.f32.mrb[0].mxu0
    %v5348 = vpop.f32.mrb[0].mxu0
    %5349 = vdwg.mxu0
    %5350 = vmatprep.subr.bf16.mxu0 %v4723
    %5351 = vmatpush1.bf16.msra.mxu0 %v4722
    %5352 = vmatprep.subr.bf16.mxu0 %v4727
    %5353 = vmatpush1.bf16.msra.mxu0 %v4726
    %5354 = vmatprep.subr.bf16.mxu0 %v4731
    %5355 = vmatpush1.bf16.msra.mxu0 %v4730
    %5356 = vmatprep.subr.bf16.mxu0 %v4735
    %5357 = vmatpush1.bf16.msra.mxu0 %v4734
    %5358 = vmatprep.subr.bf16.mxu0 %v4739
    %5359 = vmatpush1.bf16.msra.mxu0 %v4738
    %5360 = vmatprep.subr.bf16.mxu0 %v4743
    %5361 = vmatpush1.bf16.msra.mxu0 %v4742
    %5362 = vmatprep.subr.bf16.mxu0 %v4747
    %5363 = vmatpush1.bf16.msra.mxu0 %v4746
    %5364 = vmatprep.subr.bf16.mxu0 %v4751
    %5365 = vmatpush1.bf16.msra.mxu0 %v4750
    %5366 = vmatprep.subr.bf16.mxu0 %v4755
    %5367 = vmatpush1.bf16.msra.mxu0 %v4754
    %5368 = vmatprep.subr.bf16.mxu0 %v4759
    %5369 = vmatpush1.bf16.msra.mxu0 %v4758
    %5370 = vmatprep.subr.bf16.mxu0 %v4763
    %5371 = vmatpush1.bf16.msra.mxu0 %v4762
    %5372 = vmatprep.subr.bf16.mxu0 %v4767
    %5373 = vmatpush1.bf16.msra.mxu0 %v4766
    %5374 = vmatprep.subr.bf16.mxu0 %v4771
    %5375 = vmatpush1.bf16.msra.mxu0 %v4770
    %5376 = vmatprep.subr.bf16.mxu0 %v4775
    %5377 = vmatpush1.bf16.msra.mxu0 %v4774
    %5378 = vmatprep.subr.bf16.mxu0 %v4779
    %5379 = vmatpush1.bf16.msra.mxu0 %v4778
    %5380 = vmatprep.subr.bf16.mxu0 %v4783
    %5381 = vmatpush1.bf16.msra.mxu0 %v4782
    %5382 = vmatprep.mubr.bf16.mxu0 %v3543
    %5383 = vmatmul.mubr.bf16.gmra.mrb[0].mxu0 %v3542
    %v5384 = vpop.f32.mrb[0].mxu0
    %v5385 = vadd.f32 %v5344, %v5384
    %v5386 = vpop.f32.mrb[0].mxu0
    %v5387 = vadd.f32 %v5346, %v5386
    %v5388 = vpop.f32.mrb[0].mxu0
    %v5389 = vpop.f32.mrb[0].mxu0
    %5390 = vdwg.mxu0
    %5391 = vmatprep.subr.bf16.mxu0 %v4787
    %5392 = vmatpush1.bf16.msra.mxu0 %v4786
    %5393 = vmatprep.subr.bf16.mxu0 %v4791
    %5394 = vmatpush1.bf16.msra.mxu0 %v4790
    %5395 = vmatprep.subr.bf16.mxu0 %v4795
    %5396 = vmatpush1.bf16.msra.mxu0 %v4794
    %5397 = vmatprep.subr.bf16.mxu0 %v4799
    %5398 = vmatpush1.bf16.msra.mxu0 %v4798
    %5399 = vmatprep.subr.bf16.mxu0 %v4803
    %5400 = vmatpush1.bf16.msra.mxu0 %v4802
    %5401 = vmatprep.subr.bf16.mxu0 %v4807
    %5402 = vmatpush1.bf16.msra.mxu0 %v4806
    %5403 = vmatprep.subr.bf16.mxu0 %v4811
    %5404 = vmatpush1.bf16.msra.mxu0 %v4810
    %5405 = vmatprep.subr.bf16.mxu0 %v4815
    %5406 = vmatpush1.bf16.msra.mxu0 %v4814
    %5407 = vmatprep.subr.bf16.mxu0 %v4819
    %5408 = vmatpush1.bf16.msra.mxu0 %v4818
    %5409 = vmatprep.subr.bf16.mxu0 %v4823
    %5410 = vmatpush1.bf16.msra.mxu0 %v4822
    %5411 = vmatprep.subr.bf16.mxu0 %v4827
    %5412 = vmatpush1.bf16.msra.mxu0 %v4826
    %5413 = vmatprep.subr.bf16.mxu0 %v4831
    %5414 = vmatpush1.bf16.msra.mxu0 %v4830
    %5415 = vmatprep.subr.bf16.mxu0 %v4835
    %5416 = vmatpush1.bf16.msra.mxu0 %v4834
    %5417 = vmatprep.subr.bf16.mxu0 %v4839
    %5418 = vmatpush1.bf16.msra.mxu0 %v4838
    %5419 = vmatprep.subr.bf16.mxu0 %v4843
    %5420 = vmatpush1.bf16.msra.mxu0 %v4842
    %5421 = vmatprep.subr.bf16.mxu0 %v4847
    %5422 = vmatpush1.bf16.msra.mxu0 %v4846
    %5423 = vmatprep.mubr.bf16.mxu0 %v3545
    %5424 = vmatmul.mubr.bf16.gmra.mrb[0].mxu0 %v3544
    %v5425 = vpop.f32.mrb[0].mxu0
    %v5426 = vadd.f32 %v5385, %v5425
    %v5427 = vpop.f32.mrb[0].mxu0
    %v5428 = vadd.f32 %v5387, %v5427
    %v5429 = vpop.f32.mrb[0].mxu0
    %v5430 = vpop.f32.mrb[0].mxu0
    %5431 = vdwg.mxu0
    %v5436 = vcombine.low %v5262, %v5264
    %v5437 = vcombine.low %v5426, %v5428
    %v5439 = vunpack.c.l.s4 1983009808
    %v5440 = vunpack.c.0.s8 %v5439
    %v5441 = vlaneseq
    %v5442 = vshrl.u32 %v5441, 7
    %v5443 = vsub.s32 %v5440, %v5442
    %v5444 = vrot.slane %v5436, %v5443
    %v5446 = vunpack.c.l.s4 1983009808
    %v5447 = vunpack.c.0.s8 %v5446
    %v5448 = vlaneseq
    %v5449 = vshrl.u32 %v5448, 7
    %v5450 = vsub.s32 %v5447, %v5449
    %v5451 = vrot.slane %v5437, %v5450
    %v5452 = vcombine.low %v5444, %v5451
    %5454 = vst [vmem:[#allocation7] sm:$0xff] %v5452
    // Predicated region
    $region30: #{tpu_custom_call.1} parent=1 // pred_check
      _
    $region31: #{tpu_custom_call.1} parent=1 // pred_check_branch
      %5456 = sbr.rel (0) target = $region33
    $region32: #{tpu_custom_call.1} parent=1 // pred_region
      %s5458 = ssub.s32 128, 128
      %5459 = vsyncadd [#allocation4], %s5458
      %s5461 = sshll.u32 [#allocation7], 4
      %s5462 = int_to_ptr.vmem [resolvable:$true] %s5461
      %5464 = dma.vmem_to_hbm [thread:$0]  %s5462, 128, %s5, [#allocation4]
    $region33: #{tpu_custom_call.1} parent=1 // pred_fallthru
      _
    // Predicated region
    $region34: #{tpu_custom_call.1} parent=1 // pred_check
      _
    $region35: #{tpu_custom_call.1} parent=1 // pred_check_branch
      %5466 = sbr.rel (0) target = $region37
    $region36: #{tpu_custom_call.1} parent=1 // pred_region
      %5467 = dma.done [#allocation4], 128
    $region37: #{tpu_custom_call.1} parent=1 // pred_fallthru
      _
    %5468 = vsyncpa [#allocation3], 1
    %5469 = vsyncpa [#allocation6], 1
    %5470 = vsyncpa [#allocation4], 1

</llo_original>
